<compile_context>
chip_gen: v5e
topology: v5e:2x2
jax: 0.10.0
libtpu: 0.0.40
codegen_flags: <defaults>
</compile_context>

<pallas_src>
import math

import jax
import jax.numpy as jnp
from jax.experimental import pallas as pl
from jax.experimental.pallas import tpu as pltpu


_SQRT_2_OVER_PI = 0.7978845608028654
_BN_EPS = 1e-5


def _gelu_tanh(x):
    return 0.5 * x * (1.0 + jnp.tanh(_SQRT_2_OVER_PI * (x + 0.044715 * x * x * x)))


def _make_tst_encoder_kernel(num_heads, d_k, d_v):
    q_dim = num_heads * d_k
    v_dim = num_heads * d_v

    def kernel(x_ref, wqkv_ref, bqkv_ref, wo_ref, bo_ref, bn1s_ref, bn1b_ref,
               w1_ref, b1_ref, w2_ref, b2_ref, bn2s_ref, bn2b_ref, o_ref):
        Bb, S, D = x_ref.shape
        M = Bb * S

        x = x_ref[...].reshape(M, D).astype(jnp.float32)          # (M, D)
        x_bf = x.astype(jnp.bfloat16)                             # matmul operand

        # --- Fused Q|K|V projection: one wide (M,D)@(D,2*q_dim+v_dim) MXU op.
        #     (1/sqrt(d_k) is pre-folded into the Q columns / bias.)
        qkv = jnp.dot(x_bf, wqkv_ref[...],
                      preferred_element_type=jnp.float32) + bqkv_ref[...]
        q = qkv[:, :q_dim].reshape(Bb, S, q_dim)                  # full-lane slices
        k = qkv[:, q_dim:2 * q_dim].reshape(Bb, S, q_dim)
        v = qkv[:, 2 * q_dim:].reshape(Bb, S, v_dim)

        # --- Per-head scaled-dot-product attention, batched over the Bb rows.
        # TODO(synk): scores materialize H*(Bb,S,S) f32; a KV-tiled flash-style
        #             inner loop is needed for long S on v7x's 64 MiB VMEM.
        ctx_heads = []
        for h in range(num_heads):                                # static, small H
            qh = q[:, :, h * d_k:(h + 1) * d_k].astype(jnp.bfloat16)
            kh = k[:, :, h * d_k:(h + 1) * d_k].astype(jnp.bfloat16)
            vh = v[:, :, h * d_v:(h + 1) * d_v].astype(jnp.bfloat16)
            s = jnp.einsum('bqd,bkd->bqk', qh, kh,
                           preferred_element_type=jnp.float32)    # (Bb, S, S)
            s = s - jnp.max(s, axis=-1, keepdims=True)
            p = jnp.exp(s)
            p = p * pl.reciprocal(jnp.sum(p, axis=-1, keepdims=True), approx=True)
            ctx_h = jnp.einsum('bqk,bkd->bqd', p.astype(jnp.bfloat16), vh,
                               preferred_element_type=jnp.float32)
            ctx_heads.append(ctx_h.reshape(M, d_v))
        ctx = jnp.concatenate(ctx_heads, axis=-1)                 # (M, H*d_v)

        attn_out = jnp.dot(ctx.astype(jnp.bfloat16), wo_ref[...],
                           preferred_element_type=jnp.float32) + bo_ref[...]

        # --- Residual + BatchNorm1d (inference: folded scale/shift) ----------
        x1 = x + attn_out                                         # Dropout(p=0) = id
        x1 = x1 * bn1s_ref[...] + bn1b_ref[...]

        # --- Position-wise feed-forward ---------------------------------------
        h1 = jnp.dot(x1.astype(jnp.bfloat16), w1_ref[...],
                     preferred_element_type=jnp.float32) + b1_ref[...]
        g = _gelu_tanh(h1)
        y = jnp.dot(g.astype(jnp.bfloat16), w2_ref[...],
                    preferred_element_type=jnp.float32) + b2_ref[...]

        x2 = x1 + y                                               # Dropout(p=0) = id
        x2 = x2 * bn2s_ref[...] + bn2b_ref[...]

        o_ref[...] = x2.reshape(Bb, S, D).astype(o_ref.dtype)

    return kernel


def _choose_batch_block(B, S, target_rows=256, min_steps=2):
    """Largest divisor Bb of B with Bb*S <= target_rows that (when possible)
    keeps at least `min_steps` grid steps (v7x has 2 TensorCores)."""
    best = 1
    for d in range(1, B + 1):
        if B % d != 0:
            continue
        if d * S > max(target_rows, S):
            continue
        if B >= min_steps and B // d < min_steps:
            continue
        best = d
    return best


def tst_encoder_layer_forward(x, params, *, num_heads):
    """x: (B, S, D); params: fused/pre-transposed kernel params (see prepare)."""
    B, S, D = x.shape
    (wqkv, bqkv, wo, bo, bn1s, bn1b, w1, b1, w2, b2, bn2s, bn2b) = params
    v_dim = wo.shape[0]
    q_dim = (wqkv.shape[1] - v_dim) // 2
    d_k = q_dim // num_heads
    d_v = v_dim // num_heads
    d_ff = w1.shape[1]

    Bb = _choose_batch_block(B, S)
    grid = (B // Bb,)

    kernel = _make_tst_encoder_kernel(num_heads, d_k, d_v)

    def resident_spec(p):
        # Whole parameter in VMEM, same block every grid step (stays resident).
        nd = p.ndim
        return pl.BlockSpec(p.shape, lambda b, _nd=nd: (0,) * _nd)

    in_specs = [pl.BlockSpec((Bb, S, D), lambda b: (b, 0, 0))]    # x batch block
    in_specs += [resident_spec(p) for p in params]

    # Advisory cost estimate so XLA schedules surrounding ops sensibly.
    flops = (2 * B * S * D * (2 * q_dim + v_dim)          # fused QKV projection
             + 2 * B * num_heads * S * S * d_k            # scores
             + 2 * B * num_heads * S * S * d_v            # attn @ V
             + 2 * B * S * v_dim * D                      # output projection
             + 2 * B * S * D * d_ff                       # linear1
             + 2 * B * S * d_ff * D)                      # linear2
    transcendentals = B * num_heads * S * S + B * S * d_ff
    bytes_accessed = (2 * x.size * x.dtype.itemsize
                      + sum(int(p.size) * p.dtype.itemsize for p in params))

    out = pl.pallas_call(
        kernel,
        out_shape=jax.ShapeDtypeStruct((B, S, D), x.dtype),
        grid_spec=pltpu.PrefetchScalarGridSpec(
            num_scalar_prefetch=0,
            grid=grid,
            in_specs=in_specs,
            out_specs=pl.BlockSpec((Bb, S, D), lambda b: (b, 0, 0)),
        ),
        compiler_params=pltpu.CompilerParams(
            dimension_semantics=("parallel",),
            # Per-step footprint here is ~1 MiB (double-buffered (Bb,S,D) tiles
            # + ~0.5 MiB resident bf16 weights + f32 intermediates) -- well
            # under the 32 MiB scoped budget on every generation incl. v7x.
            vmem_limit_bytes=32 * 1024 * 1024,
        ),
        cost_estimate=pl.CostEstimate(
            flops=int(flops), transcendentals=int(transcendentals),
            bytes_accessed=int(bytes_accessed)),
    )(x, *params)
    return out


def init_tst_encoder_layer_params(key, num_hidden, num_heads, num_hidden_ff,
                                  dtype=jnp.float32):
    """Float32 parameters in PyTorch layout (weights are (out, in))."""
    d_k = d_v = num_hidden // num_heads
    keys = jax.random.split(key, 20)

    def linear(kw, kb, fan_out, fan_in):
        bound = 1.0 / math.sqrt(fan_in)
        w = jax.random.uniform(kw, (fan_out, fan_in), dtype, -bound, bound)
        b = jax.random.uniform(kb, (fan_out,), dtype, -bound, bound)
        return w, b

    wq, bq = linear(keys[0], keys[1], num_heads * d_k, num_hidden)
    wk, bk = linear(keys[2], keys[3], num_heads * d_k, num_hidden)
    wv, bv = linear(keys[4], keys[5], num_heads * d_v, num_hidden)
    wo, bo = linear(keys[6], keys[7], num_hidden, num_heads * d_v)
    w1, b1 = linear(keys[8], keys[9], num_hidden_ff, num_hidden)
    w2, b2 = linear(keys[10], keys[11], num_hidden, num_hidden_ff)

    def bn(kg, kbe, km, kv):
        gamma = 1.0 + 0.1 * jax.random.normal(kg, (num_hidden,), dtype)
        beta = 0.1 * jax.random.normal(kbe, (num_hidden,), dtype)
        mean = 0.1 * jax.random.normal(km, (num_hidden,), dtype)
        var = jax.random.uniform(kv, (num_hidden,), dtype, 0.5, 1.5)
        return gamma, beta, mean, var

    return dict(wq=wq, bq=bq, wk=wk, bk=bk, wv=wv, bv=bv, wo=wo, bo=bo,
                w1=w1, b1=b1, w2=w2, b2=b2,
                bn1=bn(keys[12], keys[13], keys[14], keys[15]),
                bn2=bn(keys[16], keys[17], keys[18], keys[19]))


def prepare_kernel_params(p, *, num_heads):
    """Fold / fuse / transpose module params into the kernel layout:
       Q|K|V fused (with 1/sqrt(d_k) folded into Q), weights (in,out) in bf16,
       biases f32, BatchNorm folded to per-channel scale/shift (inference)."""
    d_k = p['wq'].shape[0] // num_heads
    scale = 1.0 / math.sqrt(d_k)

    wqkv = jnp.concatenate([p['wq'].T * scale, p['wk'].T, p['wv'].T],
                           axis=1).astype(jnp.bfloat16)
    bqkv = jnp.concatenate([p['bq'] * scale, p['bk'], p['bv']]).reshape(1, -1)
    wo = p['wo'].T.astype(jnp.bfloat16)
    bo = p['bo'].reshape(1, -1)
    w1 = p['w1'].T.astype(jnp.bfloat16)
    b1 = p['b1'].reshape(1, -1)
    w2 = p['w2'].T.astype(jnp.bfloat16)
    b2 = p['b2'].reshape(1, -1)

    def fold_bn(stats):
        gamma, beta, mean, var = stats
        s = gamma * jax.lax.rsqrt(var + _BN_EPS)
        return s.reshape(1, -1), (beta - mean * s).reshape(1, -1)

    bn1s, bn1b = fold_bn(p['bn1'])
    bn2s, bn2b = fold_bn(p['bn2'])

    return (wqkv, bqkv, wo, bo, bn1s, bn1b, w1, b1, w2, b2, bn2s, bn2b)


def tst_encoder_layer_ref(x, p, *, num_heads):
    """Pure-JAX float32 reference with the module's (eval-mode) semantics."""
    B, S, D = x.shape
    d_k = p['wq'].shape[0] // num_heads
    d_v = p['wv'].shape[0] // num_heads
    hi = jax.lax.Precision.HIGHEST

    def lin(t, w, b):
        return jnp.matmul(t, w.T, precision=hi) + b

    q = lin(x, p['wq'], p['bq']).reshape(B, S, num_heads, d_k)
    k = lin(x, p['wk'], p['bk']).reshape(B, S, num_heads, d_k)
    v = lin(x, p['wv'], p['bv']).reshape(B, S, num_heads, d_v)
    s = jnp.einsum('bqhd,bkhd->bhqk', q, k, precision=hi) / math.sqrt(d_k)
    a = jax.nn.softmax(s, axis=-1)
    ctx = jnp.einsum('bhqk,bkhd->bqhd', a, v,
                     precision=hi).reshape(B, S, num_heads * d_v)
    attn_out = lin(ctx, p['wo'], p['bo'])

    def bn(t, stats):
        gamma, beta, mean, var = stats
        return (t - mean) * jax.lax.rsqrt(var + _BN_EPS) * gamma + beta

    x1 = bn(x + attn_out, p['bn1'])
    h1 = _gelu_tanh(lin(x1, p['w1'], p['b1']))
    y = lin(h1, p['w2'], p['b2'])
    return bn(x1 + y, p['bn2'])


if __name__ == "__main__":
    # Small, lane-friendly shapes consistent with the module defaults.
    B, S = 8, 32                 # batch, sequence length -> Bb=4, grid=(2,)
    num_hidden = 128             # model dim (multiple of 128 lanes)
    num_heads = 4                # d_k = d_v = 32
    num_hidden_ff = 256          # FFN dim (multiple of 128 lanes)
    # drop_rate = attn_drop_rate = 0.0 -> all Dropouts are identity.

    key = jax.random.PRNGKey(0)
    k_x, k_p = jax.random.split(key)
    x = jax.random.normal(k_x, (B, S, num_hidden), dtype=jnp.float32)
    raw_params = init_tst_encoder_layer_params(k_p, num_hidden, num_heads,
                                               num_hidden_ff)
    params = prepare_kernel_params(raw_params, num_heads=num_heads)

    out = tst_encoder_layer_forward(x, params, num_heads=num_heads)
    out = jax.block_until_ready(out)

    ref = tst_encoder_layer_ref(x, raw_params, num_heads=num_heads)
    assert out.shape == (B, S, num_hidden)
    max_err = float(jnp.max(jnp.abs(out - ref)))
    # Kernel uses bf16 weights / matmul operands (f32 accumulation) vs f32 ref.
    assert max_err < 3e-2, f"max_err={max_err}"

    print("KERNEL_OK")
</pallas_src>

<mosaic_0001>
module attributes {stable_mosaic.version = 11 : i64} {
  func.func @kernel(%arg0: i32, %arg1: memref<4x32x128xf32, #tpu.memory_space<vmem>>, %arg2: memref<128x384xbf16, #tpu.memory_space<vmem>>, %arg3: memref<1x384xf32, #tpu.memory_space<vmem>>, %arg4: memref<128x128xbf16, #tpu.memory_space<vmem>>, %arg5: memref<1x128xf32, #tpu.memory_space<vmem>>, %arg6: memref<1x128xf32, #tpu.memory_space<vmem>>, %arg7: memref<1x128xf32, #tpu.memory_space<vmem>>, %arg8: memref<128x256xbf16, #tpu.memory_space<vmem>>, %arg9: memref<1x256xf32, #tpu.memory_space<vmem>>, %arg10: memref<256x128xbf16, #tpu.memory_space<vmem>>, %arg11: memref<1x128xf32, #tpu.memory_space<vmem>>, %arg12: memref<1x128xf32, #tpu.memory_space<vmem>>, %arg13: memref<1x128xf32, #tpu.memory_space<vmem>>, %arg14: memref<4x32x128xf32, #tpu.memory_space<vmem>>) attributes {dimension_semantics = [#tpu.dimension_semantics<parallel>], iteration_bounds = array<i64: 2>, scalar_prefetch = 0 : i64, scratch_operands = 0 : i64, tpu.core_type = #tpu.core_type<tc>, window_params = [{transform_indices = @transform_0, window_bounds = array<i64: 4, 32, 128>}, {pipeline_mode = #tpu.pipeline_mode<synchronous>, transform_indices = @transform_1, window_bounds = array<i64: 128, 384>}, {pipeline_mode = #tpu.pipeline_mode<synchronous>, transform_indices = @transform_2, window_bounds = array<i64: 1, 384>}, {pipeline_mode = #tpu.pipeline_mode<synchronous>, transform_indices = @transform_3, window_bounds = array<i64: 128, 128>}, {pipeline_mode = #tpu.pipeline_mode<synchronous>, transform_indices = @transform_4, window_bounds = array<i64: 1, 128>}, {pipeline_mode = #tpu.pipeline_mode<synchronous>, transform_indices = @transform_5, window_bounds = array<i64: 1, 128>}, {pipeline_mode = #tpu.pipeline_mode<synchronous>, transform_indices = @transform_6, window_bounds = array<i64: 1, 128>}, {pipeline_mode = #tpu.pipeline_mode<synchronous>, transform_indices = @transform_7, window_bounds = array<i64: 128, 256>}, {pipeline_mode = #tpu.pipeline_mode<synchronous>, transform_indices = @transform_8, window_bounds = array<i64: 1, 256>}, {pipeline_mode = #tpu.pipeline_mode<synchronous>, transform_indices = @transform_9, window_bounds = array<i64: 256, 128>}, {pipeline_mode = #tpu.pipeline_mode<synchronous>, transform_indices = @transform_10, window_bounds = array<i64: 1, 128>}, {pipeline_mode = #tpu.pipeline_mode<synchronous>, transform_indices = @transform_11, window_bounds = array<i64: 1, 128>}, {pipeline_mode = #tpu.pipeline_mode<synchronous>, transform_indices = @transform_12, window_bounds = array<i64: 1, 128>}, {transform_indices = @transform_13, window_bounds = array<i64: 4, 32, 128>}]} {
    %c0 = arith.constant 0 : index
    %c0_0 = arith.constant 0 : index
    %c0_1 = arith.constant 0 : index
    %0 = vector.load %arg1[%c0, %c0_0, %c0_1] : memref<4x32x128xf32, #tpu.memory_space<vmem>>, vector<4x32x128xf32>
    %1 = vector.shape_cast %0 : vector<4x32x128xf32> to vector<128x128xf32>
    %2 = arith.truncf %1 : vector<128x128xf32> to vector<128x128xbf16>
    %c0_2 = arith.constant 0 : index
    %c0_3 = arith.constant 0 : index
    %3 = vector.load %arg2[%c0_2, %c0_3] : memref<128x384xbf16, #tpu.memory_space<vmem>>, vector<128x384xbf16>
    %cst = arith.constant dense<0.000000e+00> : vector<128x384xf32>
    %4 = tpu.matmul %2, %3, %cst {dimension_numbers = #tpu.dot_dimension_numbers<[1], [0], [0], [1], [0, 0, 1, 1], [], []>} : vector<128x128xbf16>, vector<128x384xbf16>, vector<128x384xf32> -> vector<128x384xf32>
    %c0_4 = arith.constant 0 : index
    %c0_5 = arith.constant 0 : index
    %5 = vector.load %arg3[%c0_4, %c0_5] : memref<1x384xf32, #tpu.memory_space<vmem>>, vector<1x384xf32>
    %6 = vector.broadcast %5 : vector<1x384xf32> to vector<128x384xf32>
    %7 = arith.addf %4, %6 : vector<128x384xf32>
    %8 = vector.extract_strided_slice %7 {offsets = [0, 0], sizes = [128, 128], strides = [1, 1]} : vector<128x384xf32> to vector<128x128xf32>
    %9 = vector.shape_cast %8 : vector<128x128xf32> to vector<4x32x128xf32>
    %10 = vector.extract_strided_slice %7 {offsets = [0, 128], sizes = [128, 128], strides = [1, 1]} : vector<128x384xf32> to vector<128x128xf32>
    %11 = vector.shape_cast %10 : vector<128x128xf32> to vector<4x32x128xf32>
    %12 = vector.extract_strided_slice %7 {offsets = [0, 256], sizes = [128, 128], strides = [1, 1]} : vector<128x384xf32> to vector<128x128xf32>
    %13 = vector.shape_cast %12 : vector<128x128xf32> to vector<4x32x128xf32>
    %14 = vector.extract_strided_slice %9 {offsets = [0, 0, 0], sizes = [4, 32, 32], strides = [1, 1, 1]} : vector<4x32x128xf32> to vector<4x32x32xf32>
    %15 = arith.truncf %14 : vector<4x32x32xf32> to vector<4x32x32xbf16>
    %16 = vector.extract_strided_slice %11 {offsets = [0, 0, 0], sizes = [4, 32, 32], strides = [1, 1, 1]} : vector<4x32x128xf32> to vector<4x32x32xf32>
    %17 = arith.truncf %16 : vector<4x32x32xf32> to vector<4x32x32xbf16>
    %18 = vector.extract_strided_slice %13 {offsets = [0, 0, 0], sizes = [4, 32, 32], strides = [1, 1, 1]} : vector<4x32x128xf32> to vector<4x32x32xf32>
    %19 = arith.truncf %18 : vector<4x32x32xf32> to vector<4x32x32xbf16>
    "tpu.trace_start"() <{level = 10 : i32, message = "bqd,bkd->bqk"}> : () -> ()
    %cst_6 = arith.constant dense<0.000000e+00> : vector<4x32x32xf32>
    %20 = tpu.matmul %15, %17, %cst_6 {dimension_numbers = #tpu.dot_dimension_numbers<[2], [2], [1], [1], [0, 0, 0, 1, 1, 1], [0], [0]>} : vector<4x32x32xbf16>, vector<4x32x32xbf16>, vector<4x32x32xf32> -> vector<4x32x32xf32>
    "tpu.trace_stop"() : () -> ()
    %cst_7 = arith.constant dense<0xFF800000> : vector<4x32xf32>
    %21 = vector.multi_reduction <maximumf>, %20, %cst_7 [2] : vector<4x32x32xf32> to vector<4x32xf32>
    %22 = vector.shape_cast %21 : vector<4x32xf32> to vector<4x32x1xf32>
    %23 = vector.broadcast %22 : vector<4x32x1xf32> to vector<4x32x32xf32>
    %24 = arith.subf %20, %23 : vector<4x32x32xf32>
    %25 = math.exp %24 : vector<4x32x32xf32>
    %cst_8 = arith.constant dense<0.000000e+00> : vector<4x32xf32>
    %26 = vector.multi_reduction <add>, %25, %cst_8 [2] : vector<4x32x32xf32> to vector<4x32xf32>
    %27 = vector.shape_cast %26 : vector<4x32xf32> to vector<4x32x1xf32>
    %28 = tpu.reciprocal %27 {approx = true} : vector<4x32x1xf32> -> vector<4x32x1xf32>
    %29 = vector.broadcast %28 : vector<4x32x1xf32> to vector<4x32x32xf32>
    %30 = arith.mulf %25, %29 : vector<4x32x32xf32>
    %31 = arith.truncf %30 : vector<4x32x32xf32> to vector<4x32x32xbf16>
    "tpu.trace_start"() <{level = 10 : i32, message = "bqk,bkd->bqd"}> : () -> ()
    %cst_9 = arith.constant dense<0.000000e+00> : vector<4x32x32xf32>
    %32 = tpu.matmul %31, %19, %cst_9 {dimension_numbers = #tpu.dot_dimension_numbers<[2], [1], [1], [2], [0, 0, 0, 1, 1, 2], [0], [0]>} : vector<4x32x32xbf16>, vector<4x32x32xbf16>, vector<4x32x32xf32> -> vector<4x32x32xf32>
    "tpu.trace_stop"() : () -> ()
    %33 = vector.shape_cast %32 : vector<4x32x32xf32> to vector<128x32xf32>
    %34 = vector.extract_strided_slice %9 {offsets = [0, 0, 32], sizes = [4, 32, 32], strides = [1, 1, 1]} : vector<4x32x128xf32> to vector<4x32x32xf32>
    %35 = arith.truncf %34 : vector<4x32x32xf32> to vector<4x32x32xbf16>
    %36 = vector.extract_strided_slice %11 {offsets = [0, 0, 32], sizes = [4, 32, 32], strides = [1, 1, 1]} : vector<4x32x128xf32> to vector<4x32x32xf32>
    %37 = arith.truncf %36 : vector<4x32x32xf32> to vector<4x32x32xbf16>
    %38 = vector.extract_strided_slice %13 {offsets = [0, 0, 32], sizes = [4, 32, 32], strides = [1, 1, 1]} : vector<4x32x128xf32> to vector<4x32x32xf32>
    %39 = arith.truncf %38 : vector<4x32x32xf32> to vector<4x32x32xbf16>
    "tpu.trace_start"() <{level = 10 : i32, message = "bqd,bkd->bqk"}> : () -> ()
    %cst_10 = arith.constant dense<0.000000e+00> : vector<4x32x32xf32>
    %40 = tpu.matmul %35, %37, %cst_10 {dimension_numbers = #tpu.dot_dimension_numbers<[2], [2], [1], [1], [0, 0, 0, 1, 1, 1], [0], [0]>} : vector<4x32x32xbf16>, vector<4x32x32xbf16>, vector<4x32x32xf32> -> vector<4x32x32xf32>
    "tpu.trace_stop"() : () -> ()
    %cst_11 = arith.constant dense<0xFF800000> : vector<4x32xf32>
    %41 = vector.multi_reduction <maximumf>, %40, %cst_11 [2] : vector<4x32x32xf32> to vector<4x32xf32>
    %42 = vector.shape_cast %41 : vector<4x32xf32> to vector<4x32x1xf32>
    %43 = vector.broadcast %42 : vector<4x32x1xf32> to vector<4x32x32xf32>
    %44 = arith.subf %40, %43 : vector<4x32x32xf32>
    %45 = math.exp %44 : vector<4x32x32xf32>
    %cst_12 = arith.constant dense<0.000000e+00> : vector<4x32xf32>
    %46 = vector.multi_reduction <add>, %45, %cst_12 [2] : vector<4x32x32xf32> to vector<4x32xf32>
    %47 = vector.shape_cast %46 : vector<4x32xf32> to vector<4x32x1xf32>
    %48 = tpu.reciprocal %47 {approx = true} : vector<4x32x1xf32> -> vector<4x32x1xf32>
    %49 = vector.broadcast %48 : vector<4x32x1xf32> to vector<4x32x32xf32>
    %50 = arith.mulf %45, %49 : vector<4x32x32xf32>
    %51 = arith.truncf %50 : vector<4x32x32xf32> to vector<4x32x32xbf16>
    "tpu.trace_start"() <{level = 10 : i32, message = "bqk,bkd->bqd"}> : () -> ()
    %cst_13 = arith.constant dense<0.000000e+00> : vector<4x32x32xf32>
    %52 = tpu.matmul %51, %39, %cst_13 {dimension_numbers = #tpu.dot_dimension_numbers<[2], [1], [1], [2], [0, 0, 0, 1, 1, 2], [0], [0]>} : vector<4x32x32xbf16>, vector<4x32x32xbf16>, vector<4x32x32xf32> -> vector<4x32x32xf32>
    "tpu.trace_stop"() : () -> ()
    %53 = vector.shape_cast %52 : vector<4x32x32xf32> to vector<128x32xf32>
    %54 = vector.extract_strided_slice %9 {offsets = [0, 0, 64], sizes = [4, 32, 32], strides = [1, 1, 1]} : vector<4x32x128xf32> to vector<4x32x32xf32>
    %55 = arith.truncf %54 : vector<4x32x32xf32> to vector<4x32x32xbf16>
    %56 = vector.extract_strided_slice %11 {offsets = [0, 0, 64], sizes = [4, 32, 32], strides = [1, 1, 1]} : vector<4x32x128xf32> to vector<4x32x32xf32>
    %57 = arith.truncf %56 : vector<4x32x32xf32> to vector<4x32x32xbf16>
    %58 = vector.extract_strided_slice %13 {offsets = [0, 0, 64], sizes = [4, 32, 32], strides = [1, 1, 1]} : vector<4x32x128xf32> to vector<4x32x32xf32>
    %59 = arith.truncf %58 : vector<4x32x32xf32> to vector<4x32x32xbf16>
    "tpu.trace_start"() <{level = 10 : i32, message = "bqd,bkd->bqk"}> : () -> ()
    %cst_14 = arith.constant dense<0.000000e+00> : vector<4x32x32xf32>
    %60 = tpu.matmul %55, %57, %cst_14 {dimension_numbers = #tpu.dot_dimension_numbers<[2], [2], [1], [1], [0, 0, 0, 1, 1, 1], [0], [0]>} : vector<4x32x32xbf16>, vector<4x32x32xbf16>, vector<4x32x32xf32> -> vector<4x32x32xf32>
    "tpu.trace_stop"() : () -> ()
    %cst_15 = arith.constant dense<0xFF800000> : vector<4x32xf32>
    %61 = vector.multi_reduction <maximumf>, %60, %cst_15 [2] : vector<4x32x32xf32> to vector<4x32xf32>
    %62 = vector.shape_cast %61 : vector<4x32xf32> to vector<4x32x1xf32>
    %63 = vector.broadcast %62 : vector<4x32x1xf32> to vector<4x32x32xf32>
    %64 = arith.subf %60, %63 : vector<4x32x32xf32>
    %65 = math.exp %64 : vector<4x32x32xf32>
    %cst_16 = arith.constant dense<0.000000e+00> : vector<4x32xf32>
    %66 = vector.multi_reduction <add>, %65, %cst_16 [2] : vector<4x32x32xf32> to vector<4x32xf32>
    %67 = vector.shape_cast %66 : vector<4x32xf32> to vector<4x32x1xf32>
    %68 = tpu.reciprocal %67 {approx = true} : vector<4x32x1xf32> -> vector<4x32x1xf32>
    %69 = vector.broadcast %68 : vector<4x32x1xf32> to vector<4x32x32xf32>
    %70 = arith.mulf %65, %69 : vector<4x32x32xf32>
    %71 = arith.truncf %70 : vector<4x32x32xf32> to vector<4x32x32xbf16>
    "tpu.trace_start"() <{level = 10 : i32, message = "bqk,bkd->bqd"}> : () -> ()
    %cst_17 = arith.constant dense<0.000000e+00> : vector<4x32x32xf32>
    %72 = tpu.matmul %71, %59, %cst_17 {dimension_numbers = #tpu.dot_dimension_numbers<[2], [1], [1], [2], [0, 0, 0, 1, 1, 2], [0], [0]>} : vector<4x32x32xbf16>, vector<4x32x32xbf16>, vector<4x32x32xf32> -> vector<4x32x32xf32>
    "tpu.trace_stop"() : () -> ()
    %73 = vector.shape_cast %72 : vector<4x32x32xf32> to vector<128x32xf32>
    %74 = vector.extract_strided_slice %9 {offsets = [0, 0, 96], sizes = [4, 32, 32], strides = [1, 1, 1]} : vector<4x32x128xf32> to vector<4x32x32xf32>
    %75 = arith.truncf %74 : vector<4x32x32xf32> to vector<4x32x32xbf16>
    %76 = vector.extract_strided_slice %11 {offsets = [0, 0, 96], sizes = [4, 32, 32], strides = [1, 1, 1]} : vector<4x32x128xf32> to vector<4x32x32xf32>
    %77 = arith.truncf %76 : vector<4x32x32xf32> to vector<4x32x32xbf16>
    %78 = vector.extract_strided_slice %13 {offsets = [0, 0, 96], sizes = [4, 32, 32], strides = [1, 1, 1]} : vector<4x32x128xf32> to vector<4x32x32xf32>
    %79 = arith.truncf %78 : vector<4x32x32xf32> to vector<4x32x32xbf16>
    "tpu.trace_start"() <{level = 10 : i32, message = "bqd,bkd->bqk"}> : () -> ()
    %cst_18 = arith.constant dense<0.000000e+00> : vector<4x32x32xf32>
    %80 = tpu.matmul %75, %77, %cst_18 {dimension_numbers = #tpu.dot_dimension_numbers<[2], [2], [1], [1], [0, 0, 0, 1, 1, 1], [0], [0]>} : vector<4x32x32xbf16>, vector<4x32x32xbf16>, vector<4x32x32xf32> -> vector<4x32x32xf32>
    "tpu.trace_stop"() : () -> ()
    %cst_19 = arith.constant dense<0xFF800000> : vector<4x32xf32>
    %81 = vector.multi_reduction <maximumf>, %80, %cst_19 [2] : vector<4x32x32xf32> to vector<4x32xf32>
    %82 = vector.shape_cast %81 : vector<4x32xf32> to vector<4x32x1xf32>
    %83 = vector.broadcast %82 : vector<4x32x1xf32> to vector<4x32x32xf32>
    %84 = arith.subf %80, %83 : vector<4x32x32xf32>
    %85 = math.exp %84 : vector<4x32x32xf32>
    %cst_20 = arith.constant dense<0.000000e+00> : vector<4x32xf32>
    %86 = vector.multi_reduction <add>, %85, %cst_20 [2] : vector<4x32x32xf32> to vector<4x32xf32>
    %87 = vector.shape_cast %86 : vector<4x32xf32> to vector<4x32x1xf32>
    %88 = tpu.reciprocal %87 {approx = true} : vector<4x32x1xf32> -> vector<4x32x1xf32>
    %89 = vector.broadcast %88 : vector<4x32x1xf32> to vector<4x32x32xf32>
    %90 = arith.mulf %85, %89 : vector<4x32x32xf32>
    %91 = arith.truncf %90 : vector<4x32x32xf32> to vector<4x32x32xbf16>
    "tpu.trace_start"() <{level = 10 : i32, message = "bqk,bkd->bqd"}> : () -> ()
    %cst_21 = arith.constant dense<0.000000e+00> : vector<4x32x32xf32>
    %92 = tpu.matmul %91, %79, %cst_21 {dimension_numbers = #tpu.dot_dimension_numbers<[2], [1], [1], [2], [0, 0, 0, 1, 1, 2], [0], [0]>} : vector<4x32x32xbf16>, vector<4x32x32xbf16>, vector<4x32x32xf32> -> vector<4x32x32xf32>
    "tpu.trace_stop"() : () -> ()
    %93 = vector.shape_cast %92 : vector<4x32x32xf32> to vector<128x32xf32>
    %94 = tpu.concatenate %33, %53, %73, %93 in 1 : vector<128x32xf32>, vector<128x32xf32>, vector<128x32xf32>, vector<128x32xf32> -> vector<128x128xf32>
    %95 = arith.truncf %94 : vector<128x128xf32> to vector<128x128xbf16>
    %c0_22 = arith.constant 0 : index
    %c0_23 = arith.constant 0 : index
    %96 = vector.load %arg4[%c0_22, %c0_23] : memref<128x128xbf16, #tpu.memory_space<vmem>>, vector<128x128xbf16>
    %cst_24 = arith.constant dense<0.000000e+00> : vector<128x128xf32>
    %97 = tpu.matmul %95, %96, %cst_24 {dimension_numbers = #tpu.dot_dimension_numbers<[1], [0], [0], [1], [0, 0, 1, 1], [], []>} : vector<128x128xbf16>, vector<128x128xbf16>, vector<128x128xf32> -> vector<128x128xf32>
    %c0_25 = arith.constant 0 : index
    %c0_26 = arith.constant 0 : index
    %98 = vector.load %arg5[%c0_25, %c0_26] : memref<1x128xf32, #tpu.memory_space<vmem>>, vector<1x128xf32>
    %99 = vector.broadcast %98 : vector<1x128xf32> to vector<128x128xf32>
    %100 = arith.addf %97, %99 : vector<128x128xf32>
    %101 = arith.addf %1, %100 : vector<128x128xf32>
    %c0_27 = arith.constant 0 : index
    %c0_28 = arith.constant 0 : index
    %102 = vector.load %arg6[%c0_27, %c0_28] : memref<1x128xf32, #tpu.memory_space<vmem>>, vector<1x128xf32>
    %103 = vector.broadcast %102 : vector<1x128xf32> to vector<128x128xf32>
    %104 = arith.mulf %101, %103 : vector<128x128xf32>
    %c0_29 = arith.constant 0 : index
    %c0_30 = arith.constant 0 : index
    %105 = vector.load %arg7[%c0_29, %c0_30] : memref<1x128xf32, #tpu.memory_space<vmem>>, vector<1x128xf32>
    %106 = vector.broadcast %105 : vector<1x128xf32> to vector<128x128xf32>
    %107 = arith.addf %104, %106 : vector<128x128xf32>
    %108 = arith.truncf %107 : vector<128x128xf32> to vector<128x128xbf16>
    %c0_31 = arith.constant 0 : index
    %c0_32 = arith.constant 0 : index
    %109 = vector.load %arg8[%c0_31, %c0_32] : memref<128x256xbf16, #tpu.memory_space<vmem>>, vector<128x256xbf16>
    %cst_33 = arith.constant dense<0.000000e+00> : vector<128x256xf32>
    %110 = tpu.matmul %108, %109, %cst_33 {dimension_numbers = #tpu.dot_dimension_numbers<[1], [0], [0], [1], [0, 0, 1, 1], [], []>} : vector<128x128xbf16>, vector<128x256xbf16>, vector<128x256xf32> -> vector<128x256xf32>
    %c0_34 = arith.constant 0 : index
    %c0_35 = arith.constant 0 : index
    %111 = vector.load %arg9[%c0_34, %c0_35] : memref<1x256xf32, #tpu.memory_space<vmem>>, vector<1x256xf32>
    %112 = vector.broadcast %111 : vector<1x256xf32> to vector<128x256xf32>
    %113 = arith.addf %110, %112 : vector<128x256xf32>
    %cst_36 = arith.constant 5.000000e-01 : f32
    %114 = vector.broadcast %cst_36 : f32 to vector<128x256xf32>
    %115 = arith.mulf %114, %113 : vector<128x256xf32>
    %cst_37 = arith.constant 4.471500e-02 : f32
    %116 = vector.broadcast %cst_37 : f32 to vector<128x256xf32>
    %117 = arith.mulf %116, %113 : vector<128x256xf32>
    %118 = arith.mulf %117, %113 : vector<128x256xf32>
    %119 = arith.mulf %118, %113 : vector<128x256xf32>
    %120 = arith.addf %113, %119 : vector<128x256xf32>
    %cst_38 = arith.constant 0.797884583 : f32
    %121 = vector.broadcast %cst_38 : f32 to vector<128x256xf32>
    %122 = arith.mulf %121, %120 : vector<128x256xf32>
    %123 = math.tanh %122 : vector<128x256xf32>
    %cst_39 = arith.constant 1.000000e+00 : f32
    %124 = vector.broadcast %cst_39 : f32 to vector<128x256xf32>
    %125 = arith.addf %124, %123 : vector<128x256xf32>
    %126 = arith.mulf %115, %125 : vector<128x256xf32>
    %127 = arith.truncf %126 : vector<128x256xf32> to vector<128x256xbf16>
    %c0_40 = arith.constant 0 : index
    %c0_41 = arith.constant 0 : index
    %128 = vector.load %arg10[%c0_40, %c0_41] : memref<256x128xbf16, #tpu.memory_space<vmem>>, vector<256x128xbf16>
    %cst_42 = arith.constant dense<0.000000e+00> : vector<128x128xf32>
    %129 = tpu.matmul %127, %128, %cst_42 {dimension_numbers = #tpu.dot_dimension_numbers<[1], [0], [0], [1], [0, 0, 1, 1], [], []>} : vector<128x256xbf16>, vector<256x128xbf16>, vector<128x128xf32> -> vector<128x128xf32>
    %c0_43 = arith.constant 0 : index
    %c0_44 = arith.constant 0 : index
    %130 = vector.load %arg11[%c0_43, %c0_44] : memref<1x128xf32, #tpu.memory_space<vmem>>, vector<1x128xf32>
    %131 = vector.broadcast %130 : vector<1x128xf32> to vector<128x128xf32>
    %132 = arith.addf %129, %131 : vector<128x128xf32>
    %133 = arith.addf %107, %132 : vector<128x128xf32>
    %c0_45 = arith.constant 0 : index
    %c0_46 = arith.constant 0 : index
    %134 = vector.load %arg12[%c0_45, %c0_46] : memref<1x128xf32, #tpu.memory_space<vmem>>, vector<1x128xf32>
    %135 = vector.broadcast %134 : vector<1x128xf32> to vector<128x128xf32>
    %136 = arith.mulf %133, %135 : vector<128x128xf32>
    %c0_47 = arith.constant 0 : index
    %c0_48 = arith.constant 0 : index
    %137 = vector.load %arg13[%c0_47, %c0_48] : memref<1x128xf32, #tpu.memory_space<vmem>>, vector<1x128xf32>
    %138 = vector.broadcast %137 : vector<1x128xf32> to vector<128x128xf32>
    %139 = arith.addf %136, %138 : vector<128x128xf32>
    %140 = vector.shape_cast %139 : vector<128x128xf32> to vector<4x32x128xf32>
    %c0_49 = arith.constant 0 : index
    %c0_50 = arith.constant 0 : index
    %c0_51 = arith.constant 0 : index
    %141 = vector.load %arg14[%c0_49, %c0_50, %c0_51] : memref<4x32x128xf32, #tpu.memory_space<vmem>>, vector<4x32x128xf32>
    tpu.vector_store %arg14[%c0_49, %c0_50, %c0_51], %140 {strides = array<i32>} : memref<4x32x128xf32, #tpu.memory_space<vmem>>, vector<4x32x128xf32>,
    return
  }
  func.func @transform_0(%arg0: i32) -> (i32, i32, i32) {
    %c0_i32 = arith.constant 0 : i32
    %c0_i32_0 = arith.constant 0 : i32
    %c0_i32_1 = arith.constant 0 : i32
    return %arg0, %c0_i32, %c0_i32_0 : i32, i32, i32
  }
  func.func @transform_1(%arg0: i32) -> (i32, i32) {
    %c0_i32 = arith.constant 0 : i32
    %c0_i32_0 = arith.constant 0 : i32
    %c0_i32_1 = arith.constant 0 : i32
    return %c0_i32, %c0_i32_0 : i32, i32
  }
  func.func @transform_2(%arg0: i32) -> (i32, i32) {
    %c0_i32 = arith.constant 0 : i32
    %c0_i32_0 = arith.constant 0 : i32
    %c0_i32_1 = arith.constant 0 : i32
    return %c0_i32, %c0_i32_0 : i32, i32
  }
  func.func @transform_3(%arg0: i32) -> (i32, i32) {
    %c0_i32 = arith.constant 0 : i32
    %c0_i32_0 = arith.constant 0 : i32
    %c0_i32_1 = arith.constant 0 : i32
    return %c0_i32, %c0_i32_0 : i32, i32
  }
  func.func @transform_4(%arg0: i32) -> (i32, i32) {
    %c0_i32 = arith.constant 0 : i32
    %c0_i32_0 = arith.constant 0 : i32
    %c0_i32_1 = arith.constant 0 : i32
    return %c0_i32, %c0_i32_0 : i32, i32
  }
  func.func @transform_5(%arg0: i32) -> (i32, i32) {
    %c0_i32 = arith.constant 0 : i32
    %c0_i32_0 = arith.constant 0 : i32
    %c0_i32_1 = arith.constant 0 : i32
    return %c0_i32, %c0_i32_0 : i32, i32
  }
  func.func @transform_6(%arg0: i32) -> (i32, i32) {
    %c0_i32 = arith.constant 0 : i32
    %c0_i32_0 = arith.constant 0 : i32
    %c0_i32_1 = arith.constant 0 : i32
    return %c0_i32, %c0_i32_0 : i32, i32
  }
  func.func @transform_7(%arg0: i32) -> (i32, i32) {
    %c0_i32 = arith.constant 0 : i32
    %c0_i32_0 = arith.constant 0 : i32
    %c0_i32_1 = arith.constant 0 : i32
    return %c0_i32, %c0_i32_0 : i32, i32
  }
  func.func @transform_8(%arg0: i32) -> (i32, i32) {
    %c0_i32 = arith.constant 0 : i32
    %c0_i32_0 = arith.constant 0 : i32
    %c0_i32_1 = arith.constant 0 : i32
    return %c0_i32, %c0_i32_0 : i32, i32
  }
  func.func @transform_9(%arg0: i32) -> (i32, i32) {
    %c0_i32 = arith.constant 0 : i32
    %c0_i32_0 = arith.constant 0 : i32
    %c0_i32_1 = arith.constant 0 : i32
    return %c0_i32, %c0_i32_0 : i32, i32
  }
  func.func @transform_10(%arg0: i32) -> (i32, i32) {
    %c0_i32 = arith.constant 0 : i32
    %c0_i32_0 = arith.constant 0 : i32
    %c0_i32_1 = arith.constant 0 : i32
    return %c0_i32, %c0_i32_0 : i32, i32
  }
  func.func @transform_11(%arg0: i32) -> (i32, i32) {
    %c0_i32 = arith.constant 0 : i32
    %c0_i32_0 = arith.constant 0 : i32
    %c0_i32_1 = arith.constant 0 : i32
    return %c0_i32, %c0_i32_0 : i32, i32
  }
  func.func @transform_12(%arg0: i32) -> (i32, i32) {
    %c0_i32 = arith.constant 0 : i32
    %c0_i32_0 = arith.constant 0 : i32
    %c0_i32_1 = arith.constant 0 : i32
    return %c0_i32, %c0_i32_0 : i32, i32
  }
  func.func @transform_13(%arg0: i32) -> (i32, i32, i32) {
    %c0_i32 = arith.constant 0 : i32
    %c0_i32_0 = arith.constant 0 : i32
    %c0_i32_1 = arith.constant 0 : i32
    return %arg0, %c0_i32, %c0_i32_0 : i32, i32, i32
  }
}

</mosaic_0001>

<llo_original>
// kernel: tpu_custom_call.1
$region0: #{tpu_custom_call.1}
  #allocation0 [shape = 'u32[]', space=smem, size = 0x4, offset = 0x4, fixed_abs, tag = 'smem constant byte address 0x4 - core index']
  #allocation1 [shape = 'u32[72,128]{1,0:T(1,128)}', space=vmem, size = 0x9000, scoped, tag = 'internal scratch']
  %s0 = inlined_call_operand.hbm [shape: f32[8,32,128], index: 0, kind: input, shape index: {}]
  %s1 = inlined_call_operand.hbm [shape: bf16[128,384], index: 1, kind: input, shape index: {}]
  %s2 = inlined_call_operand.hbm [shape: f32[1,384], index: 2, kind: input, shape index: {}]
  %s3 = inlined_call_operand.hbm [shape: bf16[128,128], index: 3, kind: input, shape index: {}]
  %s4 = inlined_call_operand.vmem [shape: f32[1,128], index: 4, kind: input, shape index: {}]
  %s5 = inlined_call_operand.vmem [shape: f32[1,128], index: 5, kind: input, shape index: {}]
  %s6 = inlined_call_operand.vmem [shape: f32[1,128], index: 6, kind: input, shape index: {}]
  %s7 = inlined_call_operand.hbm [shape: bf16[128,256], index: 7, kind: input, shape index: {}]
  %s8 = inlined_call_operand.vmem [shape: f32[1,256], index: 8, kind: input, shape index: {}]
  %s9 = inlined_call_operand.hbm [shape: bf16[256,128], index: 9, kind: input, shape index: {}]
  %s10 = inlined_call_operand.vmem [shape: f32[1,128], index: 10, kind: input, shape index: {}]
  %s11 = inlined_call_operand.vmem [shape: f32[1,128], index: 11, kind: input, shape index: {}]
  %s12 = inlined_call_operand.vmem [shape: f32[1,128], index: 12, kind: input, shape index: {}]
  %s13 = inlined_call_operand.hbm [shape: f32[8,32,128], index: 13, kind: output, shape index: {}]
  %s14 = sld [smem:[#allocation0]]
  $region109: #{tpu_custom_call.1} parent=0
    _
  %s16 = ssub.s32 1, %s14
  %s17 = scalar_select 0, %s16, %s14
  $region1: #{tpu_custom_call.1} parent=0
    #allocation2 [shape = 'u8[131072]{0}', space=vmem, size = 0x20000, scoped, tag = 'input window, operand 0']
    #allocation3 [shape = 's32[2]{0}', space=sflag, size = 0x8, scoped, tag = 'scoped memory for tpu_custom_call.1']
    #allocation4 [shape = 's32[2]{0}', space=sflag, size = 0x8, scoped, tag = 'scoped memory for tpu_custom_call.1']
    #allocation5 [shape = 'u8[98304]{0}', space=vmem, size = 0x18000, scoped, tag = 'input window, operand 1, single buffered']
    #allocation6 [shape = 's32[1]{0}', space=sflag, size = 0x4, scoped, tag = 'scoped memory for tpu_custom_call.1']
    #allocation7 [shape = 'u8[1536]{0}', space=vmem, size = 0x800, scoped, tag = 'input window, operand 2, single buffered']
    #allocation8 [shape = 'u8[32768]{0}', space=vmem, size = 0x8000, scoped, tag = 'input window, operand 3, single buffered']
    #allocation9 [shape = 's32[1]{0}', space=sflag, size = 0x4, scoped, tag = 'scoped memory for tpu_custom_call.1']
    #allocation10 [shape = 'u8[65536]{0}', space=vmem, size = 0x10000, scoped, tag = 'input window, operand 7, single buffered']
    #allocation11 [shape = 'u8[65536]{0}', space=vmem, size = 0x10000, scoped, tag = 'input window, operand 9, single buffered']
    #allocation12 [shape = 's32[1]{0}', space=sflag, size = 0x4, scoped, tag = 'scoped memory for tpu_custom_call.1']
    #allocation13 [shape = 'u8[131072]{0}', space=vmem, size = 0x20000, scoped, tag = 'output window, operand 0']
    %18 = vsyncpa [#allocation3], 0
    %s19 = scalar_lea.sflag [#allocation3], 1
    %20 = vsyncpa %s19, 0
    %21 = vsyncpa [#allocation6], 0
    %22 = vsyncpa [#allocation9], 0
    %23 = vsyncpa [#allocation12], 0
    %24 = vsyncpa [#allocation4], 0
    %s25 = scalar_lea.sflag [#allocation4], 1
    %26 = vsyncpa %s25, 0
    loop: start=0, step=1, limit=4
    $region2: #{tpu_custom_call.1} parent=1 // loop_pre_header
      _
    $region3: #{tpu_custom_call.1} parent=1 // loop_header
      %s28 = sphi 0, %s32
      %p29 = scmp.ge.s32.totalorder %s28, 4
      %s38 = sphi 0, %s40
      %s41 = sphi 0, %s38
      %s42 = sphi 0, %s41
      %s58 = sphi 0, %s42
      %s62 = sphi 0, %s62
      %s64 = sphi 0, %s62
      %s65 = sphi 0, %s64
      %s79 = sphi 0, %s65
      %s83 = sphi 0, %s83
      %s85 = sphi 0, %s83
      %s86 = sphi 0, %s85
      %s100 = sphi 0, %s86
      %s104 = sphi 0, %s104
      %s106 = sphi 0, %s104
      %s107 = sphi 0, %s106
      %s121 = sphi 0, %s107
      %s125 = sphi 0, %s125
      %s127 = sphi 0, %s125
      %s128 = sphi 0, %s127
      %s142 = sphi 0, %s128
      %s146 = sphi 0, %s146
      %s148 = sphi 0, %s146
      %s149 = sphi 0, %s148
      %s163 = sphi 0, %s149
      %s167 = sphi 0, %s167
      %s169 = sphi 0, %s167
      %s170 = sphi 0, %s169
      %s184 = sphi 0, %s170
      %s188 = sphi 0, %s188
      %s190 = sphi 0, %s188
      %s191 = sphi 0, %s190
      %s205 = sphi 0, %s191
      %s209 = sphi 0, %s209
      %s211 = sphi 0, %s209
      %s212 = sphi 0, %s211
      %s226 = sphi 0, %s212
      %s230 = sphi 0, %s230
      %s232 = sphi 0, %s230
      %s233 = sphi 0, %s232
      %s247 = sphi 0, %s233
      %s251 = sphi 0, %s251
      %s253 = sphi 0, %s251
      %s254 = sphi 0, %s253
      %s268 = sphi 0, %s254
      %s272 = sphi 0, %s272
      %s274 = sphi 0, %s272
      %s275 = sphi 0, %s274
      %s289 = sphi 0, %s275
      %s293 = sphi 0, %s293
      %s295 = sphi 0, %s293
      %s296 = sphi 0, %s295
      %s310 = sphi 0, %s296
      %s316 = sphi 0, %s318
      %s319 = sphi 0, %s316
      %s320 = sphi 0, %s319
      %s336 = sphi 0, %s320
    $region4: #{tpu_custom_call.1} parent=1 // loop_header_branch
      %31 = sbr.rel (%p29) target = $region8
    $region5: #{tpu_custom_call.1} parent=1 // loop_body
      %s33 = ssub.s32 %s28, 1
      %s34 = ssub.s32 %s28, 2
      %s35 = sadd.s32 %s28, 1
      %s36 = ssub.s32 %s28, %s35
      %p37 = scmp.eq.s32.totalorder %s36, 0
      %s39 = sadd.s32 %s38, 1
      %s40 = scalar_select %p37, %s38, %s39
      %p43 = pneg %p37
      %p44 = scmp.eq.s32.totalorder %s28, 1
      %p45 = por %p43, %p44
      %p46 = scmp.ne.s32.totalorder %s38, %s41
      %p47 = scmp.eq.s32.totalorder %s28, 0
      %p48 = por %p46, %p47
      %p49 = scmp.ne.s32.totalorder %s38, %s41
      %p50 = scmp.eq.s32.totalorder %s33, 1
      %p51 = por %p49, %p50
      %p52 = scmp.ne.s32.totalorder %s41, %s42
      %p53 = scmp.eq.s32.totalorder %s33, 0
      %p54 = por %p52, %p53
      %p55 = scmp.ne.s32.totalorder %s41, %s42
      %p56 = scmp.eq.s32.totalorder %s34, 1
      %p57 = por %p55, %p56
      %p59 = scmp.ne.s32.totalorder %s42, %s58
      %p60 = scmp.eq.s32.totalorder %s34, 0
      %p61 = por %p59, %p60
      %s63 = sadd.s32 %s62, 1
      %p66 = scmp.eq.s32.totalorder %s28, 1
      %p67 = scmp.ne.s32.totalorder %s62, %s64
      %p68 = scmp.eq.s32.totalorder %s28, 0
      %p69 = por %p67, %p68
      %p70 = scmp.ne.s32.totalorder %s62, %s64
      %p71 = scmp.eq.s32.totalorder %s33, 1
      %p72 = por %p70, %p71
      %p73 = scmp.ne.s32.totalorder %s64, %s65
      %p74 = scmp.eq.s32.totalorder %s33, 0
      %p75 = por %p73, %p74
      %p76 = scmp.ne.s32.totalorder %s64, %s65
      %p77 = scmp.eq.s32.totalorder %s34, 1
      %p78 = por %p76, %p77
      %p80 = scmp.ne.s32.totalorder %s65, %s79
      %p81 = scmp.eq.s32.totalorder %s34, 0
      %p82 = por %p80, %p81
      %s84 = sadd.s32 %s83, 1
      %p87 = scmp.eq.s32.totalorder %s28, 1
      %p88 = scmp.ne.s32.totalorder %s83, %s85
      %p89 = scmp.eq.s32.totalorder %s28, 0
      %p90 = por %p88, %p89
      %p91 = scmp.ne.s32.totalorder %s83, %s85
      %p92 = scmp.eq.s32.totalorder %s33, 1
      %p93 = por %p91, %p92
      %p94 = scmp.ne.s32.totalorder %s85, %s86
      %p95 = scmp.eq.s32.totalorder %s33, 0
      %p96 = por %p94, %p95
      %p97 = scmp.ne.s32.totalorder %s85, %s86
      %p98 = scmp.eq.s32.totalorder %s34, 1
      %p99 = por %p97, %p98
      %p101 = scmp.ne.s32.totalorder %s86, %s100
      %p102 = scmp.eq.s32.totalorder %s34, 0
      %p103 = por %p101, %p102
      %s105 = sadd.s32 %s104, 1
      %p108 = scmp.eq.s32.totalorder %s28, 1
      %p109 = scmp.ne.s32.totalorder %s104, %s106
      %p110 = scmp.eq.s32.totalorder %s28, 0
      %p111 = por %p109, %p110
      %p112 = scmp.ne.s32.totalorder %s104, %s106
      %p113 = scmp.eq.s32.totalorder %s33, 1
      %p114 = por %p112, %p113
      %p115 = scmp.ne.s32.totalorder %s106, %s107
      %p116 = scmp.eq.s32.totalorder %s33, 0
      %p117 = por %p115, %p116
      %p118 = scmp.ne.s32.totalorder %s106, %s107
      %p119 = scmp.eq.s32.totalorder %s34, 1
      %p120 = por %p118, %p119
      %p122 = scmp.ne.s32.totalorder %s107, %s121
      %p123 = scmp.eq.s32.totalorder %s34, 0
      %p124 = por %p122, %p123
      %s126 = sadd.s32 %s125, 1
      %p129 = scmp.eq.s32.totalorder %s28, 1
      %p130 = scmp.ne.s32.totalorder %s125, %s127
      %p131 = scmp.eq.s32.totalorder %s28, 0
      %p132 = por %p130, %p131
      %p133 = scmp.ne.s32.totalorder %s125, %s127
      %p134 = scmp.eq.s32.totalorder %s33, 1
      %p135 = por %p133, %p134
      %p136 = scmp.ne.s32.totalorder %s127, %s128
      %p137 = scmp.eq.s32.totalorder %s33, 0
      %p138 = por %p136, %p137
      %p139 = scmp.ne.s32.totalorder %s127, %s128
      %p140 = scmp.eq.s32.totalorder %s34, 1
      %p141 = por %p139, %p140
      %p143 = scmp.ne.s32.totalorder %s128, %s142
      %p144 = scmp.eq.s32.totalorder %s34, 0
      %p145 = por %p143, %p144
      %s147 = sadd.s32 %s146, 1
      %p150 = scmp.eq.s32.totalorder %s28, 1
      %p151 = scmp.ne.s32.totalorder %s146, %s148
      %p152 = scmp.eq.s32.totalorder %s28, 0
      %p153 = por %p151, %p152
      %p154 = scmp.ne.s32.totalorder %s146, %s148
      %p155 = scmp.eq.s32.totalorder %s33, 1
      %p156 = por %p154, %p155
      %p157 = scmp.ne.s32.totalorder %s148, %s149
      %p158 = scmp.eq.s32.totalorder %s33, 0
      %p159 = por %p157, %p158
      %p160 = scmp.ne.s32.totalorder %s148, %s149
      %p161 = scmp.eq.s32.totalorder %s34, 1
      %p162 = por %p160, %p161
      %p164 = scmp.ne.s32.totalorder %s149, %s163
      %p165 = scmp.eq.s32.totalorder %s34, 0
      %p166 = por %p164, %p165
      %s168 = sadd.s32 %s167, 1
      %p171 = scmp.eq.s32.totalorder %s28, 1
      %p172 = scmp.ne.s32.totalorder %s167, %s169
      %p173 = scmp.eq.s32.totalorder %s28, 0
      %p174 = por %p172, %p173
      %p175 = scmp.ne.s32.totalorder %s167, %s169
      %p176 = scmp.eq.s32.totalorder %s33, 1
      %p177 = por %p175, %p176
      %p178 = scmp.ne.s32.totalorder %s169, %s170
      %p179 = scmp.eq.s32.totalorder %s33, 0
      %p180 = por %p178, %p179
      %p181 = scmp.ne.s32.totalorder %s169, %s170
      %p182 = scmp.eq.s32.totalorder %s34, 1
      %p183 = por %p181, %p182
      %p185 = scmp.ne.s32.totalorder %s170, %s184
      %p186 = scmp.eq.s32.totalorder %s34, 0
      %p187 = por %p185, %p186
      %s189 = sadd.s32 %s188, 1
      %p192 = scmp.eq.s32.totalorder %s28, 1
      %p193 = scmp.ne.s32.totalorder %s188, %s190
      %p194 = scmp.eq.s32.totalorder %s28, 0
      %p195 = por %p193, %p194
      %p196 = scmp.ne.s32.totalorder %s188, %s190
      %p197 = scmp.eq.s32.totalorder %s33, 1
      %p198 = por %p196, %p197
      %p199 = scmp.ne.s32.totalorder %s190, %s191
      %p200 = scmp.eq.s32.totalorder %s33, 0
      %p201 = por %p199, %p200
      %p202 = scmp.ne.s32.totalorder %s190, %s191
      %p203 = scmp.eq.s32.totalorder %s34, 1
      %p204 = por %p202, %p203
      %p206 = scmp.ne.s32.totalorder %s191, %s205
      %p207 = scmp.eq.s32.totalorder %s34, 0
      %p208 = por %p206, %p207
      %s210 = sadd.s32 %s209, 1
      %p213 = scmp.eq.s32.totalorder %s28, 1
      %p214 = scmp.ne.s32.totalorder %s209, %s211
      %p215 = scmp.eq.s32.totalorder %s28, 0
      %p216 = por %p214, %p215
      %p217 = scmp.ne.s32.totalorder %s209, %s211
      %p218 = scmp.eq.s32.totalorder %s33, 1
      %p219 = por %p217, %p218
      %p220 = scmp.ne.s32.totalorder %s211, %s212
      %p221 = scmp.eq.s32.totalorder %s33, 0
      %p222 = por %p220, %p221
      %p223 = scmp.ne.s32.totalorder %s211, %s212
      %p224 = scmp.eq.s32.totalorder %s34, 1
      %p225 = por %p223, %p224
      %p227 = scmp.ne.s32.totalorder %s212, %s226
      %p228 = scmp.eq.s32.totalorder %s34, 0
      %p229 = por %p227, %p228
      %s231 = sadd.s32 %s230, 1
      %p234 = scmp.eq.s32.totalorder %s28, 1
      %p235 = scmp.ne.s32.totalorder %s230, %s232
      %p236 = scmp.eq.s32.totalorder %s28, 0
      %p237 = por %p235, %p236
      %p238 = scmp.ne.s32.totalorder %s230, %s232
      %p239 = scmp.eq.s32.totalorder %s33, 1
      %p240 = por %p238, %p239
      %p241 = scmp.ne.s32.totalorder %s232, %s233
      %p242 = scmp.eq.s32.totalorder %s33, 0
      %p243 = por %p241, %p242
      %p244 = scmp.ne.s32.totalorder %s232, %s233
      %p245 = scmp.eq.s32.totalorder %s34, 1
      %p246 = por %p244, %p245
      %p248 = scmp.ne.s32.totalorder %s233, %s247
      %p249 = scmp.eq.s32.totalorder %s34, 0
      %p250 = por %p248, %p249
      %s252 = sadd.s32 %s251, 1
      %p255 = scmp.eq.s32.totalorder %s28, 1
      %p256 = scmp.ne.s32.totalorder %s251, %s253
      %p257 = scmp.eq.s32.totalorder %s28, 0
      %p258 = por %p256, %p257
      %p259 = scmp.ne.s32.totalorder %s251, %s253
      %p260 = scmp.eq.s32.totalorder %s33, 1
      %p261 = por %p259, %p260
      %p262 = scmp.ne.s32.totalorder %s253, %s254
      %p263 = scmp.eq.s32.totalorder %s33, 0
      %p264 = por %p262, %p263
      %p265 = scmp.ne.s32.totalorder %s253, %s254
      %p266 = scmp.eq.s32.totalorder %s34, 1
      %p267 = por %p265, %p266
      %p269 = scmp.ne.s32.totalorder %s254, %s268
      %p270 = scmp.eq.s32.totalorder %s34, 0
      %p271 = por %p269, %p270
      %s273 = sadd.s32 %s272, 1
      %p276 = scmp.eq.s32.totalorder %s28, 1
      %p277 = scmp.ne.s32.totalorder %s272, %s274
      %p278 = scmp.eq.s32.totalorder %s28, 0
      %p279 = por %p277, %p278
      %p280 = scmp.ne.s32.totalorder %s272, %s274
      %p281 = scmp.eq.s32.totalorder %s33, 1
      %p282 = por %p280, %p281
      %p283 = scmp.ne.s32.totalorder %s274, %s275
      %p284 = scmp.eq.s32.totalorder %s33, 0
      %p285 = por %p283, %p284
      %p286 = scmp.ne.s32.totalorder %s274, %s275
      %p287 = scmp.eq.s32.totalorder %s34, 1
      %p288 = por %p286, %p287
      %p290 = scmp.ne.s32.totalorder %s275, %s289
      %p291 = scmp.eq.s32.totalorder %s34, 0
      %p292 = por %p290, %p291
      %s294 = sadd.s32 %s293, 1
      %p297 = scmp.eq.s32.totalorder %s28, 1
      %p298 = scmp.ne.s32.totalorder %s293, %s295
      %p299 = scmp.eq.s32.totalorder %s28, 0
      %p300 = por %p298, %p299
      %p301 = scmp.ne.s32.totalorder %s293, %s295
      %p302 = scmp.eq.s32.totalorder %s33, 1
      %p303 = por %p301, %p302
      %p304 = scmp.ne.s32.totalorder %s295, %s296
      %p305 = scmp.eq.s32.totalorder %s33, 0
      %p306 = por %p304, %p305
      %p307 = scmp.ne.s32.totalorder %s295, %s296
      %p308 = scmp.eq.s32.totalorder %s34, 1
      %p309 = por %p307, %p308
      %p311 = scmp.ne.s32.totalorder %s296, %s310
      %p312 = scmp.eq.s32.totalorder %s34, 0
      %p313 = por %p311, %p312
      %s314 = ssub.s32 %s28, %s35
      %p315 = scmp.eq.s32.totalorder %s314, 0
      %s317 = sadd.s32 %s316, 1
      %s318 = scalar_select %p315, %s316, %s317
      %p321 = pneg %p315
      %p322 = scmp.eq.s32.totalorder %s28, 1
      %p323 = por %p321, %p322
      %p324 = scmp.ne.s32.totalorder %s316, %s319
      %p325 = scmp.eq.s32.totalorder %s28, 0
      %p326 = por %p324, %p325
      %p327 = scmp.ne.s32.totalorder %s316, %s319
      %p328 = scmp.eq.s32.totalorder %s33, 1
      %p329 = por %p327, %p328
      %p330 = scmp.ne.s32.totalorder %s319, %s320
      %p331 = scmp.eq.s32.totalorder %s33, 0
      %p332 = por %p330, %p331
      %p333 = scmp.ne.s32.totalorder %s319, %s320
      %p334 = scmp.eq.s32.totalorder %s34, 1
      %p335 = por %p333, %p334
      %p337 = scmp.ne.s32.totalorder %s320, %s336
      %p338 = scmp.eq.s32.totalorder %s34, 0
      %p339 = por %p337, %p338
      %p340 = scmp.le.s32.totalorder 1, %s28
      %p341 = scmp.lt.s32.totalorder %s28, 3
      %p342 = pnand %p340, %p341
      %p343 = pneg %p342
      // Predicated region
      $region9: #{tpu_custom_call.1} parent=5 // pred_check
        _
      $region10: #{tpu_custom_call.1} parent=5 // pred_check_branch
        %345 = sbr.rel (%p342) target = $region12
      $region11: #{tpu_custom_call.1} parent=5 // pred_region
        %s346 = ssub.s32 %s28, 1
        // Predicated region
        $region13: #{tpu_custom_call.1} parent=11 // pred_check
          %p347 = pneg %p75
        $region14: #{tpu_custom_call.1} parent=11 // pred_check_branch
          %349 = sbr.rel (%p347) target = $region16
        $region15: #{tpu_custom_call.1} parent=11 // pred_region
          %351 = vsyncadd [#allocation6], 0
          %s352 = sshll.u32 %s1, 4
          %s353 = int_to_ptr.hbm [resolvable:$true] %s352
          %s354 = sshll.u32 [#allocation5], 4
          %s355 = int_to_ptr.vmem [resolvable:$true] %s354
          %360 = dma.hbm_to_vmem [thread:$0]  %s353, 3072, %s355, [#allocation6], 192, 192, 12
        $region16: #{tpu_custom_call.1} parent=11 // pred_fallthru
          _
        // Predicated region
        $region17: #{tpu_custom_call.1} parent=11 // pred_check
          %p361 = pneg %p96
        $region18: #{tpu_custom_call.1} parent=11 // pred_check_branch
          %363 = sbr.rel (%p361) target = $region20
        $region19: #{tpu_custom_call.1} parent=11 // pred_region
          %365 = vsyncadd [#allocation6], 0
          %s367 = sshll.u32 %s2, 4
          %s368 = int_to_ptr.hbm [resolvable:$true] %s367
          %s369 = sshll.u32 [#allocation7], 4
          %s370 = int_to_ptr.vmem [resolvable:$true] %s369
          %372 = dma.hbm_to_vmem [thread:$0]  %s368, 48, %s370, [#allocation6]
        $region20: #{tpu_custom_call.1} parent=11 // pred_fallthru
          _
        // Predicated region
        $region21: #{tpu_custom_call.1} parent=11 // pred_check
          %p373 = pneg %p117
        $region22: #{tpu_custom_call.1} parent=11 // pred_check_branch
          %375 = sbr.rel (%p373) target = $region24
        $region23: #{tpu_custom_call.1} parent=11 // pred_region
          %377 = vsyncadd [#allocation9], 0
          %s378 = sshll.u32 %s3, 4
          %s379 = int_to_ptr.hbm [resolvable:$true] %s378
          %s380 = sshll.u32 [#allocation8], 4
          %s381 = int_to_ptr.vmem [resolvable:$true] %s380
          %386 = dma.hbm_to_vmem [thread:$0]  %s379, 1024, %s381, [#allocation9], 64, 64, 4
        $region24: #{tpu_custom_call.1} parent=11 // pred_fallthru
          _
        // Predicated region
        $region25: #{tpu_custom_call.1} parent=11 // pred_check
          %p387 = pneg %p138
        $region26: #{tpu_custom_call.1} parent=11 // pred_check_branch
          %389 = sbr.rel (%p387) target = $region28
        $region27: #{tpu_custom_call.1} parent=11 // pred_region
          _
        $region28: #{tpu_custom_call.1} parent=11 // pred_fallthru
          _
        // Predicated region
        $region29: #{tpu_custom_call.1} parent=11 // pred_check
          %p390 = pneg %p159
        $region30: #{tpu_custom_call.1} parent=11 // pred_check_branch
          %392 = sbr.rel (%p390) target = $region32
        $region31: #{tpu_custom_call.1} parent=11 // pred_region
          _
        $region32: #{tpu_custom_call.1} parent=11 // pred_fallthru
          _
        // Predicated region
        $region33: #{tpu_custom_call.1} parent=11 // pred_check
          %p393 = pneg %p180
        $region34: #{tpu_custom_call.1} parent=11 // pred_check_branch
          %395 = sbr.rel (%p393) target = $region36
        $region35: #{tpu_custom_call.1} parent=11 // pred_region
          _
        $region36: #{tpu_custom_call.1} parent=11 // pred_fallthru
          _
        // Predicated region
        $region37: #{tpu_custom_call.1} parent=11 // pred_check
          %p396 = pneg %p201
        $region38: #{tpu_custom_call.1} parent=11 // pred_check_branch
          %398 = sbr.rel (%p396) target = $region40
        $region39: #{tpu_custom_call.1} parent=11 // pred_region
          %400 = vsyncadd [#allocation9], 0
          %s401 = sshll.u32 %s7, 4
          %s402 = int_to_ptr.hbm [resolvable:$true] %s401
          %s403 = sshll.u32 [#allocation10], 4
          %s404 = int_to_ptr.vmem [resolvable:$true] %s403
          %409 = dma.hbm_to_vmem [thread:$0]  %s402, 2048, %s404, [#allocation9], 128, 128, 8
        $region40: #{tpu_custom_call.1} parent=11 // pred_fallthru
          _
        // Predicated region
        $region41: #{tpu_custom_call.1} parent=11 // pred_check
          %p410 = pneg %p222
        $region42: #{tpu_custom_call.1} parent=11 // pred_check_branch
          %412 = sbr.rel (%p410) target = $region44
        $region43: #{tpu_custom_call.1} parent=11 // pred_region
          _
        $region44: #{tpu_custom_call.1} parent=11 // pred_fallthru
          _
        // Predicated region
        $region45: #{tpu_custom_call.1} parent=11 // pred_check
          %p413 = pneg %p243
        $region46: #{tpu_custom_call.1} parent=11 // pred_check_branch
          %415 = sbr.rel (%p413) target = $region48
        $region47: #{tpu_custom_call.1} parent=11 // pred_region
          %417 = vsyncadd [#allocation12], 0
          %s418 = sshll.u32 %s9, 4
          %s419 = int_to_ptr.hbm [resolvable:$true] %s418
          %s420 = sshll.u32 [#allocation11], 4
          %s421 = int_to_ptr.vmem [resolvable:$true] %s420
          %426 = dma.hbm_to_vmem [thread:$0]  %s419, 2048, %s421, [#allocation12], 64, 64, 4
        $region48: #{tpu_custom_call.1} parent=11 // pred_fallthru
          _
        // Predicated region
        $region49: #{tpu_custom_call.1} parent=11 // pred_check
          %p427 = pneg %p264
        $region50: #{tpu_custom_call.1} parent=11 // pred_check_branch
          %429 = sbr.rel (%p427) target = $region52
        $region51: #{tpu_custom_call.1} parent=11 // pred_region
          _
        $region52: #{tpu_custom_call.1} parent=11 // pred_fallthru
          _
        // Predicated region
        $region53: #{tpu_custom_call.1} parent=11 // pred_check
          %p430 = pneg %p285
        $region54: #{tpu_custom_call.1} parent=11 // pred_check_branch
          %432 = sbr.rel (%p430) target = $region56
        $region55: #{tpu_custom_call.1} parent=11 // pred_region
          _
        $region56: #{tpu_custom_call.1} parent=11 // pred_fallthru
          _
        // Predicated region
        $region57: #{tpu_custom_call.1} parent=11 // pred_check
          %p433 = pneg %p306
        $region58: #{tpu_custom_call.1} parent=11 // pred_check_branch
          %435 = sbr.rel (%p433) target = $region60
        $region59: #{tpu_custom_call.1} parent=11 // pred_region
          _
        $region60: #{tpu_custom_call.1} parent=11 // pred_fallthru
          _
      $region12: #{tpu_custom_call.1} parent=5 // pred_fallthru
        _
      %p436 = scmp.lt.s32.totalorder %s28, 2
      // Predicated region
      $region61: #{tpu_custom_call.1} parent=5 // pred_check
        %p437 = pneg %p436
      $region62: #{tpu_custom_call.1} parent=5 // pred_check_branch
        %439 = sbr.rel (%p437) target = $region64
      $region63: #{tpu_custom_call.1} parent=5 // pred_region
        // Predicated region
        $region65: #{tpu_custom_call.1} parent=63 // pred_check
          %p440 = pneg %p48
        $region66: #{tpu_custom_call.1} parent=63 // pred_check_branch
          %442 = sbr.rel (%p440) target = $region68
        $region67: #{tpu_custom_call.1} parent=63 // pred_region
          %s443 = sand.u32 %s38, 1
          %s444 = scalar_lea.sflag [#allocation3], %s443
          %s445 = sand.u32 %s38, 1
          %s446 = smul.addr %s445, 128
          %s447 = scalar_lea.vmem [#allocation2], %s446
          %s448 = smul.u32 4, %s28
          %450 = vsyncadd %s444, 0
          %s451 = smul.addr %s448, 4
          %s452 = smul.addr %s451, 8
          %s453 = scalar_lea.hbm %s0, %s452
          %s454 = sshll.u32 %s453, 4
          %s455 = int_to_ptr.hbm [resolvable:$true] %s454
          %s456 = sshll.u32 %s447, 4
          %s457 = int_to_ptr.vmem [resolvable:$true] %s456
          %462 = dma.hbm_to_vmem [thread:$0]  %s455, 2048, %s457, %s444, 128, 128, 8
        $region68: #{tpu_custom_call.1} parent=63 // pred_fallthru
          _
      $region64: #{tpu_custom_call.1} parent=5 // pred_fallthru
        _
      %p463 = scmp.le.s32.totalorder 1, %s28
      %p464 = scmp.lt.s32.totalorder %s28, 3
      %p465 = pnand %p463, %p464
      %p466 = pneg %p465
      // Predicated region
      $region69: #{tpu_custom_call.1} parent=5 // pred_check
        _
      $region70: #{tpu_custom_call.1} parent=5 // pred_check_branch
        %468 = sbr.rel (%p465) target = $region72
      $region71: #{tpu_custom_call.1} parent=5 // pred_region
        %s469 = ssub.s32 %s28, 1
        %s470 = sand.u32 %s41, 1
        %s471 = scalar_lea.sflag [#allocation3], %s470
        %s472 = sand.u32 %s41, 1
        %s473 = smul.addr %s472, 128
        %s474 = scalar_lea.vmem [#allocation2], %s473
        // Predicated region
        $region73: #{tpu_custom_call.1} parent=71 // pred_check
          %p475 = pneg %p54
        $region74: #{tpu_custom_call.1} parent=71 // pred_check_branch
          %477 = sbr.rel (%p475) target = $region76
        $region75: #{tpu_custom_call.1} parent=71 // pred_region
          %479 = dma.done %s471, 2048
        $region76: #{tpu_custom_call.1} parent=71 // pred_fallthru
          _
        // Predicated region
        $region77: #{tpu_custom_call.1} parent=71 // pred_check
          %p480 = pneg %p75
        $region78: #{tpu_custom_call.1} parent=71 // pred_check_branch
          %482 = sbr.rel (%p480) target = $region80
        $region79: #{tpu_custom_call.1} parent=71 // pred_region
          %484 = dma.done [#allocation6], 3072
        $region80: #{tpu_custom_call.1} parent=71 // pred_fallthru
          _
        // Predicated region
        $region81: #{tpu_custom_call.1} parent=71 // pred_check
          %p485 = pneg %p96
        $region82: #{tpu_custom_call.1} parent=71 // pred_check_branch
          %487 = sbr.rel (%p485) target = $region84
        $region83: #{tpu_custom_call.1} parent=71 // pred_region
          %489 = dma.done [#allocation6], 48
        $region84: #{tpu_custom_call.1} parent=71 // pred_fallthru
          _
        // Predicated region
        $region85: #{tpu_custom_call.1} parent=71 // pred_check
          %p490 = pneg %p117
        $region86: #{tpu_custom_call.1} parent=71 // pred_check_branch
          %492 = sbr.rel (%p490) target = $region88
        $region87: #{tpu_custom_call.1} parent=71 // pred_region
          %494 = dma.done [#allocation9], 1024
        $region88: #{tpu_custom_call.1} parent=71 // pred_fallthru
          _
        // Predicated region
        $region89: #{tpu_custom_call.1} parent=71 // pred_check
          %p495 = pneg %p201
        $region90: #{tpu_custom_call.1} parent=71 // pred_check_branch
          %497 = sbr.rel (%p495) target = $region92
        $region91: #{tpu_custom_call.1} parent=71 // pred_region
          %499 = dma.done [#allocation9], 2048
        $region92: #{tpu_custom_call.1} parent=71 // pred_fallthru
          _
        // Predicated region
        $region93: #{tpu_custom_call.1} parent=71 // pred_check
          %p500 = pneg %p243
        $region94: #{tpu_custom_call.1} parent=71 // pred_check_branch
          %502 = sbr.rel (%p500) target = $region96
        $region95: #{tpu_custom_call.1} parent=71 // pred_region
          %504 = dma.done [#allocation12], 2048
        $region96: #{tpu_custom_call.1} parent=71 // pred_fallthru
          _
        %s505 = sand.u32 %s41, 1
        %s506 = scalar_lea.sflag [#allocation3], %s505
        %s507 = sand.u32 %s41, 1
        %s508 = smul.addr %s507, 128
        %s509 = scalar_lea.vmem [#allocation2], %s508
        %p510 = pneg %p54
        %p511 = pneg %p51
        %p512 = pneg %p75
        %p513 = pneg %p72
        %p514 = pneg %p96
        %p515 = pneg %p93
        %p516 = pneg %p117
        %p517 = pneg %p114
        %p518 = pneg %p138
        %p519 = pneg %p135
        %p520 = pneg %p159
        %p521 = pneg %p156
        %p522 = pneg %p180
        %p523 = pneg %p177
        %p524 = pneg %p201
        %p525 = pneg %p198
        %p526 = pneg %p222
        %p527 = pneg %p219
        %p528 = pneg %p243
        %p529 = pneg %p240
        %p530 = pneg %p264
        %p531 = pneg %p261
        %p532 = pneg %p285
        %p533 = pneg %p282
        %p534 = pneg %p306
        %p535 = pneg %p303
        %p536 = pneg %p332
        %p537 = pneg %p329
        %s538 = sand.u32 %s319, 1
        %s539 = scalar_lea.sflag [#allocation4], %s538
        %s540 = sand.u32 %s319, 1
        %s541 = smul.addr %s540, 128
        %s542 = scalar_lea.vmem [#allocation13], %s541
        %s543 = smul.u32 4, %s33
        %s544 = smul.u32 4, %s33
        %v546 = vld [vmem:[%s474] sm:$0xff]
        %v547 = vld [vmem:[%s474 + $0x8] sm:$0xff]
        %v548 = vld [vmem:[%s474 + $0x10] sm:$0xff]
        %v549 = vld [vmem:[%s474 + $0x18] sm:$0xff]
        %v550 = vld [vmem:[%s474 + $0x20] sm:$0xff]
        %v551 = vld [vmem:[%s474 + $0x28] sm:$0xff]
        %v552 = vld [vmem:[%s474 + $0x30] sm:$0xff]
        %v553 = vld [vmem:[%s474 + $0x38] sm:$0xff]
        %v554 = vld [vmem:[%s474 + $0x40] sm:$0xff]
        %v555 = vld [vmem:[%s474 + $0x48] sm:$0xff]
        %v556 = vld [vmem:[%s474 + $0x50] sm:$0xff]
        %v557 = vld [vmem:[%s474 + $0x58] sm:$0xff]
        %v558 = vld [vmem:[%s474 + $0x60] sm:$0xff]
        %v559 = vld [vmem:[%s474 + $0x68] sm:$0xff]
        %v560 = vld [vmem:[%s474 + $0x70] sm:$0xff]
        %v561 = vld [vmem:[%s474 + $0x78] sm:$0xff]
        %v562 = vpack.c.bf16 %v547, %v546
        %v563 = vpack.c.bf16 %v549, %v548
        %v564 = vpack.c.bf16 %v551, %v550
        %v565 = vpack.c.bf16 %v553, %v552
        %v566 = vpack.c.bf16 %v555, %v554
        %v567 = vpack.c.bf16 %v557, %v556
        %v568 = vpack.c.bf16 %v559, %v558
        %v569 = vpack.c.bf16 %v561, %v560
        %v570 = vld [vmem:[#allocation5] sm:$0xff]
        %v571 = vld [vmem:[#allocation5 + $0x8] sm:$0xf]
        %v572 = vld [vmem:[#allocation5 + $0xc] sm:$0xff]
        %v573 = vld [vmem:[#allocation5 + $0x14] sm:$0xf]
        %v574 = vld [vmem:[#allocation5 + $0x18] sm:$0xff]
        %v575 = vld [vmem:[#allocation5 + $0x20] sm:$0xf]
        %v576 = vld [vmem:[#allocation5 + $0x24] sm:$0xff]
        %v577 = vld [vmem:[#allocation5 + $0x2c] sm:$0xf]
        %v578 = vld [vmem:[#allocation5 + $0x30] sm:$0xff]
        %v579 = vld [vmem:[#allocation5 + $0x38] sm:$0xf]
        %v580 = vld [vmem:[#allocation5 + $0x3c] sm:$0xff]
        %v581 = vld [vmem:[#allocation5 + $0x44] sm:$0xf]
        %v582 = vld [vmem:[#allocation5 + $0x48] sm:$0xff]
        %v583 = vld [vmem:[#allocation5 + $0x50] sm:$0xf]
        %v584 = vld [vmem:[#allocation5 + $0x54] sm:$0xff]
        %v585 = vld [vmem:[#allocation5 + $0x5c] sm:$0xf]
        %v586 = vld [vmem:[#allocation5 + $0x60] sm:$0xff]
        %v587 = vld [vmem:[#allocation5 + $0x68] sm:$0xf]
        %v588 = vld [vmem:[#allocation5 + $0x6c] sm:$0xff]
        %v589 = vld [vmem:[#allocation5 + $0x74] sm:$0xf]
        %v590 = vld [vmem:[#allocation5 + $0x78] sm:$0xff]
        %v591 = vld [vmem:[#allocation5 + $0x80] sm:$0xf]
        %v592 = vld [vmem:[#allocation5 + $0x84] sm:$0xff]
        %v593 = vld [vmem:[#allocation5 + $0x8c] sm:$0xf]
        %v594 = vld [vmem:[#allocation5 + $0x90] sm:$0xff]
        %v595 = vld [vmem:[#allocation5 + $0x98] sm:$0xf]
        %v596 = vld [vmem:[#allocation5 + $0x9c] sm:$0xff]
        %v597 = vld [vmem:[#allocation5 + $0xa4] sm:$0xf]
        %v598 = vld [vmem:[#allocation5 + $0xa8] sm:$0xff]
        %v599 = vld [vmem:[#allocation5 + $0xb0] sm:$0xf]
        %v600 = vld [vmem:[#allocation5 + $0xb4] sm:$0xff]
        %v601 = vld [vmem:[#allocation5 + $0xbc] sm:$0xf]
        %v602 = vld [vmem:[#allocation7] sm:$0x7]
        %v604 = vperm.slane %v602, 0
        %v605 = vperm.slane %v602, 1
        %v606 = vperm.slane %v602, 2
        %v642 = vunpack.c.l.b16 %v570
        %v643 = vunpack.c.h.b16 %v570
        %v644 = vunpack.c.l.b16 %v571
        %v645 = vunpack.c.l.b16 %v572
        %v646 = vunpack.c.h.b16 %v572
        %v647 = vunpack.c.l.b16 %v573
        %v648 = vunpack.c.l.b16 %v574
        %v649 = vunpack.c.h.b16 %v574
        %v650 = vunpack.c.l.b16 %v575
        %v651 = vunpack.c.l.b16 %v576
        %v652 = vunpack.c.h.b16 %v576
        %v653 = vunpack.c.l.b16 %v577
        %v654 = vunpack.c.l.b16 %v578
        %v655 = vunpack.c.h.b16 %v578
        %v656 = vunpack.c.l.b16 %v579
        %v657 = vunpack.c.l.b16 %v580
        %v658 = vunpack.c.h.b16 %v580
        %v659 = vunpack.c.l.b16 %v581
        %v660 = vunpack.c.l.b16 %v582
        %v661 = vunpack.c.h.b16 %v582
        %v662 = vunpack.c.l.b16 %v583
        %v663 = vunpack.c.l.b16 %v584
        %v664 = vunpack.c.h.b16 %v584
        %v665 = vunpack.c.l.b16 %v585
        %v666 = vunpack.c.l.b16 %v586
        %v667 = vunpack.c.h.b16 %v586
        %v668 = vunpack.c.l.b16 %v587
        %v669 = vunpack.c.l.b16 %v588
        %v670 = vunpack.c.h.b16 %v588
        %v671 = vunpack.c.l.b16 %v589
        %v672 = vunpack.c.l.b16 %v590
        %v673 = vunpack.c.h.b16 %v590
        %v674 = vunpack.c.l.b16 %v591
        %v675 = vunpack.c.l.b16 %v592
        %v676 = vunpack.c.h.b16 %v592
        %v677 = vunpack.c.l.b16 %v593
        %v678 = vunpack.c.l.b16 %v594
        %v679 = vunpack.c.h.b16 %v594
        %v680 = vunpack.c.l.b16 %v595
        %v681 = vunpack.c.l.b16 %v596
        %v682 = vunpack.c.h.b16 %v596
        %v683 = vunpack.c.l.b16 %v597
        %v684 = vunpack.c.l.b16 %v598
        %v685 = vunpack.c.h.b16 %v598
        %v686 = vunpack.c.l.b16 %v599
        %v687 = vunpack.c.l.b16 %v600
        %v688 = vunpack.c.h.b16 %v600
        %v689 = vunpack.c.l.b16 %v601
        %v690 = vpack.c.b16 %v645, %v642
        %v691 = vpack.c.b16 %v646, %v643
        %v692 = vpack.c.b16 %v647, %v644
        %v693 = vpack.c.b16 %v651, %v648
        %v694 = vpack.c.b16 %v652, %v649
        %v695 = vpack.c.b16 %v653, %v650
        %v696 = vpack.c.b16 %v657, %v654
        %v697 = vpack.c.b16 %v658, %v655
        %v698 = vpack.c.b16 %v659, %v656
        %v699 = vpack.c.b16 %v663, %v660
        %v700 = vpack.c.b16 %v664, %v661
        %v701 = vpack.c.b16 %v665, %v662
        %v702 = vpack.c.b16 %v669, %v666
        %v703 = vpack.c.b16 %v670, %v667
        %v704 = vpack.c.b16 %v671, %v668
        %v705 = vpack.c.b16 %v675, %v672
        %v706 = vpack.c.b16 %v676, %v673
        %v707 = vpack.c.b16 %v677, %v674
        %v708 = vpack.c.b16 %v681, %v678
        %v709 = vpack.c.b16 %v682, %v679
        %v710 = vpack.c.b16 %v683, %v680
        %v711 = vpack.c.b16 %v687, %v684
        %v712 = vpack.c.b16 %v688, %v685
        %v713 = vpack.c.b16 %v689, %v686
        %738 = vmatpush.bf16.msra.mxu0 %v711
        %739 = vmatpush.bf16.msra.mxu0 %v708
        %740 = vmatpush.bf16.msra.mxu0 %v705
        %741 = vmatpush.bf16.msra.mxu0 %v702
        %742 = vmatpush.bf16.msra.mxu0 %v699
        %743 = vmatpush.bf16.msra.mxu0 %v696
        %744 = vmatpush.bf16.msra.mxu0 %v693
        %745 = vmatpush.bf16.msra.mxu0 %v690
        %746 = vmatmul.bf16.gmra.mxu0 %v562
        %v747 = vpop.f32.mrf.mxu0
        %v748 = vadd.f32 %v604, %v747
        %v749 = vpop.f32.mrf.mxu0
        %v750 = vadd.f32 %v604, %v749
        %751 = vmatmul.bf16.gmra.mxu0 %v563
        %v752 = vpop.f32.mrf.mxu0
        %v753 = vadd.f32 %v604, %v752
        %v754 = vpop.f32.mrf.mxu0
        %v755 = vadd.f32 %v604, %v754
        %756 = vmatmul.bf16.gmra.mxu0 %v564
        %v757 = vpop.f32.mrf.mxu0
        %v758 = vadd.f32 %v604, %v757
        %v759 = vpop.f32.mrf.mxu0
        %v760 = vadd.f32 %v604, %v759
        %761 = vmatmul.bf16.gmra.mxu0 %v565
        %v762 = vpop.f32.mrf.mxu0
        %v763 = vadd.f32 %v604, %v762
        %v764 = vpop.f32.mrf.mxu0
        %v765 = vadd.f32 %v604, %v764
        %766 = vmatmul.bf16.gmra.mxu0 %v566
        %v767 = vpop.f32.mrf.mxu0
        %v768 = vadd.f32 %v604, %v767
        %v769 = vpop.f32.mrf.mxu0
        %v770 = vadd.f32 %v604, %v769
        %771 = vmatmul.bf16.gmra.mxu0 %v567
        %v772 = vpop.f32.mrf.mxu0
        %v773 = vadd.f32 %v604, %v772
        %v774 = vpop.f32.mrf.mxu0
        %v775 = vadd.f32 %v604, %v774
        %776 = vmatmul.bf16.gmra.mxu0 %v568
        %v777 = vpop.f32.mrf.mxu0
        %v778 = vadd.f32 %v604, %v777
        %v779 = vpop.f32.mrf.mxu0
        %v780 = vadd.f32 %v604, %v779
        %781 = vmatmul.bf16.gmra.mxu0 %v569
        %v782 = vpop.f32.mrf.mxu0
        %v783 = vadd.f32 %v604, %v782
        %v784 = vpop.f32.mrf.mxu0
        %v785 = vadd.f32 %v604, %v784
        %786 = vdwg.mxu0
        %787 = vmatpush.bf16.msra.mxu0 %v712
        %788 = vmatpush.bf16.msra.mxu0 %v709
        %789 = vmatpush.bf16.msra.mxu0 %v706
        %790 = vmatpush.bf16.msra.mxu0 %v703
        %791 = vmatpush.bf16.msra.mxu0 %v700
        %792 = vmatpush.bf16.msra.mxu0 %v697
        %793 = vmatpush.bf16.msra.mxu0 %v694
        %794 = vmatpush.bf16.msra.mxu0 %v691
        %795 = vmatmul.bf16.gmra.mxu0 %v562
        %v796 = vpop.f32.mrf.mxu0
        %v797 = vadd.f32 %v605, %v796
        %v798 = vpop.f32.mrf.mxu0
        %v799 = vadd.f32 %v605, %v798
        %800 = vmatmul.bf16.gmra.mxu0 %v563
        %v801 = vpop.f32.mrf.mxu0
        %v802 = vadd.f32 %v605, %v801
        %v803 = vpop.f32.mrf.mxu0
        %v804 = vadd.f32 %v605, %v803
        %805 = vmatmul.bf16.gmra.mxu0 %v564
        %v806 = vpop.f32.mrf.mxu0
        %v807 = vadd.f32 %v605, %v806
        %v808 = vpop.f32.mrf.mxu0
        %v809 = vadd.f32 %v605, %v808
        %810 = vmatmul.bf16.gmra.mxu0 %v565
        %v811 = vpop.f32.mrf.mxu0
        %v812 = vadd.f32 %v605, %v811
        %v813 = vpop.f32.mrf.mxu0
        %v814 = vadd.f32 %v605, %v813
        %815 = vmatmul.bf16.gmra.mxu0 %v566
        %v816 = vpop.f32.mrf.mxu0
        %v817 = vadd.f32 %v605, %v816
        %v818 = vpop.f32.mrf.mxu0
        %v819 = vadd.f32 %v605, %v818
        %820 = vmatmul.bf16.gmra.mxu0 %v567
        %v821 = vpop.f32.mrf.mxu0
        %v822 = vadd.f32 %v605, %v821
        %v823 = vpop.f32.mrf.mxu0
        %v824 = vadd.f32 %v605, %v823
        %825 = vmatmul.bf16.gmra.mxu0 %v568
        %v826 = vpop.f32.mrf.mxu0
        %v827 = vadd.f32 %v605, %v826
        %v828 = vpop.f32.mrf.mxu0
        %v829 = vadd.f32 %v605, %v828
        %830 = vmatmul.bf16.gmra.mxu0 %v569
        %v831 = vpop.f32.mrf.mxu0
        %v832 = vadd.f32 %v605, %v831
        %v833 = vpop.f32.mrf.mxu0
        %v834 = vadd.f32 %v605, %v833
        %835 = vdwg.mxu0
        %836 = vmatpush.bf16.msra.mxu0 %v713
        %837 = vmatpush.bf16.msra.mxu0 %v710
        %838 = vmatpush.bf16.msra.mxu0 %v707
        %839 = vmatpush.bf16.msra.mxu0 %v704
        %840 = vmatpush.bf16.msra.mxu0 %v701
        %841 = vmatpush.bf16.msra.mxu0 %v698
        %842 = vmatpush.bf16.msra.mxu0 %v695
        %843 = vmatpush.bf16.msra.mxu0 %v692
        %844 = vmatmul.bf16.gmra.mxu0 %v562
        %v845 = vpop.f32.mrf.mxu0
        %v846 = vadd.f32 %v606, %v845
        %v847 = vpop.f32.mrf.mxu0
        %v848 = vadd.f32 %v606, %v847
        %849 = vmatmul.bf16.gmra.mxu0 %v563
        %v850 = vpop.f32.mrf.mxu0
        %v851 = vadd.f32 %v606, %v850
        %v852 = vpop.f32.mrf.mxu0
        %v853 = vadd.f32 %v606, %v852
        %854 = vmatmul.bf16.gmra.mxu0 %v564
        %v855 = vpop.f32.mrf.mxu0
        %v856 = vadd.f32 %v606, %v855
        %v857 = vpop.f32.mrf.mxu0
        %v858 = vadd.f32 %v606, %v857
        %859 = vmatmul.bf16.gmra.mxu0 %v565
        %v860 = vpop.f32.mrf.mxu0
        %v861 = vadd.f32 %v606, %v860
        %v862 = vpop.f32.mrf.mxu0
        %v863 = vadd.f32 %v606, %v862
        %864 = vmatmul.bf16.gmra.mxu0 %v566
        %v865 = vpop.f32.mrf.mxu0
        %v866 = vadd.f32 %v606, %v865
        %v867 = vpop.f32.mrf.mxu0
        %v868 = vadd.f32 %v606, %v867
        %869 = vmatmul.bf16.gmra.mxu0 %v567
        %v870 = vpop.f32.mrf.mxu0
        %v871 = vadd.f32 %v606, %v870
        %v872 = vpop.f32.mrf.mxu0
        %v873 = vadd.f32 %v606, %v872
        %874 = vmatmul.bf16.gmra.mxu0 %v568
        %v875 = vpop.f32.mrf.mxu0
        %v876 = vadd.f32 %v606, %v875
        %v877 = vpop.f32.mrf.mxu0
        %v878 = vadd.f32 %v606, %v877
        %879 = vmatmul.bf16.gmra.mxu0 %v569
        %v880 = vpop.f32.mrf.mxu0
        %v881 = vadd.f32 %v606, %v880
        %v882 = vpop.f32.mrf.mxu0
        %v883 = vadd.f32 %v606, %v882
        %884 = vdwg.mxu0
        %v885 = vpack.c.bf16 %v748, %v748
        %v886 = vpack.c.bf16 %v750, %v750
        %v887 = vpack.c.bf16 %v753, %v753
        %v888 = vpack.c.bf16 %v755, %v755
        %v889 = vpack.c.bf16 %v758, %v758
        %v890 = vpack.c.bf16 %v760, %v760
        %v891 = vpack.c.bf16 %v763, %v763
        %v892 = vpack.c.bf16 %v765, %v765
        %v893 = vpack.c.bf16 %v768, %v768
        %v894 = vpack.c.bf16 %v770, %v770
        %v895 = vpack.c.bf16 %v773, %v773
        %v896 = vpack.c.bf16 %v775, %v775
        %v897 = vpack.c.bf16 %v778, %v778
        %v898 = vpack.c.bf16 %v780, %v780
        %v899 = vpack.c.bf16 %v783, %v783
        %v900 = vpack.c.bf16 %v785, %v785
        %v901 = vpack.c.bf16 %v797, %v797
        %v902 = vpack.c.bf16 %v799, %v799
        %v903 = vpack.c.bf16 %v802, %v802
        %v904 = vpack.c.bf16 %v804, %v804
        %v905 = vpack.c.bf16 %v807, %v807
        %v906 = vpack.c.bf16 %v809, %v809
        %v907 = vpack.c.bf16 %v812, %v812
        %v908 = vpack.c.bf16 %v814, %v814
        %v909 = vpack.c.bf16 %v817, %v817
        %v910 = vpack.c.bf16 %v819, %v819
        %v911 = vpack.c.bf16 %v822, %v822
        %v912 = vpack.c.bf16 %v824, %v824
        %v913 = vpack.c.bf16 %v827, %v827
        %v914 = vpack.c.bf16 %v829, %v829
        %v915 = vpack.c.bf16 %v832, %v832
        %v916 = vpack.c.bf16 %v834, %v834
        %v917 = vpack.c.bf16 %v846, %v846
        %v918 = vpack.c.bf16 %v848, %v848
        %v919 = vpack.c.bf16 %v851, %v851
        %v920 = vpack.c.bf16 %v853, %v853
        %v921 = vpack.c.bf16 %v856, %v856
        %v922 = vpack.c.bf16 %v858, %v858
        %v923 = vpack.c.bf16 %v861, %v861
        %v924 = vpack.c.bf16 %v863, %v863
        %v925 = vpack.c.bf16 %v866, %v866
        %v926 = vpack.c.bf16 %v868, %v868
        %v927 = vpack.c.bf16 %v871, %v871
        %v928 = vpack.c.bf16 %v873, %v873
        %v929 = vpack.c.bf16 %v876, %v876
        %v930 = vpack.c.bf16 %v878, %v878
        %v931 = vpack.c.bf16 %v881, %v881
        %v932 = vpack.c.bf16 %v883, %v883
        %v937 = vunpack.c.l.b16 %v885
        %v938 = vunpack.c.l.b16 %v886
        %v939 = vunpack.c.l.b16 %v887
        %v940 = vunpack.c.l.b16 %v888
        %v941 = vpack.c.b16 %v938, %v937
        %v942 = vpack.c.b16 %v940, %v939
        %v947 = vunpack.c.l.b16 %v901
        %v948 = vunpack.c.l.b16 %v902
        %v949 = vunpack.c.l.b16 %v903
        %v950 = vunpack.c.l.b16 %v904
        %v951 = vpack.c.b16 %v948, %v947
        %v952 = vpack.c.b16 %v950, %v949
        %vm953 = vcmask 261120
        %v955 = vsel %vm953, %v941, 0
        %v958 = vsel %vm953, %v942, 0
        %v961 = vsel %vm953, %v951, 0
        %v964 = vsel %vm953, %v952, 0
        %966 = vmatpush.bf16.xpose.msra.mxu0 0
        %967 = vmatpush.bf16.xpose.msra.mxu0 0
        %968 = vmatpush.bf16.xpose.msra.mxu0 0
        %969 = vmatpush.bf16.xpose.msra.mxu0 0
        %970 = vmatpush.bf16.xpose.msra.mxu0 0
        %971 = vmatpush.bf16.xpose.msra.mxu0 0
        %972 = vmatpush.bf16.xpose.msra.mxu0 %v964
        %973 = vmatpush.bf16.xpose.msra.mxu0 %v961
        %974 = vmatmul.bf16.gmra.mxu0 %v955
        %v975 = vpop.f32.mrf.mxu0
        %v976 = vadd.f32 0.0, %v975
        %v977 = vpop.f32.mrf.mxu0
        %v978 = vadd.f32 0.0, %v977
        %979 = vmatmul.bf16.gmra.mxu0 %v958
        %v980 = vpop.f32.mrf.mxu0
        %v981 = vadd.f32 0.0, %v980
        %v982 = vpop.f32.mrf.mxu0
        %v983 = vadd.f32 0.0, %v982
        %984 = vdwg.mxu0
        %v989 = vunpack.c.l.b16 %v889
        %v990 = vunpack.c.l.b16 %v890
        %v991 = vunpack.c.l.b16 %v891
        %v992 = vunpack.c.l.b16 %v892
        %v993 = vpack.c.b16 %v990, %v989
        %v994 = vpack.c.b16 %v992, %v991
        %v999 = vunpack.c.l.b16 %v905
        %v1000 = vunpack.c.l.b16 %v906
        %v1001 = vunpack.c.l.b16 %v907
        %v1002 = vunpack.c.l.b16 %v908
        %v1003 = vpack.c.b16 %v1000, %v999
        %v1004 = vpack.c.b16 %v1002, %v1001
        %v1006 = vsel %vm953, %v993, 0
        %v1009 = vsel %vm953, %v994, 0
        %v1012 = vsel %vm953, %v1003, 0
        %v1015 = vsel %vm953, %v1004, 0
        %1017 = vmatpush.bf16.xpose.msra.mxu0 0
        %1018 = vmatpush.bf16.xpose.msra.mxu0 0
        %1019 = vmatpush.bf16.xpose.msra.mxu0 0
        %1020 = vmatpush.bf16.xpose.msra.mxu0 0
        %1021 = vmatpush.bf16.xpose.msra.mxu0 0
        %1022 = vmatpush.bf16.xpose.msra.mxu0 0
        %1023 = vmatpush.bf16.xpose.msra.mxu0 %v1015
        %1024 = vmatpush.bf16.xpose.msra.mxu0 %v1012
        %1025 = vmatmul.bf16.gmra.mxu0 %v1006
        %v1026 = vpop.f32.mrf.mxu0
        %v1027 = vadd.f32 0.0, %v1026
        %v1028 = vpop.f32.mrf.mxu0
        %v1029 = vadd.f32 0.0, %v1028
        %1030 = vmatmul.bf16.gmra.mxu0 %v1009
        %v1031 = vpop.f32.mrf.mxu0
        %v1032 = vadd.f32 0.0, %v1031
        %v1033 = vpop.f32.mrf.mxu0
        %v1034 = vadd.f32 0.0, %v1033
        %1035 = vdwg.mxu0
        %v1040 = vunpack.c.l.b16 %v893
        %v1041 = vunpack.c.l.b16 %v894
        %v1042 = vunpack.c.l.b16 %v895
        %v1043 = vunpack.c.l.b16 %v896
        %v1044 = vpack.c.b16 %v1041, %v1040
        %v1045 = vpack.c.b16 %v1043, %v1042
        %v1050 = vunpack.c.l.b16 %v909
        %v1051 = vunpack.c.l.b16 %v910
        %v1052 = vunpack.c.l.b16 %v911
        %v1053 = vunpack.c.l.b16 %v912
        %v1054 = vpack.c.b16 %v1051, %v1050
        %v1055 = vpack.c.b16 %v1053, %v1052
        %v1057 = vsel %vm953, %v1044, 0
        %v1060 = vsel %vm953, %v1045, 0
        %v1063 = vsel %vm953, %v1054, 0
        %v1066 = vsel %vm953, %v1055, 0
        %1068 = vmatpush.bf16.xpose.msra.mxu0 0
        %1069 = vmatpush.bf16.xpose.msra.mxu0 0
        %1070 = vmatpush.bf16.xpose.msra.mxu0 0
        %1071 = vmatpush.bf16.xpose.msra.mxu0 0
        %1072 = vmatpush.bf16.xpose.msra.mxu0 0
        %1073 = vmatpush.bf16.xpose.msra.mxu0 0
        %1074 = vmatpush.bf16.xpose.msra.mxu0 %v1066
        %1075 = vmatpush.bf16.xpose.msra.mxu0 %v1063
        %1076 = vmatmul.bf16.gmra.mxu0 %v1057
        %v1077 = vpop.f32.mrf.mxu0
        %v1078 = vadd.f32 0.0, %v1077
        %v1079 = vpop.f32.mrf.mxu0
        %v1080 = vadd.f32 0.0, %v1079
        %1081 = vmatmul.bf16.gmra.mxu0 %v1060
        %v1082 = vpop.f32.mrf.mxu0
        %v1083 = vadd.f32 0.0, %v1082
        %v1084 = vpop.f32.mrf.mxu0
        %v1085 = vadd.f32 0.0, %v1084
        %1086 = vdwg.mxu0
        %v1091 = vunpack.c.l.b16 %v897
        %v1092 = vunpack.c.l.b16 %v898
        %v1093 = vunpack.c.l.b16 %v899
        %v1094 = vunpack.c.l.b16 %v900
        %v1095 = vpack.c.b16 %v1092, %v1091
        %v1096 = vpack.c.b16 %v1094, %v1093
        %v1101 = vunpack.c.l.b16 %v913
        %v1102 = vunpack.c.l.b16 %v914
        %v1103 = vunpack.c.l.b16 %v915
        %v1104 = vunpack.c.l.b16 %v916
        %v1105 = vpack.c.b16 %v1102, %v1101
        %v1106 = vpack.c.b16 %v1104, %v1103
        %v1108 = vsel %vm953, %v1095, 0
        %v1111 = vsel %vm953, %v1096, 0
        %v1114 = vsel %vm953, %v1105, 0
        %v1117 = vsel %vm953, %v1106, 0
        %1119 = vmatpush.bf16.xpose.msra.mxu0 0
        %1120 = vmatpush.bf16.xpose.msra.mxu0 0
        %1121 = vmatpush.bf16.xpose.msra.mxu0 0
        %1122 = vmatpush.bf16.xpose.msra.mxu0 0
        %1123 = vmatpush.bf16.xpose.msra.mxu0 0
        %1124 = vmatpush.bf16.xpose.msra.mxu0 0
        %1125 = vmatpush.bf16.xpose.msra.mxu0 %v1117
        %1126 = vmatpush.bf16.xpose.msra.mxu0 %v1114
        %1127 = vmatmul.bf16.gmra.mxu0 %v1108
        %v1128 = vpop.f32.mrf.mxu0
        %v1129 = vadd.f32 0.0, %v1128
        %v1130 = vpop.f32.mrf.mxu0
        %v1131 = vadd.f32 0.0, %v1130
        %1132 = vmatmul.bf16.gmra.mxu0 %v1111
        %v1133 = vpop.f32.mrf.mxu0
        %v1134 = vadd.f32 0.0, %v1133
        %v1135 = vpop.f32.mrf.mxu0
        %v1136 = vadd.f32 0.0, %v1135
        %1137 = vdwg.mxu0
        %v1138 = vsel %vm953, %v976, -inf
        %1139 = vmax.xlane.f32.xlu0 %v1138
        %v1140 = vpop.xlane.xlu0 %1139
        %v1141 = vsel %vm953, %v978, -inf
        %1142 = vmax.xlane.f32.xlu0 %v1141
        %v1143 = vpop.xlane.xlu0 %1142
        %v1144 = vsel %vm953, %v981, -inf
        %1145 = vmax.xlane.f32.xlu0 %v1144
        %v1146 = vpop.xlane.xlu0 %1145
        %v1147 = vsel %vm953, %v983, -inf
        %1148 = vmax.xlane.f32.xlu0 %v1147
        %v1149 = vpop.xlane.xlu0 %1148
        %v1150 = vsel %vm953, %v1027, -inf
        %1151 = vmax.xlane.f32.xlu0 %v1150
        %v1152 = vpop.xlane.xlu0 %1151
        %v1153 = vsel %vm953, %v1029, -inf
        %1154 = vmax.xlane.f32.xlu0 %v1153
        %v1155 = vpop.xlane.xlu0 %1154
        %v1156 = vsel %vm953, %v1032, -inf
        %1157 = vmax.xlane.f32.xlu0 %v1156
        %v1158 = vpop.xlane.xlu0 %1157
        %v1159 = vsel %vm953, %v1034, -inf
        %1160 = vmax.xlane.f32.xlu0 %v1159
        %v1161 = vpop.xlane.xlu0 %1160
        %v1162 = vsel %vm953, %v1078, -inf
        %1163 = vmax.xlane.f32.xlu0 %v1162
        %v1164 = vpop.xlane.xlu0 %1163
        %v1165 = vsel %vm953, %v1080, -inf
        %1166 = vmax.xlane.f32.xlu0 %v1165
        %v1167 = vpop.xlane.xlu0 %1166
        %v1168 = vsel %vm953, %v1083, -inf
        %1169 = vmax.xlane.f32.xlu0 %v1168
        %v1170 = vpop.xlane.xlu0 %1169
        %v1171 = vsel %vm953, %v1085, -inf
        %1172 = vmax.xlane.f32.xlu0 %v1171
        %v1173 = vpop.xlane.xlu0 %1172
        %v1174 = vsel %vm953, %v1129, -inf
        %1175 = vmax.xlane.f32.xlu0 %v1174
        %v1176 = vpop.xlane.xlu0 %1175
        %v1177 = vsel %vm953, %v1131, -inf
        %1178 = vmax.xlane.f32.xlu0 %v1177
        %v1179 = vpop.xlane.xlu0 %1178
        %v1180 = vsel %vm953, %v1134, -inf
        %1181 = vmax.xlane.f32.xlu0 %v1180
        %v1182 = vpop.xlane.xlu0 %1181
        %v1183 = vsel %vm953, %v1136, -inf
        %1184 = vmax.xlane.f32.xlu0 %v1183
        %v1185 = vpop.xlane.xlu0 %1184
        %v1186 = vsub.f32 %v976, %v1140
        %v1187 = vsub.f32 %v978, %v1143
        %v1188 = vsub.f32 %v981, %v1146
        %v1189 = vsub.f32 %v983, %v1149
        %v1190 = vsub.f32 %v1027, %v1152
        %v1191 = vsub.f32 %v1029, %v1155
        %v1192 = vsub.f32 %v1032, %v1158
        %v1193 = vsub.f32 %v1034, %v1161
        %v1194 = vsub.f32 %v1078, %v1164
        %v1195 = vsub.f32 %v1080, %v1167
        %v1196 = vsub.f32 %v1083, %v1170
        %v1197 = vsub.f32 %v1085, %v1173
        %v1198 = vsub.f32 %v1129, %v1176
        %v1199 = vsub.f32 %v1131, %v1179
        %v1200 = vsub.f32 %v1134, %v1182
        %v1201 = vsub.f32 %v1136, %v1185
        %v1202 = vmul.f32 %v1186, 1.442695
        %v1203 = vpow.pop %v1202
        %v1204 = vmul.f32 %v1187, 1.442695
        %v1205 = vpow.pop %v1204
        %v1206 = vmul.f32 %v1188, 1.442695
        %v1207 = vpow.pop %v1206
        %v1208 = vmul.f32 %v1189, 1.442695
        %v1209 = vpow.pop %v1208
        %v1210 = vmul.f32 %v1190, 1.442695
        %v1211 = vpow.pop %v1210
        %v1212 = vmul.f32 %v1191, 1.442695
        %v1213 = vpow.pop %v1212
        %v1214 = vmul.f32 %v1192, 1.442695
        %v1215 = vpow.pop %v1214
        %v1216 = vmul.f32 %v1193, 1.442695
        %v1217 = vpow.pop %v1216
        %v1218 = vmul.f32 %v1194, 1.442695
        %v1219 = vpow.pop %v1218
        %v1220 = vmul.f32 %v1195, 1.442695
        %v1221 = vpow.pop %v1220
        %v1222 = vmul.f32 %v1196, 1.442695
        %v1223 = vpow.pop %v1222
        %v1224 = vmul.f32 %v1197, 1.442695
        %v1225 = vpow.pop %v1224
        %v1226 = vmul.f32 %v1198, 1.442695
        %v1227 = vpow.pop %v1226
        %v1228 = vmul.f32 %v1199, 1.442695
        %v1229 = vpow.pop %v1228
        %v1230 = vmul.f32 %v1200, 1.442695
        %v1231 = vpow.pop %v1230
        %v1232 = vmul.f32 %v1201, 1.442695
        %v1233 = vpow.pop %v1232
        %v1234 = vsel %vm953, %v1203, 0.0
        %1235 = vadd.xlane.f32.xlu0 %v1234
        %v1236 = vpop.xlane.xlu0 %1235
        %v1237 = vsel %vm953, %v1205, 0.0
        %1238 = vadd.xlane.f32.xlu0 %v1237
        %v1239 = vpop.xlane.xlu0 %1238
        %v1240 = vsel %vm953, %v1207, 0.0
        %1241 = vadd.xlane.f32.xlu0 %v1240
        %v1242 = vpop.xlane.xlu0 %1241
        %v1243 = vsel %vm953, %v1209, 0.0
        %1244 = vadd.xlane.f32.xlu0 %v1243
        %v1245 = vpop.xlane.xlu0 %1244
        %v1246 = vsel %vm953, %v1211, 0.0
        %1247 = vadd.xlane.f32.xlu0 %v1246
        %v1248 = vpop.xlane.xlu0 %1247
        %v1249 = vsel %vm953, %v1213, 0.0
        %1250 = vadd.xlane.f32.xlu0 %v1249
        %v1251 = vpop.xlane.xlu0 %1250
        %v1252 = vsel %vm953, %v1215, 0.0
        %1253 = vadd.xlane.f32.xlu0 %v1252
        %v1254 = vpop.xlane.xlu0 %1253
        %v1255 = vsel %vm953, %v1217, 0.0
        %1256 = vadd.xlane.f32.xlu0 %v1255
        %v1257 = vpop.xlane.xlu0 %1256
        %v1258 = vsel %vm953, %v1219, 0.0
        %1259 = vadd.xlane.f32.xlu0 %v1258
        %v1260 = vpop.xlane.xlu0 %1259
        %v1261 = vsel %vm953, %v1221, 0.0
        %1262 = vadd.xlane.f32.xlu0 %v1261
        %v1263 = vpop.xlane.xlu0 %1262
        %v1264 = vsel %vm953, %v1223, 0.0
        %1265 = vadd.xlane.f32.xlu0 %v1264
        %v1266 = vpop.xlane.xlu0 %1265
        %v1267 = vsel %vm953, %v1225, 0.0
        %1268 = vadd.xlane.f32.xlu0 %v1267
        %v1269 = vpop.xlane.xlu0 %1268
        %v1270 = vsel %vm953, %v1227, 0.0
        %1271 = vadd.xlane.f32.xlu0 %v1270
        %v1272 = vpop.xlane.xlu0 %1271
        %v1273 = vsel %vm953, %v1229, 0.0
        %1274 = vadd.xlane.f32.xlu0 %v1273
        %v1275 = vpop.xlane.xlu0 %1274
        %v1276 = vsel %vm953, %v1231, 0.0
        %1277 = vadd.xlane.f32.xlu0 %v1276
        %v1278 = vpop.xlane.xlu0 %1277
        %v1279 = vsel %vm953, %v1233, 0.0
        %1280 = vadd.xlane.f32.xlu0 %v1279
        %v1281 = vpop.xlane.xlu0 %1280
        %v1282 = vrcp.pop %v1236
        %v1283 = vrcp.pop %v1239
        %v1284 = vrcp.pop %v1242
        %v1285 = vrcp.pop %v1245
        %v1286 = vrcp.pop %v1248
        %v1287 = vrcp.pop %v1251
        %v1288 = vrcp.pop %v1254
        %v1289 = vrcp.pop %v1257
        %v1290 = vrcp.pop %v1260
        %v1291 = vrcp.pop %v1263
        %v1292 = vrcp.pop %v1266
        %v1293 = vrcp.pop %v1269
        %v1294 = vrcp.pop %v1272
        %v1295 = vrcp.pop %v1275
        %v1296 = vrcp.pop %v1278
        %v1297 = vrcp.pop %v1281
        %v1298 = vmul.f32 %v1203, %v1282
        %v1299 = vmul.f32 %v1205, %v1283
        %v1300 = vmul.f32 %v1207, %v1284
        %v1301 = vmul.f32 %v1209, %v1285
        %v1302 = vmul.f32 %v1211, %v1286
        %v1303 = vmul.f32 %v1213, %v1287
        %v1304 = vmul.f32 %v1215, %v1288
        %v1305 = vmul.f32 %v1217, %v1289
        %v1306 = vmul.f32 %v1219, %v1290
        %v1307 = vmul.f32 %v1221, %v1291
        %v1308 = vmul.f32 %v1223, %v1292
        %v1309 = vmul.f32 %v1225, %v1293
        %v1310 = vmul.f32 %v1227, %v1294
        %v1311 = vmul.f32 %v1229, %v1295
        %v1312 = vmul.f32 %v1231, %v1296
        %v1313 = vmul.f32 %v1233, %v1297
        %v1314 = vpack.c.bf16 %v1298, %v1298
        %v1315 = vpack.c.bf16 %v1299, %v1299
        %v1316 = vpack.c.bf16 %v1300, %v1300
        %v1317 = vpack.c.bf16 %v1301, %v1301
        %v1318 = vpack.c.bf16 %v1302, %v1302
        %v1319 = vpack.c.bf16 %v1303, %v1303
        %v1320 = vpack.c.bf16 %v1304, %v1304
        %v1321 = vpack.c.bf16 %v1305, %v1305
        %v1322 = vpack.c.bf16 %v1306, %v1306
        %v1323 = vpack.c.bf16 %v1307, %v1307
        %v1324 = vpack.c.bf16 %v1308, %v1308
        %v1325 = vpack.c.bf16 %v1309, %v1309
        %v1326 = vpack.c.bf16 %v1310, %v1310
        %v1327 = vpack.c.bf16 %v1311, %v1311
        %v1328 = vpack.c.bf16 %v1312, %v1312
        %v1329 = vpack.c.bf16 %v1313, %v1313
        %v1334 = vunpack.c.l.b16 %v1314
        %v1335 = vunpack.c.l.b16 %v1315
        %v1336 = vunpack.c.l.b16 %v1316
        %v1337 = vunpack.c.l.b16 %v1317
        %v1338 = vpack.c.b16 %v1335, %v1334
        %v1339 = vpack.c.b16 %v1337, %v1336
        %v1344 = vunpack.c.l.b16 %v917
        %v1345 = vunpack.c.l.b16 %v918
        %v1346 = vunpack.c.l.b16 %v919
        %v1347 = vunpack.c.l.b16 %v920
        %v1348 = vpack.c.b16 %v1345, %v1344
        %v1349 = vpack.c.b16 %v1347, %v1346
        %v1353 = vsel %vm953, %v1338, 0
        %v1356 = vsel %vm953, %v1339, 0
        %1358 = vmatpush.bf16.msra.mxu0 0
        %1359 = vmatpush.bf16.msra.mxu0 0
        %1360 = vmatpush.bf16.msra.mxu0 0
        %1361 = vmatpush.bf16.msra.mxu0 0
        %1362 = vmatpush.bf16.msra.mxu0 0
        %1363 = vmatpush.bf16.msra.mxu0 0
        %1364 = vmatpush.bf16.msra.mxu0 %v1349
        %1365 = vmatpush.bf16.msra.mxu0 %v1348
        %1366 = vmatmul.bf16.gmra.mxu0 %v1353
        %v1367 = vpop.f32.mrf.mxu0
        %v1368 = vadd.f32 0.0, %v1367
        %v1369 = vpop.f32.mrf.mxu0
        %v1370 = vadd.f32 0.0, %v1369
        %1371 = vmatmul.bf16.gmra.mxu0 %v1356
        %v1372 = vpop.f32.mrf.mxu0
        %v1373 = vadd.f32 0.0, %v1372
        %v1374 = vpop.f32.mrf.mxu0
        %v1375 = vadd.f32 0.0, %v1374
        %1376 = vdwg.mxu0
        %v1381 = vunpack.c.l.b16 %v1318
        %v1382 = vunpack.c.l.b16 %v1319
        %v1383 = vunpack.c.l.b16 %v1320
        %v1384 = vunpack.c.l.b16 %v1321
        %v1385 = vpack.c.b16 %v1382, %v1381
        %v1386 = vpack.c.b16 %v1384, %v1383
        %v1391 = vunpack.c.l.b16 %v921
        %v1392 = vunpack.c.l.b16 %v922
        %v1393 = vunpack.c.l.b16 %v923
        %v1394 = vunpack.c.l.b16 %v924
        %v1395 = vpack.c.b16 %v1392, %v1391
        %v1396 = vpack.c.b16 %v1394, %v1393
        %v1400 = vsel %vm953, %v1385, 0
        %v1403 = vsel %vm953, %v1386, 0
        %1405 = vmatpush.bf16.msra.mxu0 0
        %1406 = vmatpush.bf16.msra.mxu0 0
        %1407 = vmatpush.bf16.msra.mxu0 0
        %1408 = vmatpush.bf16.msra.mxu0 0
        %1409 = vmatpush.bf16.msra.mxu0 0
        %1410 = vmatpush.bf16.msra.mxu0 0
        %1411 = vmatpush.bf16.msra.mxu0 %v1396
        %1412 = vmatpush.bf16.msra.mxu0 %v1395
        %1413 = vmatmul.bf16.gmra.mxu0 %v1400
        %v1414 = vpop.f32.mrf.mxu0
        %v1415 = vadd.f32 0.0, %v1414
        %v1416 = vpop.f32.mrf.mxu0
        %v1417 = vadd.f32 0.0, %v1416
        %1418 = vmatmul.bf16.gmra.mxu0 %v1403
        %v1419 = vpop.f32.mrf.mxu0
        %v1420 = vadd.f32 0.0, %v1419
        %v1421 = vpop.f32.mrf.mxu0
        %v1422 = vadd.f32 0.0, %v1421
        %1423 = vdwg.mxu0
        %v1428 = vunpack.c.l.b16 %v1322
        %v1429 = vunpack.c.l.b16 %v1323
        %v1430 = vunpack.c.l.b16 %v1324
        %v1431 = vunpack.c.l.b16 %v1325
        %v1432 = vpack.c.b16 %v1429, %v1428
        %v1433 = vpack.c.b16 %v1431, %v1430
        %v1438 = vunpack.c.l.b16 %v925
        %v1439 = vunpack.c.l.b16 %v926
        %v1440 = vunpack.c.l.b16 %v927
        %v1441 = vunpack.c.l.b16 %v928
        %v1442 = vpack.c.b16 %v1439, %v1438
        %v1443 = vpack.c.b16 %v1441, %v1440
        %v1447 = vsel %vm953, %v1432, 0
        %v1450 = vsel %vm953, %v1433, 0
        %1452 = vmatpush.bf16.msra.mxu0 0
        %1453 = vmatpush.bf16.msra.mxu0 0
        %1454 = vmatpush.bf16.msra.mxu0 0
        %1455 = vmatpush.bf16.msra.mxu0 0
        %1456 = vmatpush.bf16.msra.mxu0 0
        %1457 = vmatpush.bf16.msra.mxu0 0
        %1458 = vmatpush.bf16.msra.mxu0 %v1443
        %1459 = vmatpush.bf16.msra.mxu0 %v1442
        %1460 = vmatmul.bf16.gmra.mxu0 %v1447
        %v1461 = vpop.f32.mrf.mxu0
        %v1462 = vadd.f32 0.0, %v1461
        %v1463 = vpop.f32.mrf.mxu0
        %v1464 = vadd.f32 0.0, %v1463
        %1465 = vmatmul.bf16.gmra.mxu0 %v1450
        %v1466 = vpop.f32.mrf.mxu0
        %v1467 = vadd.f32 0.0, %v1466
        %v1468 = vpop.f32.mrf.mxu0
        %v1469 = vadd.f32 0.0, %v1468
        %1470 = vdwg.mxu0
        %v1475 = vunpack.c.l.b16 %v1326
        %v1476 = vunpack.c.l.b16 %v1327
        %v1477 = vunpack.c.l.b16 %v1328
        %v1478 = vunpack.c.l.b16 %v1329
        %v1479 = vpack.c.b16 %v1476, %v1475
        %v1480 = vpack.c.b16 %v1478, %v1477
        %v1485 = vunpack.c.l.b16 %v929
        %v1486 = vunpack.c.l.b16 %v930
        %v1487 = vunpack.c.l.b16 %v931
        %v1488 = vunpack.c.l.b16 %v932
        %v1489 = vpack.c.b16 %v1486, %v1485
        %v1490 = vpack.c.b16 %v1488, %v1487
        %v1494 = vsel %vm953, %v1479, 0
        %v1497 = vsel %vm953, %v1480, 0
        %1499 = vmatpush.bf16.msra.mxu0 0
        %1500 = vmatpush.bf16.msra.mxu0 0
        %1501 = vmatpush.bf16.msra.mxu0 0
        %1502 = vmatpush.bf16.msra.mxu0 0
        %1503 = vmatpush.bf16.msra.mxu0 0
        %1504 = vmatpush.bf16.msra.mxu0 0
        %1505 = vmatpush.bf16.msra.mxu0 %v1490
        %1506 = vmatpush.bf16.msra.mxu0 %v1489
        %1507 = vmatmul.bf16.gmra.mxu0 %v1494
        %v1508 = vpop.f32.mrf.mxu0
        %v1509 = vadd.f32 0.0, %v1508
        %v1510 = vpop.f32.mrf.mxu0
        %v1511 = vadd.f32 0.0, %v1510
        %1512 = vmatmul.bf16.gmra.mxu0 %v1497
        %v1513 = vpop.f32.mrf.mxu0
        %v1514 = vadd.f32 0.0, %v1513
        %v1515 = vpop.f32.mrf.mxu0
        %v1516 = vadd.f32 0.0, %v1515
        %1517 = vdwg.mxu0
        %1518 = vrot.lane.b32.xlu0 %v941, 96
        %v1519 = vpop.permute.xlu0 %1518
        %1520 = vrot.lane.b32.xlu0 %v942, 96
        %v1521 = vpop.permute.xlu0 %1520
        %1522 = vrot.lane.b32.xlu0 %v951, 96
        %v1523 = vpop.permute.xlu0 %1522
        %1524 = vrot.lane.b32.xlu0 %v952, 96
        %v1525 = vpop.permute.xlu0 %1524
        %v1527 = vsel %vm953, %v1519, 0
        %v1530 = vsel %vm953, %v1521, 0
        %v1533 = vsel %vm953, %v1523, 0
        %v1536 = vsel %vm953, %v1525, 0
        %1538 = vmatpush.bf16.xpose.msra.mxu0 0
        %1539 = vmatpush.bf16.xpose.msra.mxu0 0
        %1540 = vmatpush.bf16.xpose.msra.mxu0 0
        %1541 = vmatpush.bf16.xpose.msra.mxu0 0
        %1542 = vmatpush.bf16.xpose.msra.mxu0 0
        %1543 = vmatpush.bf16.xpose.msra.mxu0 0
        %1544 = vmatpush.bf16.xpose.msra.mxu0 %v1536
        %1545 = vmatpush.bf16.xpose.msra.mxu0 %v1533
        %1546 = vmatmul.bf16.gmra.mxu0 %v1527
        %v1547 = vpop.f32.mrf.mxu0
        %v1548 = vadd.f32 0.0, %v1547
        %v1549 = vpop.f32.mrf.mxu0
        %v1550 = vadd.f32 0.0, %v1549
        %1551 = vmatmul.bf16.gmra.mxu0 %v1530
        %v1552 = vpop.f32.mrf.mxu0
        %v1553 = vadd.f32 0.0, %v1552
        %v1554 = vpop.f32.mrf.mxu0
        %v1555 = vadd.f32 0.0, %v1554
        %1556 = vdwg.mxu0
        %1557 = vrot.lane.b32.xlu0 %v993, 96
        %v1558 = vpop.permute.xlu0 %1557
        %1559 = vrot.lane.b32.xlu0 %v994, 96
        %v1560 = vpop.permute.xlu0 %1559
        %1561 = vrot.lane.b32.xlu0 %v1003, 96
        %v1562 = vpop.permute.xlu0 %1561
        %1563 = vrot.lane.b32.xlu0 %v1004, 96
        %v1564 = vpop.permute.xlu0 %1563
        %v1566 = vsel %vm953, %v1558, 0
        %v1569 = vsel %vm953, %v1560, 0
        %v1572 = vsel %vm953, %v1562, 0
        %v1575 = vsel %vm953, %v1564, 0
        %1577 = vmatpush.bf16.xpose.msra.mxu0 0
        %1578 = vmatpush.bf16.xpose.msra.mxu0 0
        %1579 = vmatpush.bf16.xpose.msra.mxu0 0
        %1580 = vmatpush.bf16.xpose.msra.mxu0 0
        %1581 = vmatpush.bf16.xpose.msra.mxu0 0
        %1582 = vmatpush.bf16.xpose.msra.mxu0 0
        %1583 = vmatpush.bf16.xpose.msra.mxu0 %v1575
        %1584 = vmatpush.bf16.xpose.msra.mxu0 %v1572
        %1585 = vmatmul.bf16.gmra.mxu0 %v1566
        %v1586 = vpop.f32.mrf.mxu0
        %v1587 = vadd.f32 0.0, %v1586
        %v1588 = vpop.f32.mrf.mxu0
        %v1589 = vadd.f32 0.0, %v1588
        %1590 = vmatmul.bf16.gmra.mxu0 %v1569
        %v1591 = vpop.f32.mrf.mxu0
        %v1592 = vadd.f32 0.0, %v1591
        %v1593 = vpop.f32.mrf.mxu0
        %v1594 = vadd.f32 0.0, %v1593
        %1595 = vdwg.mxu0
        %1596 = vrot.lane.b32.xlu0 %v1044, 96
        %v1597 = vpop.permute.xlu0 %1596
        %1598 = vrot.lane.b32.xlu0 %v1045, 96
        %v1599 = vpop.permute.xlu0 %1598
        %1600 = vrot.lane.b32.xlu0 %v1054, 96
        %v1601 = vpop.permute.xlu0 %1600
        %1602 = vrot.lane.b32.xlu0 %v1055, 96
        %v1603 = vpop.permute.xlu0 %1602
        %v1605 = vsel %vm953, %v1597, 0
        %v1608 = vsel %vm953, %v1599, 0
        %v1611 = vsel %vm953, %v1601, 0
        %v1614 = vsel %vm953, %v1603, 0
        %1616 = vmatpush.bf16.xpose.msra.mxu0 0
        %1617 = vmatpush.bf16.xpose.msra.mxu0 0
        %1618 = vmatpush.bf16.xpose.msra.mxu0 0
        %1619 = vmatpush.bf16.xpose.msra.mxu0 0
        %1620 = vmatpush.bf16.xpose.msra.mxu0 0
        %1621 = vmatpush.bf16.xpose.msra.mxu0 0
        %1622 = vmatpush.bf16.xpose.msra.mxu0 %v1614
        %1623 = vmatpush.bf16.xpose.msra.mxu0 %v1611
        %1624 = vmatmul.bf16.gmra.mxu0 %v1605
        %v1625 = vpop.f32.mrf.mxu0
        %v1626 = vadd.f32 0.0, %v1625
        %v1627 = vpop.f32.mrf.mxu0
        %v1628 = vadd.f32 0.0, %v1627
        %1629 = vmatmul.bf16.gmra.mxu0 %v1608
        %v1630 = vpop.f32.mrf.mxu0
        %v1631 = vadd.f32 0.0, %v1630
        %v1632 = vpop.f32.mrf.mxu0
        %v1633 = vadd.f32 0.0, %v1632
        %1634 = vdwg.mxu0
        %1635 = vrot.lane.b32.xlu0 %v1095, 96
        %v1636 = vpop.permute.xlu0 %1635
        %1637 = vrot.lane.b32.xlu0 %v1096, 96
        %v1638 = vpop.permute.xlu0 %1637
        %1639 = vrot.lane.b32.xlu0 %v1105, 96
        %v1640 = vpop.permute.xlu0 %1639
        %1641 = vrot.lane.b32.xlu0 %v1106, 96
        %v1642 = vpop.permute.xlu0 %1641
        %v1644 = vsel %vm953, %v1636, 0
        %v1647 = vsel %vm953, %v1638, 0
        %v1650 = vsel %vm953, %v1640, 0
        %v1653 = vsel %vm953, %v1642, 0
        %1655 = vmatpush.bf16.xpose.msra.mxu0 0
        %1656 = vmatpush.bf16.xpose.msra.mxu0 0
        %1657 = vmatpush.bf16.xpose.msra.mxu0 0
        %1658 = vmatpush.bf16.xpose.msra.mxu0 0
        %1659 = vmatpush.bf16.xpose.msra.mxu0 0
        %1660 = vmatpush.bf16.xpose.msra.mxu0 0
        %1661 = vmatpush.bf16.xpose.msra.mxu0 %v1653
        %1662 = vmatpush.bf16.xpose.msra.mxu0 %v1650
        %1663 = vmatmul.bf16.gmra.mxu0 %v1644
        %v1664 = vpop.f32.mrf.mxu0
        %v1665 = vadd.f32 0.0, %v1664
        %v1666 = vpop.f32.mrf.mxu0
        %v1667 = vadd.f32 0.0, %v1666
        %1668 = vmatmul.bf16.gmra.mxu0 %v1647
        %v1669 = vpop.f32.mrf.mxu0
        %v1670 = vadd.f32 0.0, %v1669
        %v1671 = vpop.f32.mrf.mxu0
        %v1672 = vadd.f32 0.0, %v1671
        %1673 = vdwg.mxu0
        %v1674 = vsel %vm953, %v1548, -inf
        %1675 = vmax.xlane.f32.xlu0 %v1674
        %v1676 = vpop.xlane.xlu0 %1675
        %v1677 = vsel %vm953, %v1550, -inf
        %1678 = vmax.xlane.f32.xlu0 %v1677
        %v1679 = vpop.xlane.xlu0 %1678
        %v1680 = vsel %vm953, %v1553, -inf
        %1681 = vmax.xlane.f32.xlu0 %v1680
        %v1682 = vpop.xlane.xlu0 %1681
        %v1683 = vsel %vm953, %v1555, -inf
        %1684 = vmax.xlane.f32.xlu0 %v1683
        %v1685 = vpop.xlane.xlu0 %1684
        %v1686 = vsel %vm953, %v1587, -inf
        %1687 = vmax.xlane.f32.xlu0 %v1686
        %v1688 = vpop.xlane.xlu0 %1687
        %v1689 = vsel %vm953, %v1589, -inf
        %1690 = vmax.xlane.f32.xlu0 %v1689
        %v1691 = vpop.xlane.xlu0 %1690
        %v1692 = vsel %vm953, %v1592, -inf
        %1693 = vmax.xlane.f32.xlu0 %v1692
        %v1694 = vpop.xlane.xlu0 %1693
        %v1695 = vsel %vm953, %v1594, -inf
        %1696 = vmax.xlane.f32.xlu0 %v1695
        %v1697 = vpop.xlane.xlu0 %1696
        %v1698 = vsel %vm953, %v1626, -inf
        %1699 = vmax.xlane.f32.xlu0 %v1698
        %v1700 = vpop.xlane.xlu0 %1699
        %v1701 = vsel %vm953, %v1628, -inf
        %1702 = vmax.xlane.f32.xlu0 %v1701
        %v1703 = vpop.xlane.xlu0 %1702
        %v1704 = vsel %vm953, %v1631, -inf
        %1705 = vmax.xlane.f32.xlu0 %v1704
        %v1706 = vpop.xlane.xlu0 %1705
        %v1707 = vsel %vm953, %v1633, -inf
        %1708 = vmax.xlane.f32.xlu0 %v1707
        %v1709 = vpop.xlane.xlu0 %1708
        %v1710 = vsel %vm953, %v1665, -inf
        %1711 = vmax.xlane.f32.xlu0 %v1710
        %v1712 = vpop.xlane.xlu0 %1711
        %v1713 = vsel %vm953, %v1667, -inf
        %1714 = vmax.xlane.f32.xlu0 %v1713
        %v1715 = vpop.xlane.xlu0 %1714
        %v1716 = vsel %vm953, %v1670, -inf
        %1717 = vmax.xlane.f32.xlu0 %v1716
        %v1718 = vpop.xlane.xlu0 %1717
        %v1719 = vsel %vm953, %v1672, -inf
        %1720 = vmax.xlane.f32.xlu0 %v1719
        %v1721 = vpop.xlane.xlu0 %1720
        %v1722 = vsub.f32 %v1548, %v1676
        %v1723 = vsub.f32 %v1550, %v1679
        %v1724 = vsub.f32 %v1553, %v1682
        %v1725 = vsub.f32 %v1555, %v1685
        %v1726 = vsub.f32 %v1587, %v1688
        %v1727 = vsub.f32 %v1589, %v1691
        %v1728 = vsub.f32 %v1592, %v1694
        %v1729 = vsub.f32 %v1594, %v1697
        %v1730 = vsub.f32 %v1626, %v1700
        %v1731 = vsub.f32 %v1628, %v1703
        %v1732 = vsub.f32 %v1631, %v1706
        %v1733 = vsub.f32 %v1633, %v1709
        %v1734 = vsub.f32 %v1665, %v1712
        %v1735 = vsub.f32 %v1667, %v1715
        %v1736 = vsub.f32 %v1670, %v1718
        %v1737 = vsub.f32 %v1672, %v1721
        %v1738 = vmul.f32 %v1722, 1.442695
        %v1739 = vpow.pop %v1738
        %v1740 = vmul.f32 %v1723, 1.442695
        %v1741 = vpow.pop %v1740
        %v1742 = vmul.f32 %v1724, 1.442695
        %v1743 = vpow.pop %v1742
        %v1744 = vmul.f32 %v1725, 1.442695
        %v1745 = vpow.pop %v1744
        %v1746 = vmul.f32 %v1726, 1.442695
        %v1747 = vpow.pop %v1746
        %v1748 = vmul.f32 %v1727, 1.442695
        %v1749 = vpow.pop %v1748
        %v1750 = vmul.f32 %v1728, 1.442695
        %v1751 = vpow.pop %v1750
        %v1752 = vmul.f32 %v1729, 1.442695
        %v1753 = vpow.pop %v1752
        %v1754 = vmul.f32 %v1730, 1.442695
        %v1755 = vpow.pop %v1754
        %v1756 = vmul.f32 %v1731, 1.442695
        %v1757 = vpow.pop %v1756
        %v1758 = vmul.f32 %v1732, 1.442695
        %v1759 = vpow.pop %v1758
        %v1760 = vmul.f32 %v1733, 1.442695
        %v1761 = vpow.pop %v1760
        %v1762 = vmul.f32 %v1734, 1.442695
        %v1763 = vpow.pop %v1762
        %v1764 = vmul.f32 %v1735, 1.442695
        %v1765 = vpow.pop %v1764
        %v1766 = vmul.f32 %v1736, 1.442695
        %v1767 = vpow.pop %v1766
        %v1768 = vmul.f32 %v1737, 1.442695
        %v1769 = vpow.pop %v1768
        %v1770 = vsel %vm953, %v1739, 0.0
        %1771 = vadd.xlane.f32.xlu0 %v1770
        %v1772 = vpop.xlane.xlu0 %1771
        %v1773 = vsel %vm953, %v1741, 0.0
        %1774 = vadd.xlane.f32.xlu0 %v1773
        %v1775 = vpop.xlane.xlu0 %1774
        %v1776 = vsel %vm953, %v1743, 0.0
        %1777 = vadd.xlane.f32.xlu0 %v1776
        %v1778 = vpop.xlane.xlu0 %1777
        %v1779 = vsel %vm953, %v1745, 0.0
        %1780 = vadd.xlane.f32.xlu0 %v1779
        %v1781 = vpop.xlane.xlu0 %1780
        %v1782 = vsel %vm953, %v1747, 0.0
        %1783 = vadd.xlane.f32.xlu0 %v1782
        %v1784 = vpop.xlane.xlu0 %1783
        %v1785 = vsel %vm953, %v1749, 0.0
        %1786 = vadd.xlane.f32.xlu0 %v1785
        %v1787 = vpop.xlane.xlu0 %1786
        %v1788 = vsel %vm953, %v1751, 0.0
        %1789 = vadd.xlane.f32.xlu0 %v1788
        %v1790 = vpop.xlane.xlu0 %1789
        %v1791 = vsel %vm953, %v1753, 0.0
        %1792 = vadd.xlane.f32.xlu0 %v1791
        %v1793 = vpop.xlane.xlu0 %1792
        %v1794 = vsel %vm953, %v1755, 0.0
        %1795 = vadd.xlane.f32.xlu0 %v1794
        %v1796 = vpop.xlane.xlu0 %1795
        %v1797 = vsel %vm953, %v1757, 0.0
        %1798 = vadd.xlane.f32.xlu0 %v1797
        %v1799 = vpop.xlane.xlu0 %1798
        %v1800 = vsel %vm953, %v1759, 0.0
        %1801 = vadd.xlane.f32.xlu0 %v1800
        %v1802 = vpop.xlane.xlu0 %1801
        %v1803 = vsel %vm953, %v1761, 0.0
        %1804 = vadd.xlane.f32.xlu0 %v1803
        %v1805 = vpop.xlane.xlu0 %1804
        %v1806 = vsel %vm953, %v1763, 0.0
        %1807 = vadd.xlane.f32.xlu0 %v1806
        %v1808 = vpop.xlane.xlu0 %1807
        %v1809 = vsel %vm953, %v1765, 0.0
        %1810 = vadd.xlane.f32.xlu0 %v1809
        %v1811 = vpop.xlane.xlu0 %1810
        %v1812 = vsel %vm953, %v1767, 0.0
        %1813 = vadd.xlane.f32.xlu0 %v1812
        %v1814 = vpop.xlane.xlu0 %1813
        %v1815 = vsel %vm953, %v1769, 0.0
        %1816 = vadd.xlane.f32.xlu0 %v1815
        %v1817 = vpop.xlane.xlu0 %1816
        %v1818 = vrcp.pop %v1772
        %v1819 = vrcp.pop %v1775
        %v1820 = vrcp.pop %v1778
        %v1821 = vrcp.pop %v1781
        %v1822 = vrcp.pop %v1784
        %v1823 = vrcp.pop %v1787
        %v1824 = vrcp.pop %v1790
        %v1825 = vrcp.pop %v1793
        %v1826 = vrcp.pop %v1796
        %v1827 = vrcp.pop %v1799
        %v1828 = vrcp.pop %v1802
        %v1829 = vrcp.pop %v1805
        %v1830 = vrcp.pop %v1808
        %v1831 = vrcp.pop %v1811
        %v1832 = vrcp.pop %v1814
        %v1833 = vrcp.pop %v1817
        %v1834 = vmul.f32 %v1739, %v1818
        %v1835 = vmul.f32 %v1741, %v1819
        %v1836 = vmul.f32 %v1743, %v1820
        %v1837 = vmul.f32 %v1745, %v1821
        %v1838 = vmul.f32 %v1747, %v1822
        %v1839 = vmul.f32 %v1749, %v1823
        %v1840 = vmul.f32 %v1751, %v1824
        %v1841 = vmul.f32 %v1753, %v1825
        %v1842 = vmul.f32 %v1755, %v1826
        %v1843 = vmul.f32 %v1757, %v1827
        %v1844 = vmul.f32 %v1759, %v1828
        %v1845 = vmul.f32 %v1761, %v1829
        %v1846 = vmul.f32 %v1763, %v1830
        %v1847 = vmul.f32 %v1765, %v1831
        %v1848 = vmul.f32 %v1767, %v1832
        %v1849 = vmul.f32 %v1769, %v1833
        %v1850 = vpack.c.bf16 %v1834, %v1834
        %v1851 = vpack.c.bf16 %v1835, %v1835
        %v1852 = vpack.c.bf16 %v1836, %v1836
        %v1853 = vpack.c.bf16 %v1837, %v1837
        %v1854 = vpack.c.bf16 %v1838, %v1838
        %v1855 = vpack.c.bf16 %v1839, %v1839
        %v1856 = vpack.c.bf16 %v1840, %v1840
        %v1857 = vpack.c.bf16 %v1841, %v1841
        %v1858 = vpack.c.bf16 %v1842, %v1842
        %v1859 = vpack.c.bf16 %v1843, %v1843
        %v1860 = vpack.c.bf16 %v1844, %v1844
        %v1861 = vpack.c.bf16 %v1845, %v1845
        %v1862 = vpack.c.bf16 %v1846, %v1846
        %v1863 = vpack.c.bf16 %v1847, %v1847
        %v1864 = vpack.c.bf16 %v1848, %v1848
        %v1865 = vpack.c.bf16 %v1849, %v1849
        %v1870 = vunpack.c.l.b16 %v1850
        %v1871 = vunpack.c.l.b16 %v1851
        %v1872 = vunpack.c.l.b16 %v1852
        %v1873 = vunpack.c.l.b16 %v1853
        %v1874 = vpack.c.b16 %v1871, %v1870
        %v1875 = vpack.c.b16 %v1873, %v1872
        %1876 = vrot.lane.b32.xlu0 %v1348, 96
        %v1877 = vpop.permute.xlu0 %1876
        %1878 = vrot.lane.b32.xlu0 %v1349, 96
        %v1879 = vpop.permute.xlu0 %1878
        %v1883 = vsel %vm953, %v1874, 0
        %v1886 = vsel %vm953, %v1875, 0
        %1888 = vmatpush.bf16.msra.mxu0 0
        %1889 = vmatpush.bf16.msra.mxu0 0
        %1890 = vmatpush.bf16.msra.mxu0 0
        %1891 = vmatpush.bf16.msra.mxu0 0
        %1892 = vmatpush.bf16.msra.mxu0 0
        %1893 = vmatpush.bf16.msra.mxu0 0
        %1894 = vmatpush.bf16.msra.mxu0 %v1879
        %1895 = vmatpush.bf16.msra.mxu0 %v1877
        %1896 = vmatmul.bf16.gmra.mxu0 %v1883
        %v1897 = vpop.f32.mrf.mxu0
        %v1898 = vadd.f32 0.0, %v1897
        %v1899 = vpop.f32.mrf.mxu0
        %v1900 = vadd.f32 0.0, %v1899
        %1901 = vmatmul.bf16.gmra.mxu0 %v1886
        %v1902 = vpop.f32.mrf.mxu0
        %v1903 = vadd.f32 0.0, %v1902
        %v1904 = vpop.f32.mrf.mxu0
        %v1905 = vadd.f32 0.0, %v1904
        %1906 = vdwg.mxu0
        %v1911 = vunpack.c.l.b16 %v1854
        %v1912 = vunpack.c.l.b16 %v1855
        %v1913 = vunpack.c.l.b16 %v1856
        %v1914 = vunpack.c.l.b16 %v1857
        %v1915 = vpack.c.b16 %v1912, %v1911
        %v1916 = vpack.c.b16 %v1914, %v1913
        %1917 = vrot.lane.b32.xlu0 %v1395, 96
        %v1918 = vpop.permute.xlu0 %1917
        %1919 = vrot.lane.b32.xlu0 %v1396, 96
        %v1920 = vpop.permute.xlu0 %1919
        %v1924 = vsel %vm953, %v1915, 0
        %v1927 = vsel %vm953, %v1916, 0
        %1929 = vmatpush.bf16.msra.mxu0 0
        %1930 = vmatpush.bf16.msra.mxu0 0
        %1931 = vmatpush.bf16.msra.mxu0 0
        %1932 = vmatpush.bf16.msra.mxu0 0
        %1933 = vmatpush.bf16.msra.mxu0 0
        %1934 = vmatpush.bf16.msra.mxu0 0
        %1935 = vmatpush.bf16.msra.mxu0 %v1920
        %1936 = vmatpush.bf16.msra.mxu0 %v1918
        %1937 = vmatmul.bf16.gmra.mxu0 %v1924
        %v1938 = vpop.f32.mrf.mxu0
        %v1939 = vadd.f32 0.0, %v1938
        %v1940 = vpop.f32.mrf.mxu0
        %v1941 = vadd.f32 0.0, %v1940
        %1942 = vmatmul.bf16.gmra.mxu0 %v1927
        %v1943 = vpop.f32.mrf.mxu0
        %v1944 = vadd.f32 0.0, %v1943
        %v1945 = vpop.f32.mrf.mxu0
        %v1946 = vadd.f32 0.0, %v1945
        %1947 = vdwg.mxu0
        %v1952 = vunpack.c.l.b16 %v1858
        %v1953 = vunpack.c.l.b16 %v1859
        %v1954 = vunpack.c.l.b16 %v1860
        %v1955 = vunpack.c.l.b16 %v1861
        %v1956 = vpack.c.b16 %v1953, %v1952
        %v1957 = vpack.c.b16 %v1955, %v1954
        %1958 = vrot.lane.b32.xlu0 %v1442, 96
        %v1959 = vpop.permute.xlu0 %1958
        %1960 = vrot.lane.b32.xlu0 %v1443, 96
        %v1961 = vpop.permute.xlu0 %1960
        %v1965 = vsel %vm953, %v1956, 0
        %v1968 = vsel %vm953, %v1957, 0
        %1970 = vmatpush.bf16.msra.mxu0 0
        %1971 = vmatpush.bf16.msra.mxu0 0
        %1972 = vmatpush.bf16.msra.mxu0 0
        %1973 = vmatpush.bf16.msra.mxu0 0
        %1974 = vmatpush.bf16.msra.mxu0 0
        %1975 = vmatpush.bf16.msra.mxu0 0
        %1976 = vmatpush.bf16.msra.mxu0 %v1961
        %1977 = vmatpush.bf16.msra.mxu0 %v1959
        %1978 = vmatmul.bf16.gmra.mxu0 %v1965
        %v1979 = vpop.f32.mrf.mxu0
        %v1980 = vadd.f32 0.0, %v1979
        %v1981 = vpop.f32.mrf.mxu0
        %v1982 = vadd.f32 0.0, %v1981
        %1983 = vmatmul.bf16.gmra.mxu0 %v1968
        %v1984 = vpop.f32.mrf.mxu0
        %v1985 = vadd.f32 0.0, %v1984
        %v1986 = vpop.f32.mrf.mxu0
        %v1987 = vadd.f32 0.0, %v1986
        %1988 = vdwg.mxu0
        %v1993 = vunpack.c.l.b16 %v1862
        %v1994 = vunpack.c.l.b16 %v1863
        %v1995 = vunpack.c.l.b16 %v1864
        %v1996 = vunpack.c.l.b16 %v1865
        %v1997 = vpack.c.b16 %v1994, %v1993
        %v1998 = vpack.c.b16 %v1996, %v1995
        %1999 = vrot.lane.b32.xlu0 %v1489, 96
        %v2000 = vpop.permute.xlu0 %1999
        %2001 = vrot.lane.b32.xlu0 %v1490, 96
        %v2002 = vpop.permute.xlu0 %2001
        %v2006 = vsel %vm953, %v1997, 0
        %v2009 = vsel %vm953, %v1998, 0
        %2011 = vmatpush.bf16.msra.mxu0 0
        %2012 = vmatpush.bf16.msra.mxu0 0
        %2013 = vmatpush.bf16.msra.mxu0 0
        %2014 = vmatpush.bf16.msra.mxu0 0
        %2015 = vmatpush.bf16.msra.mxu0 0
        %2016 = vmatpush.bf16.msra.mxu0 0
        %2017 = vmatpush.bf16.msra.mxu0 %v2002
        %2018 = vmatpush.bf16.msra.mxu0 %v2000
        %2019 = vmatmul.bf16.gmra.mxu0 %v2006
        %v2020 = vpop.f32.mrf.mxu0
        %v2021 = vadd.f32 0.0, %v2020
        %v2022 = vpop.f32.mrf.mxu0
        %v2023 = vadd.f32 0.0, %v2022
        %2024 = vmatmul.bf16.gmra.mxu0 %v2009
        %v2025 = vpop.f32.mrf.mxu0
        %v2026 = vadd.f32 0.0, %v2025
        %v2027 = vpop.f32.mrf.mxu0
        %v2028 = vadd.f32 0.0, %v2027
        %2029 = vdwg.mxu0
        %2030 = vrot.lane.b32.xlu0 %v941, 64
        %v2031 = vpop.permute.xlu0 %2030
        %2032 = vrot.lane.b32.xlu0 %v942, 64
        %v2033 = vpop.permute.xlu0 %2032
        %2034 = vrot.lane.b32.xlu0 %v951, 64
        %v2035 = vpop.permute.xlu0 %2034
        %2036 = vrot.lane.b32.xlu0 %v952, 64
        %v2037 = vpop.permute.xlu0 %2036
        %v2039 = vsel %vm953, %v2031, 0
        %v2042 = vsel %vm953, %v2033, 0
        %v2045 = vsel %vm953, %v2035, 0
        %v2048 = vsel %vm953, %v2037, 0
        %2050 = vmatpush.bf16.xpose.msra.mxu0 0
        %2051 = vmatpush.bf16.xpose.msra.mxu0 0
        %2052 = vmatpush.bf16.xpose.msra.mxu0 0
        %2053 = vmatpush.bf16.xpose.msra.mxu0 0
        %2054 = vmatpush.bf16.xpose.msra.mxu0 0
        %2055 = vmatpush.bf16.xpose.msra.mxu0 0
        %2056 = vmatpush.bf16.xpose.msra.mxu0 %v2048
        %2057 = vmatpush.bf16.xpose.msra.mxu0 %v2045
        %2058 = vmatmul.bf16.gmra.mxu0 %v2039
        %v2059 = vpop.f32.mrf.mxu0
        %v2060 = vadd.f32 0.0, %v2059
        %v2061 = vpop.f32.mrf.mxu0
        %v2062 = vadd.f32 0.0, %v2061
        %2063 = vmatmul.bf16.gmra.mxu0 %v2042
        %v2064 = vpop.f32.mrf.mxu0
        %v2065 = vadd.f32 0.0, %v2064
        %v2066 = vpop.f32.mrf.mxu0
        %v2067 = vadd.f32 0.0, %v2066
        %2068 = vdwg.mxu0
        %2069 = vrot.lane.b32.xlu0 %v993, 64
        %v2070 = vpop.permute.xlu0 %2069
        %2071 = vrot.lane.b32.xlu0 %v994, 64
        %v2072 = vpop.permute.xlu0 %2071
        %2073 = vrot.lane.b32.xlu0 %v1003, 64
        %v2074 = vpop.permute.xlu0 %2073
        %2075 = vrot.lane.b32.xlu0 %v1004, 64
        %v2076 = vpop.permute.xlu0 %2075
        %v2078 = vsel %vm953, %v2070, 0
        %v2081 = vsel %vm953, %v2072, 0
        %v2084 = vsel %vm953, %v2074, 0
        %v2087 = vsel %vm953, %v2076, 0
        %2089 = vmatpush.bf16.xpose.msra.mxu0 0
        %2090 = vmatpush.bf16.xpose.msra.mxu0 0
        %2091 = vmatpush.bf16.xpose.msra.mxu0 0
        %2092 = vmatpush.bf16.xpose.msra.mxu0 0
        %2093 = vmatpush.bf16.xpose.msra.mxu0 0
        %2094 = vmatpush.bf16.xpose.msra.mxu0 0
        %2095 = vmatpush.bf16.xpose.msra.mxu0 %v2087
        %2096 = vmatpush.bf16.xpose.msra.mxu0 %v2084
        %2097 = vmatmul.bf16.gmra.mxu0 %v2078
        %v2098 = vpop.f32.mrf.mxu0
        %v2099 = vadd.f32 0.0, %v2098
        %v2100 = vpop.f32.mrf.mxu0
        %v2101 = vadd.f32 0.0, %v2100
        %2102 = vmatmul.bf16.gmra.mxu0 %v2081
        %v2103 = vpop.f32.mrf.mxu0
        %v2104 = vadd.f32 0.0, %v2103
        %v2105 = vpop.f32.mrf.mxu0
        %v2106 = vadd.f32 0.0, %v2105
        %2107 = vdwg.mxu0
        %2108 = vrot.lane.b32.xlu0 %v1044, 64
        %v2109 = vpop.permute.xlu0 %2108
        %2110 = vrot.lane.b32.xlu0 %v1045, 64
        %v2111 = vpop.permute.xlu0 %2110
        %2112 = vrot.lane.b32.xlu0 %v1054, 64
        %v2113 = vpop.permute.xlu0 %2112
        %2114 = vrot.lane.b32.xlu0 %v1055, 64
        %v2115 = vpop.permute.xlu0 %2114
        %v2117 = vsel %vm953, %v2109, 0
        %v2120 = vsel %vm953, %v2111, 0
        %v2123 = vsel %vm953, %v2113, 0
        %v2126 = vsel %vm953, %v2115, 0
        %2128 = vmatpush.bf16.xpose.msra.mxu0 0
        %2129 = vmatpush.bf16.xpose.msra.mxu0 0
        %2130 = vmatpush.bf16.xpose.msra.mxu0 0
        %2131 = vmatpush.bf16.xpose.msra.mxu0 0
        %2132 = vmatpush.bf16.xpose.msra.mxu0 0
        %2133 = vmatpush.bf16.xpose.msra.mxu0 0
        %2134 = vmatpush.bf16.xpose.msra.mxu0 %v2126
        %2135 = vmatpush.bf16.xpose.msra.mxu0 %v2123
        %2136 = vmatmul.bf16.gmra.mxu0 %v2117
        %v2137 = vpop.f32.mrf.mxu0
        %v2138 = vadd.f32 0.0, %v2137
        %v2139 = vpop.f32.mrf.mxu0
        %v2140 = vadd.f32 0.0, %v2139
        %2141 = vmatmul.bf16.gmra.mxu0 %v2120
        %v2142 = vpop.f32.mrf.mxu0
        %v2143 = vadd.f32 0.0, %v2142
        %v2144 = vpop.f32.mrf.mxu0
        %v2145 = vadd.f32 0.0, %v2144
        %2146 = vdwg.mxu0
        %2147 = vrot.lane.b32.xlu0 %v1095, 64
        %v2148 = vpop.permute.xlu0 %2147
        %2149 = vrot.lane.b32.xlu0 %v1096, 64
        %v2150 = vpop.permute.xlu0 %2149
        %2151 = vrot.lane.b32.xlu0 %v1105, 64
        %v2152 = vpop.permute.xlu0 %2151
        %2153 = vrot.lane.b32.xlu0 %v1106, 64
        %v2154 = vpop.permute.xlu0 %2153
        %v2156 = vsel %vm953, %v2148, 0
        %v2159 = vsel %vm953, %v2150, 0
        %v2162 = vsel %vm953, %v2152, 0
        %v2165 = vsel %vm953, %v2154, 0
        %2167 = vmatpush.bf16.xpose.msra.mxu0 0
        %2168 = vmatpush.bf16.xpose.msra.mxu0 0
        %2169 = vmatpush.bf16.xpose.msra.mxu0 0
        %2170 = vmatpush.bf16.xpose.msra.mxu0 0
        %2171 = vmatpush.bf16.xpose.msra.mxu0 0
        %2172 = vmatpush.bf16.xpose.msra.mxu0 0
        %2173 = vmatpush.bf16.xpose.msra.mxu0 %v2165
        %2174 = vmatpush.bf16.xpose.msra.mxu0 %v2162
        %2175 = vmatmul.bf16.gmra.mxu0 %v2156
        %v2176 = vpop.f32.mrf.mxu0
        %v2177 = vadd.f32 0.0, %v2176
        %v2178 = vpop.f32.mrf.mxu0
        %v2179 = vadd.f32 0.0, %v2178
        %2180 = vmatmul.bf16.gmra.mxu0 %v2159
        %v2181 = vpop.f32.mrf.mxu0
        %v2182 = vadd.f32 0.0, %v2181
        %v2183 = vpop.f32.mrf.mxu0
        %v2184 = vadd.f32 0.0, %v2183
        %2185 = vdwg.mxu0
        %v2186 = vsel %vm953, %v2060, -inf
        %2187 = vmax.xlane.f32.xlu0 %v2186
        %v2188 = vpop.xlane.xlu0 %2187
        %v2189 = vsel %vm953, %v2062, -inf
        %2190 = vmax.xlane.f32.xlu0 %v2189
        %v2191 = vpop.xlane.xlu0 %2190
        %v2192 = vsel %vm953, %v2065, -inf
        %2193 = vmax.xlane.f32.xlu0 %v2192
        %v2194 = vpop.xlane.xlu0 %2193
        %v2195 = vsel %vm953, %v2067, -inf
        %2196 = vmax.xlane.f32.xlu0 %v2195
        %v2197 = vpop.xlane.xlu0 %2196
        %v2198 = vsel %vm953, %v2099, -inf
        %2199 = vmax.xlane.f32.xlu0 %v2198
        %v2200 = vpop.xlane.xlu0 %2199
        %v2201 = vsel %vm953, %v2101, -inf
        %2202 = vmax.xlane.f32.xlu0 %v2201
        %v2203 = vpop.xlane.xlu0 %2202
        %v2204 = vsel %vm953, %v2104, -inf
        %2205 = vmax.xlane.f32.xlu0 %v2204
        %v2206 = vpop.xlane.xlu0 %2205
        %v2207 = vsel %vm953, %v2106, -inf
        %2208 = vmax.xlane.f32.xlu0 %v2207
        %v2209 = vpop.xlane.xlu0 %2208
        %v2210 = vsel %vm953, %v2138, -inf
        %2211 = vmax.xlane.f32.xlu0 %v2210
        %v2212 = vpop.xlane.xlu0 %2211
        %v2213 = vsel %vm953, %v2140, -inf
        %2214 = vmax.xlane.f32.xlu0 %v2213
        %v2215 = vpop.xlane.xlu0 %2214
        %v2216 = vsel %vm953, %v2143, -inf
        %2217 = vmax.xlane.f32.xlu0 %v2216
        %v2218 = vpop.xlane.xlu0 %2217
        %v2219 = vsel %vm953, %v2145, -inf
        %2220 = vmax.xlane.f32.xlu0 %v2219
        %v2221 = vpop.xlane.xlu0 %2220
        %v2222 = vsel %vm953, %v2177, -inf
        %2223 = vmax.xlane.f32.xlu0 %v2222
        %v2224 = vpop.xlane.xlu0 %2223
        %v2225 = vsel %vm953, %v2179, -inf
        %2226 = vmax.xlane.f32.xlu0 %v2225
        %v2227 = vpop.xlane.xlu0 %2226
        %v2228 = vsel %vm953, %v2182, -inf
        %2229 = vmax.xlane.f32.xlu0 %v2228
        %v2230 = vpop.xlane.xlu0 %2229
        %v2231 = vsel %vm953, %v2184, -inf
        %2232 = vmax.xlane.f32.xlu0 %v2231
        %v2233 = vpop.xlane.xlu0 %2232
        %v2234 = vsub.f32 %v2060, %v2188
        %v2235 = vsub.f32 %v2062, %v2191
        %v2236 = vsub.f32 %v2065, %v2194
        %v2237 = vsub.f32 %v2067, %v2197
        %v2238 = vsub.f32 %v2099, %v2200
        %v2239 = vsub.f32 %v2101, %v2203
        %v2240 = vsub.f32 %v2104, %v2206
        %v2241 = vsub.f32 %v2106, %v2209
        %v2242 = vsub.f32 %v2138, %v2212
        %v2243 = vsub.f32 %v2140, %v2215
        %v2244 = vsub.f32 %v2143, %v2218
        %v2245 = vsub.f32 %v2145, %v2221
        %v2246 = vsub.f32 %v2177, %v2224
        %v2247 = vsub.f32 %v2179, %v2227
        %v2248 = vsub.f32 %v2182, %v2230
        %v2249 = vsub.f32 %v2184, %v2233
        %v2250 = vmul.f32 %v2234, 1.442695
        %v2251 = vpow.pop %v2250
        %v2252 = vmul.f32 %v2235, 1.442695
        %v2253 = vpow.pop %v2252
        %v2254 = vmul.f32 %v2236, 1.442695
        %v2255 = vpow.pop %v2254
        %v2256 = vmul.f32 %v2237, 1.442695
        %v2257 = vpow.pop %v2256
        %v2258 = vmul.f32 %v2238, 1.442695
        %v2259 = vpow.pop %v2258
        %v2260 = vmul.f32 %v2239, 1.442695
        %v2261 = vpow.pop %v2260
        %v2262 = vmul.f32 %v2240, 1.442695
        %v2263 = vpow.pop %v2262
        %v2264 = vmul.f32 %v2241, 1.442695
        %v2265 = vpow.pop %v2264
        %v2266 = vmul.f32 %v2242, 1.442695
        %v2267 = vpow.pop %v2266
        %v2268 = vmul.f32 %v2243, 1.442695
        %v2269 = vpow.pop %v2268
        %v2270 = vmul.f32 %v2244, 1.442695
        %v2271 = vpow.pop %v2270
        %v2272 = vmul.f32 %v2245, 1.442695
        %v2273 = vpow.pop %v2272
        %v2274 = vmul.f32 %v2246, 1.442695
        %v2275 = vpow.pop %v2274
        %v2276 = vmul.f32 %v2247, 1.442695
        %v2277 = vpow.pop %v2276
        %v2278 = vmul.f32 %v2248, 1.442695
        %v2279 = vpow.pop %v2278
        %v2280 = vmul.f32 %v2249, 1.442695
        %v2281 = vpow.pop %v2280
        %v2282 = vsel %vm953, %v2251, 0.0
        %2283 = vadd.xlane.f32.xlu0 %v2282
        %v2284 = vpop.xlane.xlu0 %2283
        %v2285 = vsel %vm953, %v2253, 0.0
        %2286 = vadd.xlane.f32.xlu0 %v2285
        %v2287 = vpop.xlane.xlu0 %2286
        %v2288 = vsel %vm953, %v2255, 0.0
        %2289 = vadd.xlane.f32.xlu0 %v2288
        %v2290 = vpop.xlane.xlu0 %2289
        %v2291 = vsel %vm953, %v2257, 0.0
        %2292 = vadd.xlane.f32.xlu0 %v2291
        %v2293 = vpop.xlane.xlu0 %2292
        %v2294 = vsel %vm953, %v2259, 0.0
        %2295 = vadd.xlane.f32.xlu0 %v2294
        %v2296 = vpop.xlane.xlu0 %2295
        %v2297 = vsel %vm953, %v2261, 0.0
        %2298 = vadd.xlane.f32.xlu0 %v2297
        %v2299 = vpop.xlane.xlu0 %2298
        %v2300 = vsel %vm953, %v2263, 0.0
        %2301 = vadd.xlane.f32.xlu0 %v2300
        %v2302 = vpop.xlane.xlu0 %2301
        %v2303 = vsel %vm953, %v2265, 0.0
        %2304 = vadd.xlane.f32.xlu0 %v2303
        %v2305 = vpop.xlane.xlu0 %2304
        %v2306 = vsel %vm953, %v2267, 0.0
        %2307 = vadd.xlane.f32.xlu0 %v2306
        %v2308 = vpop.xlane.xlu0 %2307
        %v2309 = vsel %vm953, %v2269, 0.0
        %2310 = vadd.xlane.f32.xlu0 %v2309
        %v2311 = vpop.xlane.xlu0 %2310
        %v2312 = vsel %vm953, %v2271, 0.0
        %2313 = vadd.xlane.f32.xlu0 %v2312
        %v2314 = vpop.xlane.xlu0 %2313
        %v2315 = vsel %vm953, %v2273, 0.0
        %2316 = vadd.xlane.f32.xlu0 %v2315
        %v2317 = vpop.xlane.xlu0 %2316
        %v2318 = vsel %vm953, %v2275, 0.0
        %2319 = vadd.xlane.f32.xlu0 %v2318
        %v2320 = vpop.xlane.xlu0 %2319
        %v2321 = vsel %vm953, %v2277, 0.0
        %2322 = vadd.xlane.f32.xlu0 %v2321
        %v2323 = vpop.xlane.xlu0 %2322
        %v2324 = vsel %vm953, %v2279, 0.0
        %2325 = vadd.xlane.f32.xlu0 %v2324
        %v2326 = vpop.xlane.xlu0 %2325
        %v2327 = vsel %vm953, %v2281, 0.0
        %2328 = vadd.xlane.f32.xlu0 %v2327
        %v2329 = vpop.xlane.xlu0 %2328
        %v2330 = vrcp.pop %v2284
        %v2331 = vrcp.pop %v2287
        %v2332 = vrcp.pop %v2290
        %v2333 = vrcp.pop %v2293
        %v2334 = vrcp.pop %v2296
        %v2335 = vrcp.pop %v2299
        %v2336 = vrcp.pop %v2302
        %v2337 = vrcp.pop %v2305
        %v2338 = vrcp.pop %v2308
        %v2339 = vrcp.pop %v2311
        %v2340 = vrcp.pop %v2314
        %v2341 = vrcp.pop %v2317
        %v2342 = vrcp.pop %v2320
        %v2343 = vrcp.pop %v2323
        %v2344 = vrcp.pop %v2326
        %v2345 = vrcp.pop %v2329
        %v2346 = vmul.f32 %v2251, %v2330
        %v2347 = vmul.f32 %v2253, %v2331
        %v2348 = vmul.f32 %v2255, %v2332
        %v2349 = vmul.f32 %v2257, %v2333
        %v2350 = vmul.f32 %v2259, %v2334
        %v2351 = vmul.f32 %v2261, %v2335
        %v2352 = vmul.f32 %v2263, %v2336
        %v2353 = vmul.f32 %v2265, %v2337
        %v2354 = vmul.f32 %v2267, %v2338
        %v2355 = vmul.f32 %v2269, %v2339
        %v2356 = vmul.f32 %v2271, %v2340
        %v2357 = vmul.f32 %v2273, %v2341
        %v2358 = vmul.f32 %v2275, %v2342
        %v2359 = vmul.f32 %v2277, %v2343
        %v2360 = vmul.f32 %v2279, %v2344
        %v2361 = vmul.f32 %v2281, %v2345
        %v2362 = vpack.c.bf16 %v2346, %v2346
        %v2363 = vpack.c.bf16 %v2347, %v2347
        %v2364 = vpack.c.bf16 %v2348, %v2348
        %v2365 = vpack.c.bf16 %v2349, %v2349
        %v2366 = vpack.c.bf16 %v2350, %v2350
        %v2367 = vpack.c.bf16 %v2351, %v2351
        %v2368 = vpack.c.bf16 %v2352, %v2352
        %v2369 = vpack.c.bf16 %v2353, %v2353
        %v2370 = vpack.c.bf16 %v2354, %v2354
        %v2371 = vpack.c.bf16 %v2355, %v2355
        %v2372 = vpack.c.bf16 %v2356, %v2356
        %v2373 = vpack.c.bf16 %v2357, %v2357
        %v2374 = vpack.c.bf16 %v2358, %v2358
        %v2375 = vpack.c.bf16 %v2359, %v2359
        %v2376 = vpack.c.bf16 %v2360, %v2360
        %v2377 = vpack.c.bf16 %v2361, %v2361
        %v2382 = vunpack.c.l.b16 %v2362
        %v2383 = vunpack.c.l.b16 %v2363
        %v2384 = vunpack.c.l.b16 %v2364
        %v2385 = vunpack.c.l.b16 %v2365
        %v2386 = vpack.c.b16 %v2383, %v2382
        %v2387 = vpack.c.b16 %v2385, %v2384
        %2388 = vrot.lane.b32.xlu0 %v1348, 64
        %v2389 = vpop.permute.xlu0 %2388
        %2390 = vrot.lane.b32.xlu0 %v1349, 64
        %v2391 = vpop.permute.xlu0 %2390
        %v2395 = vsel %vm953, %v2386, 0
        %v2398 = vsel %vm953, %v2387, 0
        %2400 = vmatpush.bf16.msra.mxu0 0
        %2401 = vmatpush.bf16.msra.mxu0 0
        %2402 = vmatpush.bf16.msra.mxu0 0
        %2403 = vmatpush.bf16.msra.mxu0 0
        %2404 = vmatpush.bf16.msra.mxu0 0
        %2405 = vmatpush.bf16.msra.mxu0 0
        %2406 = vmatpush.bf16.msra.mxu0 %v2391
        %2407 = vmatpush.bf16.msra.mxu0 %v2389
        %2408 = vmatmul.bf16.gmra.mxu0 %v2395
        %v2409 = vpop.f32.mrf.mxu0
        %v2410 = vadd.f32 0.0, %v2409
        %v2411 = vpop.f32.mrf.mxu0
        %v2412 = vadd.f32 0.0, %v2411
        %2413 = vmatmul.bf16.gmra.mxu0 %v2398
        %v2414 = vpop.f32.mrf.mxu0
        %v2415 = vadd.f32 0.0, %v2414
        %v2416 = vpop.f32.mrf.mxu0
        %v2417 = vadd.f32 0.0, %v2416
        %2418 = vdwg.mxu0
        %v2423 = vunpack.c.l.b16 %v2366
        %v2424 = vunpack.c.l.b16 %v2367
        %v2425 = vunpack.c.l.b16 %v2368
        %v2426 = vunpack.c.l.b16 %v2369
        %v2427 = vpack.c.b16 %v2424, %v2423
        %v2428 = vpack.c.b16 %v2426, %v2425
        %2429 = vrot.lane.b32.xlu0 %v1395, 64
        %v2430 = vpop.permute.xlu0 %2429
        %2431 = vrot.lane.b32.xlu0 %v1396, 64
        %v2432 = vpop.permute.xlu0 %2431
        %v2436 = vsel %vm953, %v2427, 0
        %v2439 = vsel %vm953, %v2428, 0
        %2441 = vmatpush.bf16.msra.mxu0 0
        %2442 = vmatpush.bf16.msra.mxu0 0
        %2443 = vmatpush.bf16.msra.mxu0 0
        %2444 = vmatpush.bf16.msra.mxu0 0
        %2445 = vmatpush.bf16.msra.mxu0 0
        %2446 = vmatpush.bf16.msra.mxu0 0
        %2447 = vmatpush.bf16.msra.mxu0 %v2432
        %2448 = vmatpush.bf16.msra.mxu0 %v2430
        %2449 = vmatmul.bf16.gmra.mxu0 %v2436
        %v2450 = vpop.f32.mrf.mxu0
        %v2451 = vadd.f32 0.0, %v2450
        %v2452 = vpop.f32.mrf.mxu0
        %v2453 = vadd.f32 0.0, %v2452
        %2454 = vmatmul.bf16.gmra.mxu0 %v2439
        %v2455 = vpop.f32.mrf.mxu0
        %v2456 = vadd.f32 0.0, %v2455
        %v2457 = vpop.f32.mrf.mxu0
        %v2458 = vadd.f32 0.0, %v2457
        %2459 = vdwg.mxu0
        %v2464 = vunpack.c.l.b16 %v2370
        %v2465 = vunpack.c.l.b16 %v2371
        %v2466 = vunpack.c.l.b16 %v2372
        %v2467 = vunpack.c.l.b16 %v2373
        %v2468 = vpack.c.b16 %v2465, %v2464
        %v2469 = vpack.c.b16 %v2467, %v2466
        %2470 = vrot.lane.b32.xlu0 %v1442, 64
        %v2471 = vpop.permute.xlu0 %2470
        %2472 = vrot.lane.b32.xlu0 %v1443, 64
        %v2473 = vpop.permute.xlu0 %2472
        %v2477 = vsel %vm953, %v2468, 0
        %v2480 = vsel %vm953, %v2469, 0
        %2482 = vmatpush.bf16.msra.mxu0 0
        %2483 = vmatpush.bf16.msra.mxu0 0
        %2484 = vmatpush.bf16.msra.mxu0 0
        %2485 = vmatpush.bf16.msra.mxu0 0
        %2486 = vmatpush.bf16.msra.mxu0 0
        %2487 = vmatpush.bf16.msra.mxu0 0
        %2488 = vmatpush.bf16.msra.mxu0 %v2473
        %2489 = vmatpush.bf16.msra.mxu0 %v2471
        %2490 = vmatmul.bf16.gmra.mxu0 %v2477
        %v2491 = vpop.f32.mrf.mxu0
        %v2492 = vadd.f32 0.0, %v2491
        %v2493 = vpop.f32.mrf.mxu0
        %v2494 = vadd.f32 0.0, %v2493
        %2495 = vmatmul.bf16.gmra.mxu0 %v2480
        %v2496 = vpop.f32.mrf.mxu0
        %v2497 = vadd.f32 0.0, %v2496
        %v2498 = vpop.f32.mrf.mxu0
        %v2499 = vadd.f32 0.0, %v2498
        %2500 = vdwg.mxu0
        %v2505 = vunpack.c.l.b16 %v2374
        %v2506 = vunpack.c.l.b16 %v2375
        %v2507 = vunpack.c.l.b16 %v2376
        %v2508 = vunpack.c.l.b16 %v2377
        %v2509 = vpack.c.b16 %v2506, %v2505
        %v2510 = vpack.c.b16 %v2508, %v2507
        %2511 = vrot.lane.b32.xlu0 %v1489, 64
        %v2512 = vpop.permute.xlu0 %2511
        %2513 = vrot.lane.b32.xlu0 %v1490, 64
        %v2514 = vpop.permute.xlu0 %2513
        %v2518 = vsel %vm953, %v2509, 0
        %v2521 = vsel %vm953, %v2510, 0
        %2523 = vmatpush.bf16.msra.mxu0 0
        %2524 = vmatpush.bf16.msra.mxu0 0
        %2525 = vmatpush.bf16.msra.mxu0 0
        %2526 = vmatpush.bf16.msra.mxu0 0
        %2527 = vmatpush.bf16.msra.mxu0 0
        %2528 = vmatpush.bf16.msra.mxu0 0
        %2529 = vmatpush.bf16.msra.mxu0 %v2514
        %2530 = vmatpush.bf16.msra.mxu0 %v2512
        %2531 = vmatmul.bf16.gmra.mxu0 %v2518
        %v2532 = vpop.f32.mrf.mxu0
        %v2533 = vadd.f32 0.0, %v2532
        %v2534 = vpop.f32.mrf.mxu0
        %v2535 = vadd.f32 0.0, %v2534
        %2536 = vmatmul.bf16.gmra.mxu0 %v2521
        %v2537 = vpop.f32.mrf.mxu0
        %v2538 = vadd.f32 0.0, %v2537
        %v2539 = vpop.f32.mrf.mxu0
        %v2540 = vadd.f32 0.0, %v2539
        %2541 = vdwg.mxu0
        %2542 = vrot.lane.b32.xlu0 %v941, 32
        %v2543 = vpop.permute.xlu0 %2542
        %2544 = vrot.lane.b32.xlu0 %v942, 32
        %v2545 = vpop.permute.xlu0 %2544
        %2546 = vrot.lane.b32.xlu0 %v951, 32
        %v2547 = vpop.permute.xlu0 %2546
        %2548 = vrot.lane.b32.xlu0 %v952, 32
        %v2549 = vpop.permute.xlu0 %2548
        %v2551 = vsel %vm953, %v2543, 0
        %v2554 = vsel %vm953, %v2545, 0
        %v2557 = vsel %vm953, %v2547, 0
        %v2560 = vsel %vm953, %v2549, 0
        %2562 = vmatpush.bf16.xpose.msra.mxu0 0
        %2563 = vmatpush.bf16.xpose.msra.mxu0 0
        %2564 = vmatpush.bf16.xpose.msra.mxu0 0
        %2565 = vmatpush.bf16.xpose.msra.mxu0 0
        %2566 = vmatpush.bf16.xpose.msra.mxu0 0
        %2567 = vmatpush.bf16.xpose.msra.mxu0 0
        %2568 = vmatpush.bf16.xpose.msra.mxu0 %v2560
        %2569 = vmatpush.bf16.xpose.msra.mxu0 %v2557
        %2570 = vmatmul.bf16.gmra.mxu0 %v2551
        %v2571 = vpop.f32.mrf.mxu0
        %v2572 = vadd.f32 0.0, %v2571
        %v2573 = vpop.f32.mrf.mxu0
        %v2574 = vadd.f32 0.0, %v2573
        %2575 = vmatmul.bf16.gmra.mxu0 %v2554
        %v2576 = vpop.f32.mrf.mxu0
        %v2577 = vadd.f32 0.0, %v2576
        %v2578 = vpop.f32.mrf.mxu0
        %v2579 = vadd.f32 0.0, %v2578
        %2580 = vdwg.mxu0
        %2581 = vrot.lane.b32.xlu0 %v993, 32
        %v2582 = vpop.permute.xlu0 %2581
        %2583 = vrot.lane.b32.xlu0 %v994, 32
        %v2584 = vpop.permute.xlu0 %2583
        %2585 = vrot.lane.b32.xlu0 %v1003, 32
        %v2586 = vpop.permute.xlu0 %2585
        %2587 = vrot.lane.b32.xlu0 %v1004, 32
        %v2588 = vpop.permute.xlu0 %2587
        %v2590 = vsel %vm953, %v2582, 0
        %v2593 = vsel %vm953, %v2584, 0
        %v2596 = vsel %vm953, %v2586, 0
        %v2599 = vsel %vm953, %v2588, 0
        %2601 = vmatpush.bf16.xpose.msra.mxu0 0
        %2602 = vmatpush.bf16.xpose.msra.mxu0 0
        %2603 = vmatpush.bf16.xpose.msra.mxu0 0
        %2604 = vmatpush.bf16.xpose.msra.mxu0 0
        %2605 = vmatpush.bf16.xpose.msra.mxu0 0
        %2606 = vmatpush.bf16.xpose.msra.mxu0 0
        %2607 = vmatpush.bf16.xpose.msra.mxu0 %v2599
        %2608 = vmatpush.bf16.xpose.msra.mxu0 %v2596
        %2609 = vmatmul.bf16.gmra.mxu0 %v2590
        %v2610 = vpop.f32.mrf.mxu0
        %v2611 = vadd.f32 0.0, %v2610
        %v2612 = vpop.f32.mrf.mxu0
        %v2613 = vadd.f32 0.0, %v2612
        %2614 = vmatmul.bf16.gmra.mxu0 %v2593
        %v2615 = vpop.f32.mrf.mxu0
        %v2616 = vadd.f32 0.0, %v2615
        %v2617 = vpop.f32.mrf.mxu0
        %v2618 = vadd.f32 0.0, %v2617
        %2619 = vdwg.mxu0
        %2620 = vrot.lane.b32.xlu0 %v1044, 32
        %v2621 = vpop.permute.xlu0 %2620
        %2622 = vrot.lane.b32.xlu0 %v1045, 32
        %v2623 = vpop.permute.xlu0 %2622
        %2624 = vrot.lane.b32.xlu0 %v1054, 32
        %v2625 = vpop.permute.xlu0 %2624
        %2626 = vrot.lane.b32.xlu0 %v1055, 32
        %v2627 = vpop.permute.xlu0 %2626
        %v2629 = vsel %vm953, %v2621, 0
        %v2632 = vsel %vm953, %v2623, 0
        %v2635 = vsel %vm953, %v2625, 0
        %v2638 = vsel %vm953, %v2627, 0
        %2640 = vmatpush.bf16.xpose.msra.mxu0 0
        %2641 = vmatpush.bf16.xpose.msra.mxu0 0
        %2642 = vmatpush.bf16.xpose.msra.mxu0 0
        %2643 = vmatpush.bf16.xpose.msra.mxu0 0
        %2644 = vmatpush.bf16.xpose.msra.mxu0 0
        %2645 = vmatpush.bf16.xpose.msra.mxu0 0
        %2646 = vmatpush.bf16.xpose.msra.mxu0 %v2638
        %2647 = vmatpush.bf16.xpose.msra.mxu0 %v2635
        %2648 = vmatmul.bf16.gmra.mxu0 %v2629
        %v2649 = vpop.f32.mrf.mxu0
        %v2650 = vadd.f32 0.0, %v2649
        %v2651 = vpop.f32.mrf.mxu0
        %v2652 = vadd.f32 0.0, %v2651
        %2653 = vmatmul.bf16.gmra.mxu0 %v2632
        %v2654 = vpop.f32.mrf.mxu0
        %v2655 = vadd.f32 0.0, %v2654
        %v2656 = vpop.f32.mrf.mxu0
        %v2657 = vadd.f32 0.0, %v2656
        %2658 = vdwg.mxu0
        %2659 = vrot.lane.b32.xlu0 %v1095, 32
        %v2660 = vpop.permute.xlu0 %2659
        %2661 = vrot.lane.b32.xlu0 %v1096, 32
        %v2662 = vpop.permute.xlu0 %2661
        %2663 = vrot.lane.b32.xlu0 %v1105, 32
        %v2664 = vpop.permute.xlu0 %2663
        %2665 = vrot.lane.b32.xlu0 %v1106, 32
        %v2666 = vpop.permute.xlu0 %2665
        %v2668 = vsel %vm953, %v2660, 0
        %v2671 = vsel %vm953, %v2662, 0
        %v2674 = vsel %vm953, %v2664, 0
        %v2677 = vsel %vm953, %v2666, 0
        %2679 = vmatpush.bf16.xpose.msra.mxu0 0
        %2680 = vmatpush.bf16.xpose.msra.mxu0 0
        %2681 = vmatpush.bf16.xpose.msra.mxu0 0
        %2682 = vmatpush.bf16.xpose.msra.mxu0 0
        %2683 = vmatpush.bf16.xpose.msra.mxu0 0
        %2684 = vmatpush.bf16.xpose.msra.mxu0 0
        %2685 = vmatpush.bf16.xpose.msra.mxu0 %v2677
        %2686 = vmatpush.bf16.xpose.msra.mxu0 %v2674
        %2687 = vmatmul.bf16.gmra.mxu0 %v2668
        %v2688 = vpop.f32.mrf.mxu0
        %v2689 = vadd.f32 0.0, %v2688
        %v2690 = vpop.f32.mrf.mxu0
        %v2691 = vadd.f32 0.0, %v2690
        %2692 = vmatmul.bf16.gmra.mxu0 %v2671
        %v2693 = vpop.f32.mrf.mxu0
        %v2694 = vadd.f32 0.0, %v2693
        %v2695 = vpop.f32.mrf.mxu0
        %v2696 = vadd.f32 0.0, %v2695
        %2697 = vdwg.mxu0
        %v2698 = vsel %vm953, %v2572, -inf
        %2699 = vmax.xlane.f32.xlu0 %v2698
        %v2700 = vpop.xlane.xlu0 %2699
        %v2701 = vsel %vm953, %v2574, -inf
        %2702 = vmax.xlane.f32.xlu0 %v2701
        %v2703 = vpop.xlane.xlu0 %2702
        %v2704 = vsel %vm953, %v2577, -inf
        %2705 = vmax.xlane.f32.xlu0 %v2704
        %v2706 = vpop.xlane.xlu0 %2705
        %v2707 = vsel %vm953, %v2579, -inf
        %2708 = vmax.xlane.f32.xlu0 %v2707
        %v2709 = vpop.xlane.xlu0 %2708
        %v2710 = vsel %vm953, %v2611, -inf
        %2711 = vmax.xlane.f32.xlu0 %v2710
        %v2712 = vpop.xlane.xlu0 %2711
        %v2713 = vsel %vm953, %v2613, -inf
        %2714 = vmax.xlane.f32.xlu0 %v2713
        %v2715 = vpop.xlane.xlu0 %2714
        %v2716 = vsel %vm953, %v2616, -inf
        %2717 = vmax.xlane.f32.xlu0 %v2716
        %v2718 = vpop.xlane.xlu0 %2717
        %v2719 = vsel %vm953, %v2618, -inf
        %2720 = vmax.xlane.f32.xlu0 %v2719
        %v2721 = vpop.xlane.xlu0 %2720
        %v2722 = vsel %vm953, %v2650, -inf
        %2723 = vmax.xlane.f32.xlu0 %v2722
        %v2724 = vpop.xlane.xlu0 %2723
        %v2725 = vsel %vm953, %v2652, -inf
        %2726 = vmax.xlane.f32.xlu0 %v2725
        %v2727 = vpop.xlane.xlu0 %2726
        %v2728 = vsel %vm953, %v2655, -inf
        %2729 = vmax.xlane.f32.xlu0 %v2728
        %v2730 = vpop.xlane.xlu0 %2729
        %v2731 = vsel %vm953, %v2657, -inf
        %2732 = vmax.xlane.f32.xlu0 %v2731
        %v2733 = vpop.xlane.xlu0 %2732
        %v2734 = vsel %vm953, %v2689, -inf
        %2735 = vmax.xlane.f32.xlu0 %v2734
        %v2736 = vpop.xlane.xlu0 %2735
        %v2737 = vsel %vm953, %v2691, -inf
        %2738 = vmax.xlane.f32.xlu0 %v2737
        %v2739 = vpop.xlane.xlu0 %2738
        %v2740 = vsel %vm953, %v2694, -inf
        %2741 = vmax.xlane.f32.xlu0 %v2740
        %v2742 = vpop.xlane.xlu0 %2741
        %v2743 = vsel %vm953, %v2696, -inf
        %2744 = vmax.xlane.f32.xlu0 %v2743
        %v2745 = vpop.xlane.xlu0 %2744
        %v2746 = vsub.f32 %v2572, %v2700
        %v2747 = vsub.f32 %v2574, %v2703
        %v2748 = vsub.f32 %v2577, %v2706
        %v2749 = vsub.f32 %v2579, %v2709
        %v2750 = vsub.f32 %v2611, %v2712
        %v2751 = vsub.f32 %v2613, %v2715
        %v2752 = vsub.f32 %v2616, %v2718
        %v2753 = vsub.f32 %v2618, %v2721
        %v2754 = vsub.f32 %v2650, %v2724
        %v2755 = vsub.f32 %v2652, %v2727
        %v2756 = vsub.f32 %v2655, %v2730
        %v2757 = vsub.f32 %v2657, %v2733
        %v2758 = vsub.f32 %v2689, %v2736
        %v2759 = vsub.f32 %v2691, %v2739
        %v2760 = vsub.f32 %v2694, %v2742
        %v2761 = vsub.f32 %v2696, %v2745
        %v2762 = vmul.f32 %v2746, 1.442695
        %v2763 = vpow.pop %v2762
        %v2764 = vmul.f32 %v2747, 1.442695
        %v2765 = vpow.pop %v2764
        %v2766 = vmul.f32 %v2748, 1.442695
        %v2767 = vpow.pop %v2766
        %v2768 = vmul.f32 %v2749, 1.442695
        %v2769 = vpow.pop %v2768
        %v2770 = vmul.f32 %v2750, 1.442695
        %v2771 = vpow.pop %v2770
        %v2772 = vmul.f32 %v2751, 1.442695
        %v2773 = vpow.pop %v2772
        %v2774 = vmul.f32 %v2752, 1.442695
        %v2775 = vpow.pop %v2774
        %v2776 = vmul.f32 %v2753, 1.442695
        %v2777 = vpow.pop %v2776
        %v2778 = vmul.f32 %v2754, 1.442695
        %v2779 = vpow.pop %v2778
        %v2780 = vmul.f32 %v2755, 1.442695
        %v2781 = vpow.pop %v2780
        %v2782 = vmul.f32 %v2756, 1.442695
        %v2783 = vpow.pop %v2782
        %v2784 = vmul.f32 %v2757, 1.442695
        %v2785 = vpow.pop %v2784
        %v2786 = vmul.f32 %v2758, 1.442695
        %v2787 = vpow.pop %v2786
        %v2788 = vmul.f32 %v2759, 1.442695
        %v2789 = vpow.pop %v2788
        %v2790 = vmul.f32 %v2760, 1.442695
        %v2791 = vpow.pop %v2790
        %v2792 = vmul.f32 %v2761, 1.442695
        %v2793 = vpow.pop %v2792
        %v2794 = vsel %vm953, %v2763, 0.0
        %2795 = vadd.xlane.f32.xlu0 %v2794
        %v2796 = vpop.xlane.xlu0 %2795
        %v2797 = vsel %vm953, %v2765, 0.0
        %2798 = vadd.xlane.f32.xlu0 %v2797
        %v2799 = vpop.xlane.xlu0 %2798
        %v2800 = vsel %vm953, %v2767, 0.0
        %2801 = vadd.xlane.f32.xlu0 %v2800
        %v2802 = vpop.xlane.xlu0 %2801
        %v2803 = vsel %vm953, %v2769, 0.0
        %2804 = vadd.xlane.f32.xlu0 %v2803
        %v2805 = vpop.xlane.xlu0 %2804
        %v2806 = vsel %vm953, %v2771, 0.0
        %2807 = vadd.xlane.f32.xlu0 %v2806
        %v2808 = vpop.xlane.xlu0 %2807
        %v2809 = vsel %vm953, %v2773, 0.0
        %2810 = vadd.xlane.f32.xlu0 %v2809
        %v2811 = vpop.xlane.xlu0 %2810
        %v2812 = vsel %vm953, %v2775, 0.0
        %2813 = vadd.xlane.f32.xlu0 %v2812
        %v2814 = vpop.xlane.xlu0 %2813
        %v2815 = vsel %vm953, %v2777, 0.0
        %2816 = vadd.xlane.f32.xlu0 %v2815
        %v2817 = vpop.xlane.xlu0 %2816
        %v2818 = vsel %vm953, %v2779, 0.0
        %2819 = vadd.xlane.f32.xlu0 %v2818
        %v2820 = vpop.xlane.xlu0 %2819
        %v2821 = vsel %vm953, %v2781, 0.0
        %2822 = vadd.xlane.f32.xlu0 %v2821
        %v2823 = vpop.xlane.xlu0 %2822
        %v2824 = vsel %vm953, %v2783, 0.0
        %2825 = vadd.xlane.f32.xlu0 %v2824
        %v2826 = vpop.xlane.xlu0 %2825
        %v2827 = vsel %vm953, %v2785, 0.0
        %2828 = vadd.xlane.f32.xlu0 %v2827
        %v2829 = vpop.xlane.xlu0 %2828
        %v2830 = vsel %vm953, %v2787, 0.0
        %2831 = vadd.xlane.f32.xlu0 %v2830
        %v2832 = vpop.xlane.xlu0 %2831
        %v2833 = vsel %vm953, %v2789, 0.0
        %2834 = vadd.xlane.f32.xlu0 %v2833
        %v2835 = vpop.xlane.xlu0 %2834
        %v2836 = vsel %vm953, %v2791, 0.0
        %2837 = vadd.xlane.f32.xlu0 %v2836
        %v2838 = vpop.xlane.xlu0 %2837
        %v2839 = vsel %vm953, %v2793, 0.0
        %2840 = vadd.xlane.f32.xlu0 %v2839
        %v2841 = vpop.xlane.xlu0 %2840
        %v2842 = vrcp.pop %v2796
        %v2843 = vrcp.pop %v2799
        %v2844 = vrcp.pop %v2802
        %v2845 = vrcp.pop %v2805
        %v2846 = vrcp.pop %v2808
        %v2847 = vrcp.pop %v2811
        %v2848 = vrcp.pop %v2814
        %v2849 = vrcp.pop %v2817
        %v2850 = vrcp.pop %v2820
        %v2851 = vrcp.pop %v2823
        %v2852 = vrcp.pop %v2826
        %v2853 = vrcp.pop %v2829
        %v2854 = vrcp.pop %v2832
        %v2855 = vrcp.pop %v2835
        %v2856 = vrcp.pop %v2838
        %v2857 = vrcp.pop %v2841
        %v2858 = vmul.f32 %v2763, %v2842
        %v2859 = vmul.f32 %v2765, %v2843
        %v2860 = vmul.f32 %v2767, %v2844
        %v2861 = vmul.f32 %v2769, %v2845
        %v2862 = vmul.f32 %v2771, %v2846
        %v2863 = vmul.f32 %v2773, %v2847
        %v2864 = vmul.f32 %v2775, %v2848
        %v2865 = vmul.f32 %v2777, %v2849
        %v2866 = vmul.f32 %v2779, %v2850
        %v2867 = vmul.f32 %v2781, %v2851
        %v2868 = vmul.f32 %v2783, %v2852
        %v2869 = vmul.f32 %v2785, %v2853
        %v2870 = vmul.f32 %v2787, %v2854
        %v2871 = vmul.f32 %v2789, %v2855
        %v2872 = vmul.f32 %v2791, %v2856
        %v2873 = vmul.f32 %v2793, %v2857
        %v2874 = vpack.c.bf16 %v2858, %v2858
        %v2875 = vpack.c.bf16 %v2859, %v2859
        %v2876 = vpack.c.bf16 %v2860, %v2860
        %v2877 = vpack.c.bf16 %v2861, %v2861
        %v2878 = vpack.c.bf16 %v2862, %v2862
        %v2879 = vpack.c.bf16 %v2863, %v2863
        %v2880 = vpack.c.bf16 %v2864, %v2864
        %v2881 = vpack.c.bf16 %v2865, %v2865
        %v2882 = vpack.c.bf16 %v2866, %v2866
        %v2883 = vpack.c.bf16 %v2867, %v2867
        %v2884 = vpack.c.bf16 %v2868, %v2868
        %v2885 = vpack.c.bf16 %v2869, %v2869
        %v2886 = vpack.c.bf16 %v2870, %v2870
        %v2887 = vpack.c.bf16 %v2871, %v2871
        %v2888 = vpack.c.bf16 %v2872, %v2872
        %v2889 = vpack.c.bf16 %v2873, %v2873
        %v2894 = vunpack.c.l.b16 %v2874
        %v2895 = vunpack.c.l.b16 %v2875
        %v2896 = vunpack.c.l.b16 %v2876
        %v2897 = vunpack.c.l.b16 %v2877
        %v2898 = vpack.c.b16 %v2895, %v2894
        %v2899 = vpack.c.b16 %v2897, %v2896
        %2900 = vrot.lane.b32.xlu0 %v1348, 32
        %v2901 = vpop.permute.xlu0 %2900
        %2902 = vrot.lane.b32.xlu0 %v1349, 32
        %v2903 = vpop.permute.xlu0 %2902
        %v2907 = vsel %vm953, %v2898, 0
        %v2910 = vsel %vm953, %v2899, 0
        %2912 = vmatpush.bf16.msra.mxu0 0
        %2913 = vmatpush.bf16.msra.mxu0 0
        %2914 = vmatpush.bf16.msra.mxu0 0
        %2915 = vmatpush.bf16.msra.mxu0 0
        %2916 = vmatpush.bf16.msra.mxu0 0
        %2917 = vmatpush.bf16.msra.mxu0 0
        %2918 = vmatpush.bf16.msra.mxu0 %v2903
        %2919 = vmatpush.bf16.msra.mxu0 %v2901
        %2920 = vmatmul.bf16.gmra.mxu0 %v2907
        %v2921 = vpop.f32.mrf.mxu0
        %v2922 = vadd.f32 0.0, %v2921
        %v2923 = vpop.f32.mrf.mxu0
        %v2924 = vadd.f32 0.0, %v2923
        %2925 = vmatmul.bf16.gmra.mxu0 %v2910
        %v2926 = vpop.f32.mrf.mxu0
        %v2927 = vadd.f32 0.0, %v2926
        %v2928 = vpop.f32.mrf.mxu0
        %v2929 = vadd.f32 0.0, %v2928
        %2930 = vdwg.mxu0
        %v2935 = vunpack.c.l.b16 %v2878
        %v2936 = vunpack.c.l.b16 %v2879
        %v2937 = vunpack.c.l.b16 %v2880
        %v2938 = vunpack.c.l.b16 %v2881
        %v2939 = vpack.c.b16 %v2936, %v2935
        %v2940 = vpack.c.b16 %v2938, %v2937
        %2941 = vrot.lane.b32.xlu0 %v1395, 32
        %v2942 = vpop.permute.xlu0 %2941
        %2943 = vrot.lane.b32.xlu0 %v1396, 32
        %v2944 = vpop.permute.xlu0 %2943
        %v2948 = vsel %vm953, %v2939, 0
        %v2951 = vsel %vm953, %v2940, 0
        %2953 = vmatpush.bf16.msra.mxu0 0
        %2954 = vmatpush.bf16.msra.mxu0 0
        %2955 = vmatpush.bf16.msra.mxu0 0
        %2956 = vmatpush.bf16.msra.mxu0 0
        %2957 = vmatpush.bf16.msra.mxu0 0
        %2958 = vmatpush.bf16.msra.mxu0 0
        %2959 = vmatpush.bf16.msra.mxu0 %v2944
        %2960 = vmatpush.bf16.msra.mxu0 %v2942
        %2961 = vmatmul.bf16.gmra.mxu0 %v2948
        %v2962 = vpop.f32.mrf.mxu0
        %v2963 = vadd.f32 0.0, %v2962
        %v2964 = vpop.f32.mrf.mxu0
        %v2965 = vadd.f32 0.0, %v2964
        %2966 = vmatmul.bf16.gmra.mxu0 %v2951
        %v2967 = vpop.f32.mrf.mxu0
        %v2968 = vadd.f32 0.0, %v2967
        %v2969 = vpop.f32.mrf.mxu0
        %v2970 = vadd.f32 0.0, %v2969
        %2971 = vdwg.mxu0
        %v2976 = vunpack.c.l.b16 %v2882
        %v2977 = vunpack.c.l.b16 %v2883
        %v2978 = vunpack.c.l.b16 %v2884
        %v2979 = vunpack.c.l.b16 %v2885
        %v2980 = vpack.c.b16 %v2977, %v2976
        %v2981 = vpack.c.b16 %v2979, %v2978
        %2982 = vrot.lane.b32.xlu0 %v1442, 32
        %v2983 = vpop.permute.xlu0 %2982
        %2984 = vrot.lane.b32.xlu0 %v1443, 32
        %v2985 = vpop.permute.xlu0 %2984
        %v2989 = vsel %vm953, %v2980, 0
        %v2992 = vsel %vm953, %v2981, 0
        %2994 = vmatpush.bf16.msra.mxu0 0
        %2995 = vmatpush.bf16.msra.mxu0 0
        %2996 = vmatpush.bf16.msra.mxu0 0
        %2997 = vmatpush.bf16.msra.mxu0 0
        %2998 = vmatpush.bf16.msra.mxu0 0
        %2999 = vmatpush.bf16.msra.mxu0 0
        %3000 = vmatpush.bf16.msra.mxu0 %v2985
        %3001 = vmatpush.bf16.msra.mxu0 %v2983
        %3002 = vmatmul.bf16.gmra.mxu0 %v2989
        %v3003 = vpop.f32.mrf.mxu0
        %v3004 = vadd.f32 0.0, %v3003
        %v3005 = vpop.f32.mrf.mxu0
        %v3006 = vadd.f32 0.0, %v3005
        %3007 = vmatmul.bf16.gmra.mxu0 %v2992
        %v3008 = vpop.f32.mrf.mxu0
        %v3009 = vadd.f32 0.0, %v3008
        %v3010 = vpop.f32.mrf.mxu0
        %v3011 = vadd.f32 0.0, %v3010
        %3012 = vdwg.mxu0
        %v3017 = vunpack.c.l.b16 %v2886
        %v3018 = vunpack.c.l.b16 %v2887
        %v3019 = vunpack.c.l.b16 %v2888
        %v3020 = vunpack.c.l.b16 %v2889
        %v3021 = vpack.c.b16 %v3018, %v3017
        %v3022 = vpack.c.b16 %v3020, %v3019
        %3023 = vrot.lane.b32.xlu0 %v1489, 32
        %v3024 = vpop.permute.xlu0 %3023
        %3025 = vrot.lane.b32.xlu0 %v1490, 32
        %v3026 = vpop.permute.xlu0 %3025
        %v3030 = vsel %vm953, %v3021, 0
        %v3033 = vsel %vm953, %v3022, 0
        %3035 = vmatpush.bf16.msra.mxu0 0
        %3036 = vmatpush.bf16.msra.mxu0 0
        %3037 = vmatpush.bf16.msra.mxu0 0
        %3038 = vmatpush.bf16.msra.mxu0 0
        %3039 = vmatpush.bf16.msra.mxu0 0
        %3040 = vmatpush.bf16.msra.mxu0 0
        %3041 = vmatpush.bf16.msra.mxu0 %v3026
        %3042 = vmatpush.bf16.msra.mxu0 %v3024
        %3043 = vmatmul.bf16.gmra.mxu0 %v3030
        %v3044 = vpop.f32.mrf.mxu0
        %v3045 = vadd.f32 0.0, %v3044
        %v3046 = vpop.f32.mrf.mxu0
        %v3047 = vadd.f32 0.0, %v3046
        %3048 = vmatmul.bf16.gmra.mxu0 %v3033
        %v3049 = vpop.f32.mrf.mxu0
        %v3050 = vadd.f32 0.0, %v3049
        %v3051 = vpop.f32.mrf.mxu0
        %v3052 = vadd.f32 0.0, %v3051
        %3053 = vdwg.mxu0
        %3070 = vrot.lane.b32.xlu0 %v1898, 32
        %v3071 = vpop.permute.xlu0 %3070
        %3072 = vrot.lane.b32.xlu0 %v1900, 32
        %v3073 = vpop.permute.xlu0 %3072
        %3074 = vrot.lane.b32.xlu0 %v1903, 32
        %v3075 = vpop.permute.xlu0 %3074
        %3076 = vrot.lane.b32.xlu0 %v1905, 32
        %v3077 = vpop.permute.xlu0 %3076
        %3078 = vrot.lane.b32.xlu0 %v1939, 32
        %v3079 = vpop.permute.xlu0 %3078
        %3080 = vrot.lane.b32.xlu0 %v1941, 32
        %v3081 = vpop.permute.xlu0 %3080
        %3082 = vrot.lane.b32.xlu0 %v1944, 32
        %v3083 = vpop.permute.xlu0 %3082
        %3084 = vrot.lane.b32.xlu0 %v1946, 32
        %v3085 = vpop.permute.xlu0 %3084
        %3086 = vrot.lane.b32.xlu0 %v1980, 32
        %v3087 = vpop.permute.xlu0 %3086
        %3088 = vrot.lane.b32.xlu0 %v1982, 32
        %v3089 = vpop.permute.xlu0 %3088
        %3090 = vrot.lane.b32.xlu0 %v1985, 32
        %v3091 = vpop.permute.xlu0 %3090
        %3092 = vrot.lane.b32.xlu0 %v1987, 32
        %v3093 = vpop.permute.xlu0 %3092
        %3094 = vrot.lane.b32.xlu0 %v2021, 32
        %v3095 = vpop.permute.xlu0 %3094
        %3096 = vrot.lane.b32.xlu0 %v2023, 32
        %v3097 = vpop.permute.xlu0 %3096
        %3098 = vrot.lane.b32.xlu0 %v2026, 32
        %v3099 = vpop.permute.xlu0 %3098
        %3100 = vrot.lane.b32.xlu0 %v2028, 32
        %v3101 = vpop.permute.xlu0 %3100
        %3134 = vrot.lane.b32.xlu0 %v2410, 64
        %v3135 = vpop.permute.xlu0 %3134
        %3136 = vrot.lane.b32.xlu0 %v2412, 64
        %v3137 = vpop.permute.xlu0 %3136
        %3138 = vrot.lane.b32.xlu0 %v2415, 64
        %v3139 = vpop.permute.xlu0 %3138
        %3140 = vrot.lane.b32.xlu0 %v2417, 64
        %v3141 = vpop.permute.xlu0 %3140
        %3142 = vrot.lane.b32.xlu0 %v2451, 64
        %v3143 = vpop.permute.xlu0 %3142
        %3144 = vrot.lane.b32.xlu0 %v2453, 64
        %v3145 = vpop.permute.xlu0 %3144
        %3146 = vrot.lane.b32.xlu0 %v2456, 64
        %v3147 = vpop.permute.xlu0 %3146
        %3148 = vrot.lane.b32.xlu0 %v2458, 64
        %v3149 = vpop.permute.xlu0 %3148
        %3150 = vrot.lane.b32.xlu0 %v2492, 64
        %v3151 = vpop.permute.xlu0 %3150
        %3152 = vrot.lane.b32.xlu0 %v2494, 64
        %v3153 = vpop.permute.xlu0 %3152
        %3154 = vrot.lane.b32.xlu0 %v2497, 64
        %v3155 = vpop.permute.xlu0 %3154
        %3156 = vrot.lane.b32.xlu0 %v2499, 64
        %v3157 = vpop.permute.xlu0 %3156
        %3158 = vrot.lane.b32.xlu0 %v2533, 64
        %v3159 = vpop.permute.xlu0 %3158
        %3160 = vrot.lane.b32.xlu0 %v2535, 64
        %v3161 = vpop.permute.xlu0 %3160
        %3162 = vrot.lane.b32.xlu0 %v2538, 64
        %v3163 = vpop.permute.xlu0 %3162
        %3164 = vrot.lane.b32.xlu0 %v2540, 64
        %v3165 = vpop.permute.xlu0 %3164
        %3198 = vrot.lane.b32.xlu0 %v2922, 96
        %v3199 = vpop.permute.xlu0 %3198
        %3200 = vrot.lane.b32.xlu0 %v2924, 96
        %v3201 = vpop.permute.xlu0 %3200
        %3202 = vrot.lane.b32.xlu0 %v2927, 96
        %v3203 = vpop.permute.xlu0 %3202
        %3204 = vrot.lane.b32.xlu0 %v2929, 96
        %v3205 = vpop.permute.xlu0 %3204
        %3206 = vrot.lane.b32.xlu0 %v2963, 96
        %v3207 = vpop.permute.xlu0 %3206
        %3208 = vrot.lane.b32.xlu0 %v2965, 96
        %v3209 = vpop.permute.xlu0 %3208
        %3210 = vrot.lane.b32.xlu0 %v2968, 96
        %v3211 = vpop.permute.xlu0 %3210
        %3212 = vrot.lane.b32.xlu0 %v2970, 96
        %v3213 = vpop.permute.xlu0 %3212
        %3214 = vrot.lane.b32.xlu0 %v3004, 96
        %v3215 = vpop.permute.xlu0 %3214
        %3216 = vrot.lane.b32.xlu0 %v3006, 96
        %v3217 = vpop.permute.xlu0 %3216
        %3218 = vrot.lane.b32.xlu0 %v3009, 96
        %v3219 = vpop.permute.xlu0 %3218
        %3220 = vrot.lane.b32.xlu0 %v3011, 96
        %v3221 = vpop.permute.xlu0 %3220
        %3222 = vrot.lane.b32.xlu0 %v3045, 96
        %v3223 = vpop.permute.xlu0 %3222
        %3224 = vrot.lane.b32.xlu0 %v3047, 96
        %v3225 = vpop.permute.xlu0 %3224
        %3226 = vrot.lane.b32.xlu0 %v3050, 96
        %v3227 = vpop.permute.xlu0 %3226
        %3228 = vrot.lane.b32.xlu0 %v3052, 96
        %v3229 = vpop.permute.xlu0 %3228
        %v3246 = vsel %vm953, %v1368, %v3071
        %v3247 = vsel %vm953, %v1370, %v3073
        %v3248 = vsel %vm953, %v1373, %v3075
        %v3249 = vsel %vm953, %v1375, %v3077
        %v3250 = vsel %vm953, %v1415, %v3079
        %v3251 = vsel %vm953, %v1417, %v3081
        %v3252 = vsel %vm953, %v1420, %v3083
        %v3253 = vsel %vm953, %v1422, %v3085
        %v3254 = vsel %vm953, %v1462, %v3087
        %v3255 = vsel %vm953, %v1464, %v3089
        %v3256 = vsel %vm953, %v1467, %v3091
        %v3257 = vsel %vm953, %v1469, %v3093
        %v3258 = vsel %vm953, %v1509, %v3095
        %v3259 = vsel %vm953, %v1511, %v3097
        %v3260 = vsel %vm953, %v1514, %v3099
        %v3261 = vsel %vm953, %v1516, %v3101
        %vm3262 = vcmask 523264
        %v3263 = vsel %vm3262, %v3246, %v3135
        %v3264 = vsel %vm3262, %v3247, %v3137
        %v3265 = vsel %vm3262, %v3248, %v3139
        %v3266 = vsel %vm3262, %v3249, %v3141
        %v3267 = vsel %vm3262, %v3250, %v3143
        %v3268 = vsel %vm3262, %v3251, %v3145
        %v3269 = vsel %vm3262, %v3252, %v3147
        %v3270 = vsel %vm3262, %v3253, %v3149
        %v3271 = vsel %vm3262, %v3254, %v3151
        %v3272 = vsel %vm3262, %v3255, %v3153
        %v3273 = vsel %vm3262, %v3256, %v3155
        %v3274 = vsel %vm3262, %v3257, %v3157
        %v3275 = vsel %vm3262, %v3258, %v3159
        %v3276 = vsel %vm3262, %v3259, %v3161
        %v3277 = vsel %vm3262, %v3260, %v3163
        %v3278 = vsel %vm3262, %v3261, %v3165
        %vm3279 = vcmask 785408
        %v3280 = vsel %vm3279, %v3263, %v3199
        %v3281 = vsel %vm3279, %v3264, %v3201
        %v3282 = vsel %vm3279, %v3265, %v3203
        %v3283 = vsel %vm3279, %v3266, %v3205
        %v3284 = vsel %vm3279, %v3267, %v3207
        %v3285 = vsel %vm3279, %v3268, %v3209
        %v3286 = vsel %vm3279, %v3269, %v3211
        %v3287 = vsel %vm3279, %v3270, %v3213
        %v3288 = vsel %vm3279, %v3271, %v3215
        %v3289 = vsel %vm3279, %v3272, %v3217
        %v3290 = vsel %vm3279, %v3273, %v3219
        %v3291 = vsel %vm3279, %v3274, %v3221
        %v3292 = vsel %vm3279, %v3275, %v3223
        %v3293 = vsel %vm3279, %v3276, %v3225
        %v3294 = vsel %vm3279, %v3277, %v3227
        %v3295 = vsel %vm3279, %v3278, %v3229
        %v3296 = vpack.c.bf16 %v3281, %v3280
        %v3297 = vpack.c.bf16 %v3283, %v3282
        %v3298 = vpack.c.bf16 %v3285, %v3284
        %v3299 = vpack.c.bf16 %v3287, %v3286
        %v3300 = vpack.c.bf16 %v3289, %v3288
        %v3301 = vpack.c.bf16 %v3291, %v3290
        %v3302 = vpack.c.bf16 %v3293, %v3292
        %v3303 = vpack.c.bf16 %v3295, %v3294
        %v3304 = vld [vmem:[#allocation8] sm:$0xf]
        %v3305 = vld [vmem:[#allocation8 + $0x4] sm:$0xf]
        %v3306 = vld [vmem:[#allocation8 + $0x8] sm:$0xf]
        %v3307 = vld [vmem:[#allocation8 + $0xc] sm:$0xf]
        %v3308 = vld [vmem:[#allocation8 + $0x10] sm:$0xf]
        %v3309 = vld [vmem:[#allocation8 + $0x14] sm:$0xf]
        %v3310 = vld [vmem:[#allocation8 + $0x18] sm:$0xf]
        %v3311 = vld [vmem:[#allocation8 + $0x1c] sm:$0xf]
        %v3312 = vld [vmem:[#allocation8 + $0x20] sm:$0xf]
        %v3313 = vld [vmem:[#allocation8 + $0x24] sm:$0xf]
        %v3314 = vld [vmem:[#allocation8 + $0x28] sm:$0xf]
        %v3315 = vld [vmem:[#allocation8 + $0x2c] sm:$0xf]
        %v3316 = vld [vmem:[#allocation8 + $0x30] sm:$0xf]
        %v3317 = vld [vmem:[#allocation8 + $0x34] sm:$0xf]
        %v3318 = vld [vmem:[#allocation8 + $0x38] sm:$0xf]
        %v3319 = vld [vmem:[#allocation8 + $0x3c] sm:$0xf]
        %v3320 = vld [vmem:[%s4] sm:$0x1]
        %v3322 = vperm.slane %v3320, 0
        %v3340 = vunpack.c.l.b16 %v3304
        %v3341 = vunpack.c.l.b16 %v3305
        %v3342 = vunpack.c.l.b16 %v3306
        %v3343 = vunpack.c.l.b16 %v3307
        %v3344 = vunpack.c.l.b16 %v3308
        %v3345 = vunpack.c.l.b16 %v3309
        %v3346 = vunpack.c.l.b16 %v3310
        %v3347 = vunpack.c.l.b16 %v3311
        %v3348 = vunpack.c.l.b16 %v3312
        %v3349 = vunpack.c.l.b16 %v3313
        %v3350 = vunpack.c.l.b16 %v3314
        %v3351 = vunpack.c.l.b16 %v3315
        %v3352 = vunpack.c.l.b16 %v3316
        %v3353 = vunpack.c.l.b16 %v3317
        %v3354 = vunpack.c.l.b16 %v3318
        %v3355 = vunpack.c.l.b16 %v3319
        %v3356 = vpack.c.b16 %v3341, %v3340
        %v3357 = vpack.c.b16 %v3343, %v3342
        %v3358 = vpack.c.b16 %v3345, %v3344
        %v3359 = vpack.c.b16 %v3347, %v3346
        %v3360 = vpack.c.b16 %v3349, %v3348
        %v3361 = vpack.c.b16 %v3351, %v3350
        %v3362 = vpack.c.b16 %v3353, %v3352
        %v3363 = vpack.c.b16 %v3355, %v3354
        %3372 = vmatpush.bf16.msra.mxu0 %v3363
        %3373 = vmatpush.bf16.msra.mxu0 %v3362
        %3374 = vmatpush.bf16.msra.mxu0 %v3361
        %3375 = vmatpush.bf16.msra.mxu0 %v3360
        %3376 = vmatpush.bf16.msra.mxu0 %v3359
        %3377 = vmatpush.bf16.msra.mxu0 %v3358
        %3378 = vmatpush.bf16.msra.mxu0 %v3357
        %3379 = vmatpush.bf16.msra.mxu0 %v3356
        %3380 = vmatmul.bf16.gmra.mxu0 %v3296
        %v3381 = vpop.f32.mrf.mxu0
        %v3382 = vadd.f32 %v3322, %v3381
        %v3383 = vpop.f32.mrf.mxu0
        %v3384 = vadd.f32 %v3322, %v3383
        %3385 = vmatmul.bf16.gmra.mxu0 %v3297
        %v3386 = vpop.f32.mrf.mxu0
        %v3387 = vadd.f32 %v3322, %v3386
        %v3388 = vpop.f32.mrf.mxu0
        %v3389 = vadd.f32 %v3322, %v3388
        %3390 = vmatmul.bf16.gmra.mxu0 %v3298
        %v3391 = vpop.f32.mrf.mxu0
        %v3392 = vadd.f32 %v3322, %v3391
        %v3393 = vpop.f32.mrf.mxu0
        %v3394 = vadd.f32 %v3322, %v3393
        %3395 = vmatmul.bf16.gmra.mxu0 %v3299
        %v3396 = vpop.f32.mrf.mxu0
        %v3397 = vadd.f32 %v3322, %v3396
        %v3398 = vpop.f32.mrf.mxu0
        %v3399 = vadd.f32 %v3322, %v3398
        %3400 = vmatmul.bf16.gmra.mxu0 %v3300
        %v3401 = vpop.f32.mrf.mxu0
        %v3402 = vadd.f32 %v3322, %v3401
        %v3403 = vpop.f32.mrf.mxu0
        %v3404 = vadd.f32 %v3322, %v3403
        %3405 = vmatmul.bf16.gmra.mxu0 %v3301
        %v3406 = vpop.f32.mrf.mxu0
        %v3407 = vadd.f32 %v3322, %v3406
        %v3408 = vpop.f32.mrf.mxu0
        %v3409 = vadd.f32 %v3322, %v3408
        %3410 = vmatmul.bf16.gmra.mxu0 %v3302
        %v3411 = vpop.f32.mrf.mxu0
        %v3412 = vadd.f32 %v3322, %v3411
        %v3413 = vpop.f32.mrf.mxu0
        %v3414 = vadd.f32 %v3322, %v3413
        %3415 = vmatmul.bf16.gmra.mxu0 %v3303
        %v3416 = vpop.f32.mrf.mxu0
        %v3417 = vadd.f32 %v3322, %v3416
        %v3418 = vpop.f32.mrf.mxu0
        %v3419 = vadd.f32 %v3322, %v3418
        %3420 = vdwg.mxu0
        %v3421 = vadd.f32 %v546, %v3382
        %v3422 = vadd.f32 %v547, %v3384
        %v3423 = vadd.f32 %v548, %v3387
        %v3424 = vadd.f32 %v549, %v3389
        %v3425 = vadd.f32 %v550, %v3392
        %v3426 = vadd.f32 %v551, %v3394
        %v3427 = vadd.f32 %v552, %v3397
        %v3428 = vadd.f32 %v553, %v3399
        %v3429 = vadd.f32 %v554, %v3402
        %v3430 = vadd.f32 %v555, %v3404
        %v3431 = vadd.f32 %v556, %v3407
        %v3432 = vadd.f32 %v557, %v3409
        %v3433 = vadd.f32 %v558, %v3412
        %v3434 = vadd.f32 %v559, %v3414
        %v3435 = vadd.f32 %v560, %v3417
        %v3436 = vadd.f32 %v561, %v3419
        %v3437 = vld [vmem:[%s5] sm:$0x1]
        %v3439 = vperm.slane %v3437, 0
        %v3441 = vmul.f32 %v3421, %v3439
        %v3442 = vmul.f32 %v3422, %v3439
        %v3443 = vmul.f32 %v3423, %v3439
        %v3444 = vmul.f32 %v3424, %v3439
        %v3445 = vmul.f32 %v3425, %v3439
        %v3446 = vmul.f32 %v3426, %v3439
        %v3447 = vmul.f32 %v3427, %v3439
        %v3448 = vmul.f32 %v3428, %v3439
        %v3449 = vmul.f32 %v3429, %v3439
        %v3450 = vmul.f32 %v3430, %v3439
        %v3451 = vmul.f32 %v3431, %v3439
        %v3452 = vmul.f32 %v3432, %v3439
        %v3453 = vmul.f32 %v3433, %v3439
        %v3454 = vmul.f32 %v3434, %v3439
        %v3455 = vmul.f32 %v3435, %v3439
        %v3456 = vmul.f32 %v3436, %v3439
        %v3457 = vld [vmem:[%s6] sm:$0x1]
        %v3459 = vperm.slane %v3457, 0
        %v3461 = vadd.f32 %v3441, %v3459
        %v3462 = vadd.f32 %v3442, %v3459
        %v3463 = vadd.f32 %v3443, %v3459
        %v3464 = vadd.f32 %v3444, %v3459
        %v3465 = vadd.f32 %v3445, %v3459
        %v3466 = vadd.f32 %v3446, %v3459
        %v3467 = vadd.f32 %v3447, %v3459
        %v3468 = vadd.f32 %v3448, %v3459
        %v3469 = vadd.f32 %v3449, %v3459
        %v3470 = vadd.f32 %v3450, %v3459
        %v3471 = vadd.f32 %v3451, %v3459
        %v3472 = vadd.f32 %v3452, %v3459
        %v3473 = vadd.f32 %v3453, %v3459
        %v3474 = vadd.f32 %v3454, %v3459
        %v3475 = vadd.f32 %v3455, %v3459
        %v3476 = vadd.f32 %v3456, %v3459
        %v3477 = vpack.c.bf16 %v3462, %v3461
        %v3478 = vpack.c.bf16 %v3464, %v3463
        %v3479 = vpack.c.bf16 %v3466, %v3465
        %v3480 = vpack.c.bf16 %v3468, %v3467
        %v3481 = vpack.c.bf16 %v3470, %v3469
        %v3482 = vpack.c.bf16 %v3472, %v3471
        %v3483 = vpack.c.bf16 %v3474, %v3473
        %v3484 = vpack.c.bf16 %v3476, %v3475
        %v3485 = vld [vmem:[#allocation10] sm:$0xff]
        %v3486 = vld [vmem:[#allocation10 + $0x8] sm:$0xff]
        %v3487 = vld [vmem:[#allocation10 + $0x10] sm:$0xff]
        %v3488 = vld [vmem:[#allocation10 + $0x18] sm:$0xff]
        %v3489 = vld [vmem:[#allocation10 + $0x20] sm:$0xff]
        %v3490 = vld [vmem:[#allocation10 + $0x28] sm:$0xff]
        %v3491 = vld [vmem:[#allocation10 + $0x30] sm:$0xff]
        %v3492 = vld [vmem:[#allocation10 + $0x38] sm:$0xff]
        %v3493 = vld [vmem:[#allocation10 + $0x40] sm:$0xff]
        %v3494 = vld [vmem:[#allocation10 + $0x48] sm:$0xff]
        %v3495 = vld [vmem:[#allocation10 + $0x50] sm:$0xff]
        %v3496 = vld [vmem:[#allocation10 + $0x58] sm:$0xff]
        %v3497 = vld [vmem:[#allocation10 + $0x60] sm:$0xff]
        %v3498 = vld [vmem:[#allocation10 + $0x68] sm:$0xff]
        %v3499 = vld [vmem:[#allocation10 + $0x70] sm:$0xff]
        %v3500 = vld [vmem:[#allocation10 + $0x78] sm:$0xff]
        %v3501 = vld [vmem:[%s8] sm:$0x3]
        %v3503 = vperm.slane %v3501, 0
        %v3504 = vperm.slane %v3501, 1
        %v3523 = vunpack.c.l.b16 %v3485
        %v3524 = vunpack.c.h.b16 %v3485
        %v3525 = vunpack.c.l.b16 %v3486
        %v3526 = vunpack.c.h.b16 %v3486
        %v3527 = vunpack.c.l.b16 %v3487
        %v3528 = vunpack.c.h.b16 %v3487
        %v3529 = vunpack.c.l.b16 %v3488
        %v3530 = vunpack.c.h.b16 %v3488
        %v3531 = vunpack.c.l.b16 %v3489
        %v3532 = vunpack.c.h.b16 %v3489
        %v3533 = vunpack.c.l.b16 %v3490
        %v3534 = vunpack.c.h.b16 %v3490
        %v3535 = vunpack.c.l.b16 %v3491
        %v3536 = vunpack.c.h.b16 %v3491
        %v3537 = vunpack.c.l.b16 %v3492
        %v3538 = vunpack.c.h.b16 %v3492
        %v3539 = vunpack.c.l.b16 %v3493
        %v3540 = vunpack.c.h.b16 %v3493
        %v3541 = vunpack.c.l.b16 %v3494
        %v3542 = vunpack.c.h.b16 %v3494
        %v3543 = vunpack.c.l.b16 %v3495
        %v3544 = vunpack.c.h.b16 %v3495
        %v3545 = vunpack.c.l.b16 %v3496
        %v3546 = vunpack.c.h.b16 %v3496
        %v3547 = vunpack.c.l.b16 %v3497
        %v3548 = vunpack.c.h.b16 %v3497
        %v3549 = vunpack.c.l.b16 %v3498
        %v3550 = vunpack.c.h.b16 %v3498
        %v3551 = vunpack.c.l.b16 %v3499
        %v3552 = vunpack.c.h.b16 %v3499
        %v3553 = vunpack.c.l.b16 %v3500
        %v3554 = vunpack.c.h.b16 %v3500
        %v3555 = vpack.c.b16 %v3525, %v3523
        %v3556 = vpack.c.b16 %v3526, %v3524
        %v3557 = vpack.c.b16 %v3529, %v3527
        %v3558 = vpack.c.b16 %v3530, %v3528
        %v3559 = vpack.c.b16 %v3533, %v3531
        %v3560 = vpack.c.b16 %v3534, %v3532
        %v3561 = vpack.c.b16 %v3537, %v3535
        %v3562 = vpack.c.b16 %v3538, %v3536
        %v3563 = vpack.c.b16 %v3541, %v3539
        %v3564 = vpack.c.b16 %v3542, %v3540
        %v3565 = vpack.c.b16 %v3545, %v3543
        %v3566 = vpack.c.b16 %v3546, %v3544
        %v3567 = vpack.c.b16 %v3549, %v3547
        %v3568 = vpack.c.b16 %v3550, %v3548
        %v3569 = vpack.c.b16 %v3553, %v3551
        %v3570 = vpack.c.b16 %v3554, %v3552
        %3587 = vmatpush.bf16.msra.mxu0 %v3569
        %3588 = vmatpush.bf16.msra.mxu0 %v3567
        %3589 = vmatpush.bf16.msra.mxu0 %v3565
        %3590 = vmatpush.bf16.msra.mxu0 %v3563
        %3591 = vmatpush.bf16.msra.mxu0 %v3561
        %3592 = vmatpush.bf16.msra.mxu0 %v3559
        %3593 = vmatpush.bf16.msra.mxu0 %v3557
        %3594 = vmatpush.bf16.msra.mxu0 %v3555
        %3595 = vmatmul.bf16.gmra.mxu0 %v3477
        %v3596 = vpop.f32.mrf.mxu0
        %v3597 = vadd.f32 %v3503, %v3596
        %v3598 = vpop.f32.mrf.mxu0
        %v3599 = vadd.f32 %v3503, %v3598
        %3600 = vmatmul.bf16.gmra.mxu0 %v3478
        %v3601 = vpop.f32.mrf.mxu0
        %v3602 = vadd.f32 %v3503, %v3601
        %v3603 = vpop.f32.mrf.mxu0
        %v3604 = vadd.f32 %v3503, %v3603
        %3605 = vmatmul.bf16.gmra.mxu0 %v3479
        %v3606 = vpop.f32.mrf.mxu0
        %v3607 = vadd.f32 %v3503, %v3606
        %v3608 = vpop.f32.mrf.mxu0
        %v3609 = vadd.f32 %v3503, %v3608
        %3610 = vmatmul.bf16.gmra.mxu0 %v3480
        %v3611 = vpop.f32.mrf.mxu0
        %v3612 = vadd.f32 %v3503, %v3611
        %v3613 = vpop.f32.mrf.mxu0
        %v3614 = vadd.f32 %v3503, %v3613
        %3615 = vmatmul.bf16.gmra.mxu0 %v3481
        %v3616 = vpop.f32.mrf.mxu0
        %v3617 = vadd.f32 %v3503, %v3616
        %v3618 = vpop.f32.mrf.mxu0
        %v3619 = vadd.f32 %v3503, %v3618
        %3620 = vmatmul.bf16.gmra.mxu0 %v3482
        %v3621 = vpop.f32.mrf.mxu0
        %v3622 = vadd.f32 %v3503, %v3621
        %v3623 = vpop.f32.mrf.mxu0
        %v3624 = vadd.f32 %v3503, %v3623
        %3625 = vmatmul.bf16.gmra.mxu0 %v3483
        %v3626 = vpop.f32.mrf.mxu0
        %v3627 = vadd.f32 %v3503, %v3626
        %v3628 = vpop.f32.mrf.mxu0
        %v3629 = vadd.f32 %v3503, %v3628
        %3630 = vmatmul.bf16.gmra.mxu0 %v3484
        %v3631 = vpop.f32.mrf.mxu0
        %v3632 = vadd.f32 %v3503, %v3631
        %v3633 = vpop.f32.mrf.mxu0
        %v3634 = vadd.f32 %v3503, %v3633
        %3635 = vdwg.mxu0
        %3636 = vmatpush.bf16.msra.mxu0 %v3570
        %3637 = vmatpush.bf16.msra.mxu0 %v3568
        %3638 = vmatpush.bf16.msra.mxu0 %v3566
        %3639 = vmatpush.bf16.msra.mxu0 %v3564
        %3640 = vmatpush.bf16.msra.mxu0 %v3562
        %3641 = vmatpush.bf16.msra.mxu0 %v3560
        %3642 = vmatpush.bf16.msra.mxu0 %v3558
        %3643 = vmatpush.bf16.msra.mxu0 %v3556
        %3644 = vmatmul.bf16.gmra.mxu0 %v3477
        %v3645 = vpop.f32.mrf.mxu0
        %v3646 = vadd.f32 %v3504, %v3645
        %v3647 = vpop.f32.mrf.mxu0
        %v3648 = vadd.f32 %v3504, %v3647
        %3649 = vmatmul.bf16.gmra.mxu0 %v3478
        %v3650 = vpop.f32.mrf.mxu0
        %v3651 = vadd.f32 %v3504, %v3650
        %v3652 = vpop.f32.mrf.mxu0
        %v3653 = vadd.f32 %v3504, %v3652
        %3654 = vmatmul.bf16.gmra.mxu0 %v3479
        %v3655 = vpop.f32.mrf.mxu0
        %v3656 = vadd.f32 %v3504, %v3655
        %v3657 = vpop.f32.mrf.mxu0
        %v3658 = vadd.f32 %v3504, %v3657
        %3659 = vmatmul.bf16.gmra.mxu0 %v3480
        %v3660 = vpop.f32.mrf.mxu0
        %v3661 = vadd.f32 %v3504, %v3660
        %v3662 = vpop.f32.mrf.mxu0
        %v3663 = vadd.f32 %v3504, %v3662
        %3664 = vmatmul.bf16.gmra.mxu0 %v3481
        %v3665 = vpop.f32.mrf.mxu0
        %v3666 = vadd.f32 %v3504, %v3665
        %v3667 = vpop.f32.mrf.mxu0
        %v3668 = vadd.f32 %v3504, %v3667
        %3669 = vmatmul.bf16.gmra.mxu0 %v3482
        %v3670 = vpop.f32.mrf.mxu0
        %v3671 = vadd.f32 %v3504, %v3670
        %v3672 = vpop.f32.mrf.mxu0
        %v3673 = vadd.f32 %v3504, %v3672
        %3674 = vmatmul.bf16.gmra.mxu0 %v3483
        %v3675 = vpop.f32.mrf.mxu0
        %v3676 = vadd.f32 %v3504, %v3675
        %v3677 = vpop.f32.mrf.mxu0
        %v3678 = vadd.f32 %v3504, %v3677
        %3679 = vmatmul.bf16.gmra.mxu0 %v3484
        %v3680 = vpop.f32.mrf.mxu0
        %v3681 = vadd.f32 %v3504, %v3680
        %v3682 = vpop.f32.mrf.mxu0
        %v3683 = vadd.f32 %v3504, %v3682
        %3684 = vdwg.mxu0
        %v3685 = vmul.f32 %v3597, 0.5
        %v3686 = vmul.f32 %v3646, 0.5
        %v3687 = vmul.f32 %v3599, 0.5
        %v3688 = vmul.f32 %v3648, 0.5
        %v3689 = vmul.f32 %v3602, 0.5
        %v3690 = vmul.f32 %v3651, 0.5
        %v3691 = vmul.f32 %v3604, 0.5
        %v3692 = vmul.f32 %v3653, 0.5
        %v3693 = vmul.f32 %v3607, 0.5
        %v3694 = vmul.f32 %v3656, 0.5
        %v3695 = vmul.f32 %v3609, 0.5
        %v3696 = vmul.f32 %v3658, 0.5
        %v3697 = vmul.f32 %v3612, 0.5
        %v3698 = vmul.f32 %v3661, 0.5
        %v3699 = vmul.f32 %v3614, 0.5
        %v3700 = vmul.f32 %v3663, 0.5
        %v3701 = vmul.f32 %v3617, 0.5
        %v3702 = vmul.f32 %v3666, 0.5
        %v3703 = vmul.f32 %v3619, 0.5
        %v3704 = vmul.f32 %v3668, 0.5
        %v3705 = vmul.f32 %v3622, 0.5
        %v3706 = vmul.f32 %v3671, 0.5
        %v3707 = vmul.f32 %v3624, 0.5
        %v3708 = vmul.f32 %v3673, 0.5
        %v3709 = vmul.f32 %v3627, 0.5
        %v3710 = vmul.f32 %v3676, 0.5
        %v3711 = vmul.f32 %v3629, 0.5
        %v3712 = vmul.f32 %v3678, 0.5
        %v3713 = vmul.f32 %v3632, 0.5
        %v3714 = vmul.f32 %v3681, 0.5
        %v3715 = vmul.f32 %v3634, 0.5
        %v3716 = vmul.f32 %v3683, 0.5
        %v3717 = vmul.f32 %v3597, 0.044715
        %v3718 = vmul.f32 %v3646, 0.044715
        %v3719 = vmul.f32 %v3599, 0.044715
        %v3720 = vmul.f32 %v3648, 0.044715
        %v3721 = vmul.f32 %v3602, 0.044715
        %v3722 = vmul.f32 %v3651, 0.044715
        %v3723 = vmul.f32 %v3604, 0.044715
        %v3724 = vmul.f32 %v3653, 0.044715
        %v3725 = vmul.f32 %v3607, 0.044715
        %v3726 = vmul.f32 %v3656, 0.044715
        %v3727 = vmul.f32 %v3609, 0.044715
        %v3728 = vmul.f32 %v3658, 0.044715
        %v3729 = vmul.f32 %v3612, 0.044715
        %v3730 = vmul.f32 %v3661, 0.044715
        %v3731 = vmul.f32 %v3614, 0.044715
        %v3732 = vmul.f32 %v3663, 0.044715
        %v3733 = vmul.f32 %v3617, 0.044715
        %v3734 = vmul.f32 %v3666, 0.044715
        %v3735 = vmul.f32 %v3619, 0.044715
        %v3736 = vmul.f32 %v3668, 0.044715
        %v3737 = vmul.f32 %v3622, 0.044715
        %v3738 = vmul.f32 %v3671, 0.044715
        %v3739 = vmul.f32 %v3624, 0.044715
        %v3740 = vmul.f32 %v3673, 0.044715
        %v3741 = vmul.f32 %v3627, 0.044715
        %v3742 = vmul.f32 %v3676, 0.044715
        %v3743 = vmul.f32 %v3629, 0.044715
        %v3744 = vmul.f32 %v3678, 0.044715
        %v3745 = vmul.f32 %v3632, 0.044715
        %v3746 = vmul.f32 %v3681, 0.044715
        %v3747 = vmul.f32 %v3634, 0.044715
        %v3748 = vmul.f32 %v3683, 0.044715
        %v3749 = vmul.f32 %v3717, %v3597
        %v3750 = vmul.f32 %v3718, %v3646
        %v3751 = vmul.f32 %v3719, %v3599
        %v3752 = vmul.f32 %v3720, %v3648
        %v3753 = vmul.f32 %v3721, %v3602
        %v3754 = vmul.f32 %v3722, %v3651
        %v3755 = vmul.f32 %v3723, %v3604
        %v3756 = vmul.f32 %v3724, %v3653
        %v3757 = vmul.f32 %v3725, %v3607
        %v3758 = vmul.f32 %v3726, %v3656
        %v3759 = vmul.f32 %v3727, %v3609
        %v3760 = vmul.f32 %v3728, %v3658
        %v3761 = vmul.f32 %v3729, %v3612
        %v3762 = vmul.f32 %v3730, %v3661
        %v3763 = vmul.f32 %v3731, %v3614
        %v3764 = vmul.f32 %v3732, %v3663
        %v3765 = vmul.f32 %v3733, %v3617
        %v3766 = vmul.f32 %v3734, %v3666
        %v3767 = vmul.f32 %v3735, %v3619
        %v3768 = vmul.f32 %v3736, %v3668
        %v3769 = vmul.f32 %v3737, %v3622
        %v3770 = vmul.f32 %v3738, %v3671
        %v3771 = vmul.f32 %v3739, %v3624
        %v3772 = vmul.f32 %v3740, %v3673
        %v3773 = vmul.f32 %v3741, %v3627
        %v3774 = vmul.f32 %v3742, %v3676
        %v3775 = vmul.f32 %v3743, %v3629
        %v3776 = vmul.f32 %v3744, %v3678
        %v3777 = vmul.f32 %v3745, %v3632
        %v3778 = vmul.f32 %v3746, %v3681
        %v3779 = vmul.f32 %v3747, %v3634
        %v3780 = vmul.f32 %v3748, %v3683
        %v3781 = vmul.f32 %v3749, %v3597
        %v3782 = vmul.f32 %v3750, %v3646
        %v3783 = vmul.f32 %v3751, %v3599
        %v3784 = vmul.f32 %v3752, %v3648
        %v3785 = vmul.f32 %v3753, %v3602
        %v3786 = vmul.f32 %v3754, %v3651
        %v3787 = vmul.f32 %v3755, %v3604
        %v3788 = vmul.f32 %v3756, %v3653
        %v3789 = vmul.f32 %v3757, %v3607
        %v3790 = vmul.f32 %v3758, %v3656
        %v3791 = vmul.f32 %v3759, %v3609
        %v3792 = vmul.f32 %v3760, %v3658
        %v3793 = vmul.f32 %v3761, %v3612
        %v3794 = vmul.f32 %v3762, %v3661
        %v3795 = vmul.f32 %v3763, %v3614
        %v3796 = vmul.f32 %v3764, %v3663
        %v3797 = vmul.f32 %v3765, %v3617
        %v3798 = vmul.f32 %v3766, %v3666
        %v3799 = vmul.f32 %v3767, %v3619
        %v3800 = vmul.f32 %v3768, %v3668
        %v3801 = vmul.f32 %v3769, %v3622
        %v3802 = vmul.f32 %v3770, %v3671
        %v3803 = vmul.f32 %v3771, %v3624
        %v3804 = vmul.f32 %v3772, %v3673
        %v3805 = vmul.f32 %v3773, %v3627
        %v3806 = vmul.f32 %v3774, %v3676
        %v3807 = vmul.f32 %v3775, %v3629
        %v3808 = vmul.f32 %v3776, %v3678
        %v3809 = vmul.f32 %v3777, %v3632
        %v3810 = vmul.f32 %v3778, %v3681
        %v3811 = vmul.f32 %v3779, %v3634
        %v3812 = vmul.f32 %v3780, %v3683
        %v3813 = vadd.f32 %v3597, %v3781
        %v3814 = vadd.f32 %v3646, %v3782
        %v3815 = vadd.f32 %v3599, %v3783
        %v3816 = vadd.f32 %v3648, %v3784
        %v3817 = vadd.f32 %v3602, %v3785
        %v3818 = vadd.f32 %v3651, %v3786
        %v3819 = vadd.f32 %v3604, %v3787
        %v3820 = vadd.f32 %v3653, %v3788
        %v3821 = vadd.f32 %v3607, %v3789
        %v3822 = vadd.f32 %v3656, %v3790
        %v3823 = vadd.f32 %v3609, %v3791
        %v3824 = vadd.f32 %v3658, %v3792
        %v3825 = vadd.f32 %v3612, %v3793
        %v3826 = vadd.f32 %v3661, %v3794
        %v3827 = vadd.f32 %v3614, %v3795
        %v3828 = vadd.f32 %v3663, %v3796
        %v3829 = vadd.f32 %v3617, %v3797
        %v3830 = vadd.f32 %v3666, %v3798
        %v3831 = vadd.f32 %v3619, %v3799
        %v3832 = vadd.f32 %v3668, %v3800
        %v3833 = vadd.f32 %v3622, %v3801
        %v3834 = vadd.f32 %v3671, %v3802
        %v3835 = vadd.f32 %v3624, %v3803
        %v3836 = vadd.f32 %v3673, %v3804
        %v3837 = vadd.f32 %v3627, %v3805
        %v3838 = vadd.f32 %v3676, %v3806
        %v3839 = vadd.f32 %v3629, %v3807
        %v3840 = vadd.f32 %v3678, %v3808
        %v3841 = vadd.f32 %v3632, %v3809
        %v3842 = vadd.f32 %v3681, %v3810
        %v3843 = vadd.f32 %v3634, %v3811
        %v3844 = vadd.f32 %v3683, %v3812
        %v3845 = vmul.f32 %v3813, 0.7978846
        %v3846 = vmul.f32 %v3814, 0.7978846
        %v3847 = vmul.f32 %v3815, 0.7978846
        %v3848 = vmul.f32 %v3816, 0.7978846
        %v3849 = vmul.f32 %v3817, 0.7978846
        %v3850 = vmul.f32 %v3818, 0.7978846
        %v3851 = vmul.f32 %v3819, 0.7978846
        %v3852 = vmul.f32 %v3820, 0.7978846
        %v3853 = vmul.f32 %v3821, 0.7978846
        %v3854 = vmul.f32 %v3822, 0.7978846
        %v3855 = vmul.f32 %v3823, 0.7978846
        %v3856 = vmul.f32 %v3824, 0.7978846
        %v3857 = vmul.f32 %v3825, 0.7978846
        %v3858 = vmul.f32 %v3826, 0.7978846
        %v3859 = vmul.f32 %v3827, 0.7978846
        %v3860 = vmul.f32 %v3828, 0.7978846
        %v3861 = vmul.f32 %v3829, 0.7978846
        %v3862 = vmul.f32 %v3830, 0.7978846
        %v3863 = vmul.f32 %v3831, 0.7978846
        %v3864 = vmul.f32 %v3832, 0.7978846
        %v3865 = vmul.f32 %v3833, 0.7978846
        %v3866 = vmul.f32 %v3834, 0.7978846
        %v3867 = vmul.f32 %v3835, 0.7978846
        %v3868 = vmul.f32 %v3836, 0.7978846
        %v3869 = vmul.f32 %v3837, 0.7978846
        %v3870 = vmul.f32 %v3838, 0.7978846
        %v3871 = vmul.f32 %v3839, 0.7978846
        %v3872 = vmul.f32 %v3840, 0.7978846
        %v3873 = vmul.f32 %v3841, 0.7978846
        %v3874 = vmul.f32 %v3842, 0.7978846
        %v3875 = vmul.f32 %v3843, 0.7978846
        %v3876 = vmul.f32 %v3844, 0.7978846
        %v3877 = vtanh.pop %v3845
        %v3878 = vtanh.pop %v3846
        %v3879 = vtanh.pop %v3847
        %v3880 = vtanh.pop %v3848
        %v3881 = vtanh.pop %v3849
        %v3882 = vtanh.pop %v3850
        %v3883 = vtanh.pop %v3851
        %v3884 = vtanh.pop %v3852
        %v3885 = vtanh.pop %v3853
        %v3886 = vtanh.pop %v3854
        %v3887 = vtanh.pop %v3855
        %v3888 = vtanh.pop %v3856
        %v3889 = vtanh.pop %v3857
        %v3890 = vtanh.pop %v3858
        %v3891 = vtanh.pop %v3859
        %v3892 = vtanh.pop %v3860
        %v3893 = vtanh.pop %v3861
        %v3894 = vtanh.pop %v3862
        %v3895 = vtanh.pop %v3863
        %v3896 = vtanh.pop %v3864
        %v3897 = vtanh.pop %v3865
        %v3898 = vtanh.pop %v3866
        %v3899 = vtanh.pop %v3867
        %v3900 = vtanh.pop %v3868
        %v3901 = vtanh.pop %v3869
        %v3902 = vtanh.pop %v3870
        %v3903 = vtanh.pop %v3871
        %v3904 = vtanh.pop %v3872
        %v3905 = vtanh.pop %v3873
        %v3906 = vtanh.pop %v3874
        %v3907 = vtanh.pop %v3875
        %v3908 = vtanh.pop %v3876
        %v3909 = vadd.f32 %v3877, 1.0
        %v3910 = vadd.f32 %v3878, 1.0
        %v3911 = vadd.f32 %v3879, 1.0
        %v3912 = vadd.f32 %v3880, 1.0
        %v3913 = vadd.f32 %v3881, 1.0
        %v3914 = vadd.f32 %v3882, 1.0
        %v3915 = vadd.f32 %v3883, 1.0
        %v3916 = vadd.f32 %v3884, 1.0
        %v3917 = vadd.f32 %v3885, 1.0
        %v3918 = vadd.f32 %v3886, 1.0
        %v3919 = vadd.f32 %v3887, 1.0
        %v3920 = vadd.f32 %v3888, 1.0
        %v3921 = vadd.f32 %v3889, 1.0
        %v3922 = vadd.f32 %v3890, 1.0
        %v3923 = vadd.f32 %v3891, 1.0
        %v3924 = vadd.f32 %v3892, 1.0
        %v3925 = vadd.f32 %v3893, 1.0
        %v3926 = vadd.f32 %v3894, 1.0
        %v3927 = vadd.f32 %v3895, 1.0
        %v3928 = vadd.f32 %v3896, 1.0
        %v3929 = vadd.f32 %v3897, 1.0
        %v3930 = vadd.f32 %v3898, 1.0
        %v3931 = vadd.f32 %v3899, 1.0
        %v3932 = vadd.f32 %v3900, 1.0
        %v3933 = vadd.f32 %v3901, 1.0
        %v3934 = vadd.f32 %v3902, 1.0
        %v3935 = vadd.f32 %v3903, 1.0
        %v3936 = vadd.f32 %v3904, 1.0
        %v3937 = vadd.f32 %v3905, 1.0
        %v3938 = vadd.f32 %v3906, 1.0
        %v3939 = vadd.f32 %v3907, 1.0
        %v3940 = vadd.f32 %v3908, 1.0
        %v3941 = vmul.f32 %v3685, %v3909
        %v3942 = vmul.f32 %v3686, %v3910
        %v3943 = vmul.f32 %v3687, %v3911
        %v3944 = vmul.f32 %v3688, %v3912
        %v3945 = vmul.f32 %v3689, %v3913
        %v3946 = vmul.f32 %v3690, %v3914
        %v3947 = vmul.f32 %v3691, %v3915
        %v3948 = vmul.f32 %v3692, %v3916
        %v3949 = vmul.f32 %v3693, %v3917
        %v3950 = vmul.f32 %v3694, %v3918
        %v3951 = vmul.f32 %v3695, %v3919
        %v3952 = vmul.f32 %v3696, %v3920
        %v3953 = vmul.f32 %v3697, %v3921
        %v3954 = vmul.f32 %v3698, %v3922
        %v3955 = vmul.f32 %v3699, %v3923
        %v3956 = vmul.f32 %v3700, %v3924
        %v3957 = vmul.f32 %v3701, %v3925
        %v3958 = vmul.f32 %v3702, %v3926
        %v3959 = vmul.f32 %v3703, %v3927
        %v3960 = vmul.f32 %v3704, %v3928
        %v3961 = vmul.f32 %v3705, %v3929
        %v3962 = vmul.f32 %v3706, %v3930
        %v3963 = vmul.f32 %v3707, %v3931
        %v3964 = vmul.f32 %v3708, %v3932
        %v3965 = vmul.f32 %v3709, %v3933
        %v3966 = vmul.f32 %v3710, %v3934
        %v3967 = vmul.f32 %v3711, %v3935
        %v3968 = vmul.f32 %v3712, %v3936
        %v3969 = vmul.f32 %v3713, %v3937
        %v3970 = vmul.f32 %v3714, %v3938
        %v3971 = vmul.f32 %v3715, %v3939
        %v3972 = vmul.f32 %v3716, %v3940
        %v3973 = vpack.c.bf16 %v3943, %v3941
        %v3974 = vpack.c.bf16 %v3944, %v3942
        %v3975 = vpack.c.bf16 %v3947, %v3945
        %v3976 = vpack.c.bf16 %v3948, %v3946
        %v3977 = vpack.c.bf16 %v3951, %v3949
        %v3978 = vpack.c.bf16 %v3952, %v3950
        %v3979 = vpack.c.bf16 %v3955, %v3953
        %v3980 = vpack.c.bf16 %v3956, %v3954
        %v3981 = vpack.c.bf16 %v3959, %v3957
        %v3982 = vpack.c.bf16 %v3960, %v3958
        %v3983 = vpack.c.bf16 %v3963, %v3961
        %v3984 = vpack.c.bf16 %v3964, %v3962
        %v3985 = vpack.c.bf16 %v3967, %v3965
        %v3986 = vpack.c.bf16 %v3968, %v3966
        %v3987 = vpack.c.bf16 %v3971, %v3969
        %v3988 = vpack.c.bf16 %v3972, %v3970
        %v3989 = vld [vmem:[#allocation11] sm:$0xf]
        %v3990 = vld [vmem:[#allocation11 + $0x4] sm:$0xf]
        %v3991 = vld [vmem:[#allocation11 + $0x8] sm:$0xf]
        %v3992 = vld [vmem:[#allocation11 + $0xc] sm:$0xf]
        %v3993 = vld [vmem:[#allocation11 + $0x10] sm:$0xf]
        %v3994 = vld [vmem:[#allocation11 + $0x14] sm:$0xf]
        %v3995 = vld [vmem:[#allocation11 + $0x18] sm:$0xf]
        %v3996 = vld [vmem:[#allocation11 + $0x1c] sm:$0xf]
        %v3997 = vld [vmem:[#allocation11 + $0x20] sm:$0xf]
        %v3998 = vld [vmem:[#allocation11 + $0x24] sm:$0xf]
        %v3999 = vld [vmem:[#allocation11 + $0x28] sm:$0xf]
        %v4000 = vld [vmem:[#allocation11 + $0x2c] sm:$0xf]
        %v4001 = vld [vmem:[#allocation11 + $0x30] sm:$0xf]
        %v4002 = vld [vmem:[#allocation11 + $0x34] sm:$0xf]
        %v4003 = vld [vmem:[#allocation11 + $0x38] sm:$0xf]
        %v4004 = vld [vmem:[#allocation11 + $0x3c] sm:$0xf]
        %v4005 = vld [vmem:[#allocation11 + $0x40] sm:$0xf]
        %v4006 = vld [vmem:[#allocation11 + $0x44] sm:$0xf]
        %v4007 = vld [vmem:[#allocation11 + $0x48] sm:$0xf]
        %v4008 = vld [vmem:[#allocation11 + $0x4c] sm:$0xf]
        %v4009 = vld [vmem:[#allocation11 + $0x50] sm:$0xf]
        %v4010 = vld [vmem:[#allocation11 + $0x54] sm:$0xf]
        %v4011 = vld [vmem:[#allocation11 + $0x58] sm:$0xf]
        %v4012 = vld [vmem:[#allocation11 + $0x5c] sm:$0xf]
        %v4013 = vld [vmem:[#allocation11 + $0x60] sm:$0xf]
        %v4014 = vld [vmem:[#allocation11 + $0x64] sm:$0xf]
        %v4015 = vld [vmem:[#allocation11 + $0x68] sm:$0xf]
        %v4016 = vld [vmem:[#allocation11 + $0x6c] sm:$0xf]
        %v4017 = vld [vmem:[#allocation11 + $0x70] sm:$0xf]
        %v4018 = vld [vmem:[#allocation11 + $0x74] sm:$0xf]
        %v4019 = vld [vmem:[#allocation11 + $0x78] sm:$0xf]
        %v4020 = vld [vmem:[#allocation11 + $0x7c] sm:$0xf]
        %v4021 = vld [vmem:[%s10] sm:$0x1]
        %v4023 = vperm.slane %v4021, 0
        %v4057 = vunpack.c.l.b16 %v3989
        %v4058 = vunpack.c.l.b16 %v3990
        %v4059 = vunpack.c.l.b16 %v3991
        %v4060 = vunpack.c.l.b16 %v3992
        %v4061 = vunpack.c.l.b16 %v3993
        %v4062 = vunpack.c.l.b16 %v3994
        %v4063 = vunpack.c.l.b16 %v3995
        %v4064 = vunpack.c.l.b16 %v3996
        %v4065 = vunpack.c.l.b16 %v3997
        %v4066 = vunpack.c.l.b16 %v3998
        %v4067 = vunpack.c.l.b16 %v3999
        %v4068 = vunpack.c.l.b16 %v4000
        %v4069 = vunpack.c.l.b16 %v4001
        %v4070 = vunpack.c.l.b16 %v4002
        %v4071 = vunpack.c.l.b16 %v4003
        %v4072 = vunpack.c.l.b16 %v4004
        %v4073 = vunpack.c.l.b16 %v4005
        %v4074 = vunpack.c.l.b16 %v4006
        %v4075 = vunpack.c.l.b16 %v4007
        %v4076 = vunpack.c.l.b16 %v4008
        %v4077 = vunpack.c.l.b16 %v4009
        %v4078 = vunpack.c.l.b16 %v4010
        %v4079 = vunpack.c.l.b16 %v4011
        %v4080 = vunpack.c.l.b16 %v4012
        %v4081 = vunpack.c.l.b16 %v4013
        %v4082 = vunpack.c.l.b16 %v4014
        %v4083 = vunpack.c.l.b16 %v4015
        %v4084 = vunpack.c.l.b16 %v4016
        %v4085 = vunpack.c.l.b16 %v4017
        %v4086 = vunpack.c.l.b16 %v4018
        %v4087 = vunpack.c.l.b16 %v4019
        %v4088 = vunpack.c.l.b16 %v4020
        %v4089 = vpack.c.b16 %v4058, %v4057
        %v4090 = vpack.c.b16 %v4060, %v4059
        %v4091 = vpack.c.b16 %v4062, %v4061
        %v4092 = vpack.c.b16 %v4064, %v4063
        %v4093 = vpack.c.b16 %v4066, %v4065
        %v4094 = vpack.c.b16 %v4068, %v4067
        %v4095 = vpack.c.b16 %v4070, %v4069
        %v4096 = vpack.c.b16 %v4072, %v4071
        %v4097 = vpack.c.b16 %v4074, %v4073
        %v4098 = vpack.c.b16 %v4076, %v4075
        %v4099 = vpack.c.b16 %v4078, %v4077
        %v4100 = vpack.c.b16 %v4080, %v4079
        %v4101 = vpack.c.b16 %v4082, %v4081
        %v4102 = vpack.c.b16 %v4084, %v4083
        %v4103 = vpack.c.b16 %v4086, %v4085
        %v4104 = vpack.c.b16 %v4088, %v4087
        %4121 = vmatpush.bf16.msra.mxu0 %v4096
        %4122 = vmatpush.bf16.msra.mxu0 %v4095
        %4123 = vmatpush.bf16.msra.mxu0 %v4094
        %4124 = vmatpush.bf16.msra.mxu0 %v4093
        %4125 = vmatpush.bf16.msra.mxu0 %v4092
        %4126 = vmatpush.bf16.msra.mxu0 %v4091
        %4127 = vmatpush.bf16.msra.mxu0 %v4090
        %4128 = vmatpush.bf16.msra.mxu0 %v4089
        %4129 = vmatmul.bf16.gmra.mxu0 %v3973
        %v4130 = vpop.f32.mrf.mxu0
        %v4131 = vadd.f32 %v4023, %v4130
        %v4132 = vpop.f32.mrf.mxu0
        %v4133 = vadd.f32 %v4023, %v4132
        %4134 = vmatmul.bf16.gmra.mxu0 %v3975
        %v4135 = vpop.f32.mrf.mxu0
        %v4136 = vadd.f32 %v4023, %v4135
        %v4137 = vpop.f32.mrf.mxu0
        %v4138 = vadd.f32 %v4023, %v4137
        %4139 = vmatmul.bf16.gmra.mxu0 %v3977
        %v4140 = vpop.f32.mrf.mxu0
        %v4141 = vadd.f32 %v4023, %v4140
        %v4142 = vpop.f32.mrf.mxu0
        %v4143 = vadd.f32 %v4023, %v4142
        %4144 = vmatmul.bf16.gmra.mxu0 %v3979
        %v4145 = vpop.f32.mrf.mxu0
        %v4146 = vadd.f32 %v4023, %v4145
        %v4147 = vpop.f32.mrf.mxu0
        %v4148 = vadd.f32 %v4023, %v4147
        %4149 = vmatmul.bf16.gmra.mxu0 %v3981
        %v4150 = vpop.f32.mrf.mxu0
        %v4151 = vadd.f32 %v4023, %v4150
        %v4152 = vpop.f32.mrf.mxu0
        %v4153 = vadd.f32 %v4023, %v4152
        %4154 = vmatmul.bf16.gmra.mxu0 %v3983
        %v4155 = vpop.f32.mrf.mxu0
        %v4156 = vadd.f32 %v4023, %v4155
        %v4157 = vpop.f32.mrf.mxu0
        %v4158 = vadd.f32 %v4023, %v4157
        %4159 = vmatmul.bf16.gmra.mxu0 %v3985
        %v4160 = vpop.f32.mrf.mxu0
        %v4161 = vadd.f32 %v4023, %v4160
        %v4162 = vpop.f32.mrf.mxu0
        %v4163 = vadd.f32 %v4023, %v4162
        %4164 = vmatmul.bf16.gmra.mxu0 %v3987
        %v4165 = vpop.f32.mrf.mxu0
        %v4166 = vadd.f32 %v4023, %v4165
        %v4167 = vpop.f32.mrf.mxu0
        %v4168 = vadd.f32 %v4023, %v4167
        %4169 = vdwg.mxu0
        %4170 = vmatpush.bf16.msra.mxu0 %v4104
        %4171 = vmatpush.bf16.msra.mxu0 %v4103
        %4172 = vmatpush.bf16.msra.mxu0 %v4102
        %4173 = vmatpush.bf16.msra.mxu0 %v4101
        %4174 = vmatpush.bf16.msra.mxu0 %v4100
        %4175 = vmatpush.bf16.msra.mxu0 %v4099
        %4176 = vmatpush.bf16.msra.mxu0 %v4098
        %4177 = vmatpush.bf16.msra.mxu0 %v4097
        %4178 = vmatmul.bf16.gmra.mxu0 %v3974
        %v4179 = vpop.f32.mrf.mxu0
        %v4180 = vadd.f32 %v4131, %v4179
        %v4181 = vpop.f32.mrf.mxu0
        %v4182 = vadd.f32 %v4133, %v4181
        %4183 = vmatmul.bf16.gmra.mxu0 %v3976
        %v4184 = vpop.f32.mrf.mxu0
        %v4185 = vadd.f32 %v4136, %v4184
        %v4186 = vpop.f32.mrf.mxu0
        %v4187 = vadd.f32 %v4138, %v4186
        %4188 = vmatmul.bf16.gmra.mxu0 %v3978
        %v4189 = vpop.f32.mrf.mxu0
        %v4190 = vadd.f32 %v4141, %v4189
        %v4191 = vpop.f32.mrf.mxu0
        %v4192 = vadd.f32 %v4143, %v4191
        %4193 = vmatmul.bf16.gmra.mxu0 %v3980
        %v4194 = vpop.f32.mrf.mxu0
        %v4195 = vadd.f32 %v4146, %v4194
        %v4196 = vpop.f32.mrf.mxu0
        %v4197 = vadd.f32 %v4148, %v4196
        %4198 = vmatmul.bf16.gmra.mxu0 %v3982
        %v4199 = vpop.f32.mrf.mxu0
        %v4200 = vadd.f32 %v4151, %v4199
        %v4201 = vpop.f32.mrf.mxu0
        %v4202 = vadd.f32 %v4153, %v4201
        %4203 = vmatmul.bf16.gmra.mxu0 %v3984
        %v4204 = vpop.f32.mrf.mxu0
        %v4205 = vadd.f32 %v4156, %v4204
        %v4206 = vpop.f32.mrf.mxu0
        %v4207 = vadd.f32 %v4158, %v4206
        %4208 = vmatmul.bf16.gmra.mxu0 %v3986
        %v4209 = vpop.f32.mrf.mxu0
        %v4210 = vadd.f32 %v4161, %v4209
        %v4211 = vpop.f32.mrf.mxu0
        %v4212 = vadd.f32 %v4163, %v4211
        %4213 = vmatmul.bf16.gmra.mxu0 %v3988
        %v4214 = vpop.f32.mrf.mxu0
        %v4215 = vadd.f32 %v4166, %v4214
        %v4216 = vpop.f32.mrf.mxu0
        %v4217 = vadd.f32 %v4168, %v4216
        %4218 = vdwg.mxu0
        %v4219 = vadd.f32 %v3461, %v4180
        %v4220 = vadd.f32 %v3462, %v4182
        %v4221 = vadd.f32 %v3463, %v4185
        %v4222 = vadd.f32 %v3464, %v4187
        %v4223 = vadd.f32 %v3465, %v4190
        %v4224 = vadd.f32 %v3466, %v4192
        %v4225 = vadd.f32 %v3467, %v4195
        %v4226 = vadd.f32 %v3468, %v4197
        %v4227 = vadd.f32 %v3469, %v4200
        %v4228 = vadd.f32 %v3470, %v4202
        %v4229 = vadd.f32 %v3471, %v4205
        %v4230 = vadd.f32 %v3472, %v4207
        %v4231 = vadd.f32 %v3473, %v4210
        %v4232 = vadd.f32 %v3474, %v4212
        %v4233 = vadd.f32 %v3475, %v4215
        %v4234 = vadd.f32 %v3476, %v4217
        %v4235 = vld [vmem:[%s11] sm:$0x1]
        %v4237 = vperm.slane %v4235, 0
        %v4239 = vmul.f32 %v4219, %v4237
        %v4240 = vmul.f32 %v4220, %v4237
        %v4241 = vmul.f32 %v4221, %v4237
        %v4242 = vmul.f32 %v4222, %v4237
        %v4243 = vmul.f32 %v4223, %v4237
        %v4244 = vmul.f32 %v4224, %v4237
        %v4245 = vmul.f32 %v4225, %v4237
        %v4246 = vmul.f32 %v4226, %v4237
        %v4247 = vmul.f32 %v4227, %v4237
        %v4248 = vmul.f32 %v4228, %v4237
        %v4249 = vmul.f32 %v4229, %v4237
        %v4250 = vmul.f32 %v4230, %v4237
        %v4251 = vmul.f32 %v4231, %v4237
        %v4252 = vmul.f32 %v4232, %v4237
        %v4253 = vmul.f32 %v4233, %v4237
        %v4254 = vmul.f32 %v4234, %v4237
        %v4255 = vld [vmem:[%s12] sm:$0x1]
        %v4257 = vperm.slane %v4255, 0
        %v4259 = vadd.f32 %v4239, %v4257
        %v4260 = vadd.f32 %v4240, %v4257
        %v4261 = vadd.f32 %v4241, %v4257
        %v4262 = vadd.f32 %v4242, %v4257
        %v4263 = vadd.f32 %v4243, %v4257
        %v4264 = vadd.f32 %v4244, %v4257
        %v4265 = vadd.f32 %v4245, %v4257
        %v4266 = vadd.f32 %v4246, %v4257
        %v4267 = vadd.f32 %v4247, %v4257
        %v4268 = vadd.f32 %v4248, %v4257
        %v4269 = vadd.f32 %v4249, %v4257
        %v4270 = vadd.f32 %v4250, %v4257
        %v4271 = vadd.f32 %v4251, %v4257
        %v4272 = vadd.f32 %v4252, %v4257
        %v4273 = vadd.f32 %v4253, %v4257
        %v4274 = vadd.f32 %v4254, %v4257
        %4275 = vst [vmem:[%s542] sm:$0xff] %v4259
        %4276 = vst [vmem:[%s542 + $0x8] sm:$0xff] %v4260
        %4277 = vst [vmem:[%s542 + $0x10] sm:$0xff] %v4261
        %4278 = vst [vmem:[%s542 + $0x18] sm:$0xff] %v4262
        %4279 = vst [vmem:[%s542 + $0x20] sm:$0xff] %v4263
        %4280 = vst [vmem:[%s542 + $0x28] sm:$0xff] %v4264
        %4281 = vst [vmem:[%s542 + $0x30] sm:$0xff] %v4265
        %4282 = vst [vmem:[%s542 + $0x38] sm:$0xff] %v4266
        %4283 = vst [vmem:[%s542 + $0x40] sm:$0xff] %v4267
        %4284 = vst [vmem:[%s542 + $0x48] sm:$0xff] %v4268
        %4285 = vst [vmem:[%s542 + $0x50] sm:$0xff] %v4269
        %4286 = vst [vmem:[%s542 + $0x58] sm:$0xff] %v4270
        %4287 = vst [vmem:[%s542 + $0x60] sm:$0xff] %v4271
        %4288 = vst [vmem:[%s542 + $0x68] sm:$0xff] %v4272
        %4289 = vst [vmem:[%s542 + $0x70] sm:$0xff] %v4273
        %4290 = vst [vmem:[%s542 + $0x78] sm:$0xff] %v4274
        %s4291 = sand.u32 %s319, 1
        %s4292 = scalar_lea.sflag [#allocation4], %s4291
        %s4293 = sand.u32 %s319, 1
        %s4294 = smul.addr %s4293, 128
        %s4295 = scalar_lea.vmem [#allocation13], %s4294
        // Predicated region
        $region97: #{tpu_custom_call.1} parent=71 // pred_check
          %p4296 = pneg %p329
        $region98: #{tpu_custom_call.1} parent=71 // pred_check_branch
          %4298 = sbr.rel (%p4296) target = $region100
        $region99: #{tpu_custom_call.1} parent=71 // pred_region
          %s4299 = smul.u32 4, %s33
          %4301 = vsyncadd %s4292, 0
          %s4302 = smul.addr %s4299, 4
          %s4303 = smul.addr %s4302, 8
          %s4304 = scalar_lea.hbm %s13, %s4303
          %s4305 = sshll.u32 %s4295, 4
          %s4306 = int_to_ptr.vmem [resolvable:$true] %s4305
          %s4307 = sshll.u32 %s4304, 4
          %s4308 = int_to_ptr.hbm [resolvable:$true] %s4307
          %4313 = dma.vmem_to_hbm [thread:$0]  %s4306, 2048, %s4308, %s4292, 128, 128, 8
        $region100: #{tpu_custom_call.1} parent=71 // pred_fallthru
          _
      $region72: #{tpu_custom_call.1} parent=5 // pred_fallthru
        _
      %p4314 = scmp.le.s32.totalorder 2, %s28
      // Predicated region
      $region101: #{tpu_custom_call.1} parent=5 // pred_check
        %p4315 = pneg %p4314
      $region102: #{tpu_custom_call.1} parent=5 // pred_check_branch
        %4317 = sbr.rel (%p4315) target = $region104
      $region103: #{tpu_custom_call.1} parent=5 // pred_region
        %s4318 = ssub.s32 %s28, 2
        // Predicated region
        $region105: #{tpu_custom_call.1} parent=103 // pred_check
          %p4319 = pneg %p335
        $region106: #{tpu_custom_call.1} parent=103 // pred_check_branch
          %4321 = sbr.rel (%p4319) target = $region108
        $region107: #{tpu_custom_call.1} parent=103 // pred_region
          %s4322 = sand.u32 %s320, 1
          %s4323 = scalar_lea.sflag [#allocation4], %s4322
          %s4324 = sand.u32 %s320, 1
          %s4325 = smul.addr %s4324, 128
          %s4326 = scalar_lea.vmem [#allocation13], %s4325
          %4328 = dma.done %s4323, 2048
        $region108: #{tpu_custom_call.1} parent=103 // pred_fallthru
          _
      $region104: #{tpu_custom_call.1} parent=5 // pred_fallthru
        _
    $region6: #{tpu_custom_call.1} parent=1 // loop_footer
      %s32 = sadd.s32 1, %s28
    $region7: #{tpu_custom_call.1} parent=1 // loop_footer_branch
      %27 = sbr.rel target = $region3
    $region8: #{tpu_custom_call.1} parent=1 // loop_exit
      _
    %4329 = vsyncpa [#allocation3], 1
    %s4330 = scalar_lea.sflag [#allocation3], 1
    %4331 = vsyncpa %s4330, 1
    %4332 = vsyncpa [#allocation6], 1
    %4333 = vsyncpa [#allocation9], 1
    %4334 = vsyncpa [#allocation12], 1
    %4335 = vsyncpa [#allocation4], 1
    %s4336 = scalar_lea.sflag [#allocation4], 1
    %4337 = vsyncpa %s4336, 1

</llo_original>
